<compile_context>
chip_gen: v5e
topology: v5e:2x2
jax: 0.10.0
libtpu: 0.0.40
codegen_flags: <defaults>
</compile_context>

<pallas_src>
import functools

import jax
import jax.numpy as jnp
from jax.experimental import pallas as pl
from jax.experimental.pallas import tpu as pltpu


def resnet_block_kernel(x_ref, scat_ref, bcst_ref, gamma_ref, beta_ref,
                        w_ref, b_ref, o_ref, pad_ref, col_ref,
                        *, negative_slope, eps, has_res_conv):
    _, H, W, C = x_ref.shape
    HW = H * W
    Ct = o_ref.shape[2]          # Cout tile width (multiple of 128)
    K = col_ref.shape[2]         # 9*C (identity) or 10*C (fused residual conv)

    xf = x_ref[0].reshape(HW, C)            # (HW, C) f32, leading-dim merge

    # --- Per-image preprocessing: GroupNorm + LeakyReLU + im2col assembly.
    # Done once per image (first Cout tile) and reused for the other tiles.
    @pl.when(pl.program_id(1) == 0)
    def _build_im2col():
        # GroupNorm stats via small factored group-membership matmuls:
        # (1,C)@(C,G) -> group stats, (1,G)@(G,C) -> per-channel broadcast.
        s = jnp.sum(xf, axis=0, keepdims=True)                       # (1, C)
        ss = jnp.sum(xf * xf, axis=0, keepdims=True)                 # (1, C)
        mean = jnp.dot(
            jnp.dot(s, scat_ref[...], preferred_element_type=jnp.float32),
            bcst_ref[...], preferred_element_type=jnp.float32)       # (1, C)
        ex2 = jnp.dot(
            jnp.dot(ss, scat_ref[...], preferred_element_type=jnp.float32),
            bcst_ref[...], preferred_element_type=jnp.float32)       # (1, C)
        var = jnp.maximum(ex2 - mean * mean, 0.0)                    # clamp >= 0
        inv = jax.lax.rsqrt(var + eps)
        scale = inv * gamma_ref[...]
        shift = beta_ref[...] - mean * scale
        y = xf * scale + shift                                       # f32 VPU
        y = jnp.where(y > 0, y, negative_slope * y)                  # LeakyReLU

        # Zero only the four border slabs of the padded-activation scratch;
        # the interior is fully overwritten right below.
        pad_ref[0:1, :, :] = jnp.zeros((1, W + 2, C), pad_ref.dtype)
        pad_ref[H + 1:H + 2, :, :] = jnp.zeros((1, W + 2, C), pad_ref.dtype)
        pad_ref[1:H + 1, 0:1, :] = jnp.zeros((H, 1, C), pad_ref.dtype)
        pad_ref[1:H + 1, W + 1:W + 2, :] = jnp.zeros((H, 1, C), pad_ref.dtype)
        pad_ref[1:H + 1, 1:W + 1, :] = y.reshape(H, W, C).astype(jnp.bfloat16)

        # im2col: pack the 9 shifted 3x3 windows along channels -> (H, W, 9C).
        for ky in range(3):
            for kx in range(3):
                t = ky * 3 + kx
                col_ref[:, :, t * C:(t + 1) * C] = pad_ref[ky:ky + H,
                                                           kx:kx + W, :]
        if has_res_conv:
            # Fused 1x1 residual conv: original x fills the last C columns.
            col_ref[:, :, 9 * C:10 * C] = x_ref[0].astype(jnp.bfloat16)

    # --- Whole 3x3 conv (+ fused 1x1 residual) as ONE MXU matmul:
    #     (HW, K) bf16 @ (K, Ct) bf16 with f32 accumulation.
    col = col_ref[...].reshape(HW, K)                     # leading-dim merge
    acc = jnp.dot(col, w_ref[...],
                  preferred_element_type=jnp.float32) + b_ref[...]   # (HW, Ct)

    if has_res_conv:
        o_ref[0] = acc                       # residual already inside the matmul
    else:
        # nn.Identity residual: add x exactly in f32, no matmul.
        if C == Ct:
            o_ref[0] = acc + xf
        elif C < Ct:
            # Single full-width store: pad xf with zeros to Ct lanes.
            xpad = jnp.concatenate(
                [xf, jnp.zeros((HW, Ct - C), jnp.float32)], axis=1)
            o_ref[0] = acc + xpad
        else:  # C > Ct; wrapper guarantees C % Ct == 0
            j = pl.program_id(1)
            res = jax.lax.dynamic_slice_in_dim(xf, j * Ct, Ct, axis=1)
            o_ref[0] = acc + res


def resnet_block(x, gamma, beta, w3, b3, wr=None, br=None, *, groups=8,
                 negative_slope=0.1, eps=1e-5):
    """x: (N,H,W,C) f32.  w3: (3,3,C,Cout) HWIO.  wr: (C,Cout) or None (Identity)."""
    N, H, W, C = x.shape
    Cout = w3.shape[-1]
    HW = H * W
    assert C % groups == 0
    Cg = C // groups
    has_res_conv = wr is not None
    if not has_res_conv:
        assert C == Cout, "Identity residual requires dim == dim_out"

    LANE = 128
    Cout_p = ((Cout + LANE - 1) // LANE) * LANE     # lane-dense output width
    K = (10 if has_res_conv else 9) * C             # im2col contraction depth

    # ---------- explicit VMEM accounting & Cout-tile selection ----------
    try:
        vmem_cap = int(pltpu.get_tpu_info().vmem_capacity_bytes)
    except Exception:
        vmem_cap = 64 * 1024 * 1024                 # v7x-conservative fallback
    budget = int(vmem_cap * 0.75)

    fixed = (H + 2) * (W + 2) * C * 2 + H * W * K * 2   # pad + col scratch (bf16)

    def vmem_bytes(ct):
        per_step = (HW * C * 4                 # x block (f32)
                    + 2 * C * groups * 4       # scat + bcst maps
                    + 2 * C * 4                # gamma + beta
                    + K * ct * 2               # weight tile (bf16)
                    + ct * 4                   # bias tile (f32)
                    + HW * ct * 4)             # output block (f32)
        return fixed + 2 * per_step            # double-buffered pipeline

    Ct = None
    for cand in (Cout_p, 256, 128):            # biggest first; resident weights
        if cand > Cout_p or Cout_p % cand:
            continue
        if (not has_res_conv) and C > cand and C % cand:
            continue                           # identity-residual slice constraint
        if vmem_bytes(cand) <= budget:
            Ct = cand
            break
    if Ct is None:
        # TODO(synk): spatial (H) row-tiling for very large images.
        raise ValueError("ResnetBlock pallas kernel: image/channels too large "
                         "for untiled VMEM budget; spatial tiling not implemented")
    n_ct = Cout_p // Ct
    need = vmem_bytes(Ct)
    vmem_limit = min(int(vmem_cap * 0.9), max(need + (4 << 20), 32 << 20))

    # Factored group-membership maps (scatter pre-scaled so s @ scat = mean).
    gid = jnp.arange(C) // Cg
    scat = (gid[:, None] == jnp.arange(groups)[None, :]).astype(jnp.float32) \
        / float(HW * Cg)                                        # (C, G)
    bcst = (jnp.arange(groups)[:, None] == gid[None, :]).astype(jnp.float32)  # (G, C)

    # Conv weights: HWIO -> im2col rows; 1x1 residual stacked underneath
    # (fused), bf16, zero-padded to Cout_p lanes; residual bias folded in.
    wflat = jnp.zeros((K, Cout_p), jnp.bfloat16)
    wflat = wflat.at[:9 * C, :Cout].set(
        w3.reshape(9 * C, Cout).astype(jnp.bfloat16))
    bflat = jnp.zeros((1, Cout_p), jnp.float32).at[:, :Cout].set(
        b3.reshape(1, Cout).astype(jnp.float32))
    if has_res_conv:
        wflat = wflat.at[9 * C:, :Cout].set(wr.astype(jnp.bfloat16))
        bflat = bflat.at[:, :Cout].add(br.reshape(1, Cout).astype(jnp.float32))

    kernel = functools.partial(resnet_block_kernel,
                               negative_slope=negative_slope, eps=eps,
                               has_res_conv=has_res_conv)

    cost = pl.CostEstimate(
        flops=2 * N * HW * K * Cout_p + 12 * N * HW * C,
        transcendentals=N * C,
        bytes_accessed=(N * HW * C * 4 + K * Cout_p * 2
                        + N * HW * Cout_p * 4 + Cout_p * 4))

    out = pl.pallas_call(
        kernel,
        out_shape=jax.ShapeDtypeStruct((N, HW, Cout_p), jnp.float32),
        grid=(N, n_ct),
        in_specs=[
            pl.BlockSpec((1, H, W, C), lambda n, j: (n, 0, 0, 0)),   # one image
            pl.BlockSpec((C, groups), lambda n, j: (0, 0)),          # scatter map
            pl.BlockSpec((groups, C), lambda n, j: (0, 0)),          # broadcast map
            pl.BlockSpec((1, C), lambda n, j: (0, 0)),               # gamma
            pl.BlockSpec((1, C), lambda n, j: (0, 0)),               # beta
            pl.BlockSpec((K, Ct), lambda n, j: (0, j)),              # fused weights
            pl.BlockSpec((1, Ct), lambda n, j: (0, j)),              # fused bias
        ],
        out_specs=pl.BlockSpec((1, HW, Ct), lambda n, j: (n, 0, j)),
        scratch_shapes=[
            pltpu.VMEM((H + 2, W + 2, C), jnp.bfloat16),   # zero-padded activation
            pltpu.VMEM((H, W, K), jnp.bfloat16),           # im2col matrix
        ],
        compiler_params=pltpu.CompilerParams(
            dimension_semantics=("parallel", "arbitrary"),
            vmem_limit_bytes=vmem_limit),
        cost_estimate=cost,
    )(x, scat, bcst,
      gamma.reshape(1, C).astype(jnp.float32),
      beta.reshape(1, C).astype(jnp.float32),
      wflat, bflat)

    # Lane-dense flat output -> NHWC; slice is a no-op when Cout % 128 == 0.
    if Cout_p != Cout:
        out = out[:, :, :Cout]
    return out.reshape(N, H, W, Cout)


def ref_forward(x, gamma, beta, w3, b3, wr=None, br=None, *, groups=8, eps=1e-5):
    """Pure-JAX reference mirroring the PyTorch module (NHWC)."""
    N, H, W, C = x.shape
    Cg = C // groups
    xg = x.reshape(N, H, W, groups, Cg)
    mean = xg.mean(axis=(1, 2, 4), keepdims=True)
    var = xg.var(axis=(1, 2, 4), keepdims=True)
    xn = ((xg - mean) / jnp.sqrt(var + eps)).reshape(N, H, W, C)
    xn = xn * gamma + beta
    a = jnp.where(xn > 0, xn, 0.1 * xn)
    h = jax.lax.conv_general_dilated(
        a, w3, window_strides=(1, 1), padding=((1, 1), (1, 1)),
        dimension_numbers=("NHWC", "HWIO", "NHWC")) + b3
    if wr is None:
        res = x                                   # nn.Identity()
    else:
        res = jnp.einsum("nhwc,co->nhwo", x, wr) + br
    return h + res


if __name__ == "__main__":
    def run_case(keys, C, Cout, groups):
        N, H, W = 2, 16, 16
        x = jax.random.normal(keys[0], (N, H, W, C), jnp.float32)
        gamma = 1.0 + 0.1 * jax.random.normal(keys[1], (C,), jnp.float32)
        beta = 0.1 * jax.random.normal(keys[2], (C,), jnp.float32)
        w3 = 0.1 * jax.random.normal(keys[3], (3, 3, C, Cout), jnp.float32)
        b3 = 0.1 * jax.random.normal(keys[4], (Cout,), jnp.float32)
        if C != Cout:
            wr = 0.1 * jax.random.normal(keys[5], (C, Cout), jnp.float32)
            br = 0.1 * jax.random.normal(keys[6], (Cout,), jnp.float32)
        else:
            wr = br = None                        # residual is nn.Identity()

        out = resnet_block(x, gamma, beta, w3, b3, wr, br, groups=groups)
        out = jax.block_until_ready(out)
        expect = ref_forward(x, gamma, beta, w3, b3, wr, br, groups=groups)
        assert out.shape == (N, H, W, Cout), out.shape
        max_err = float(jnp.max(jnp.abs(out - expect)))
        # bf16 matmul operands with f32 accumulation -> slightly loosened tol.
        assert jnp.allclose(out, expect, atol=3e-2, rtol=3e-2), f"max_err={max_err}"

    ks = jax.random.split(jax.random.PRNGKey(0), 14)
    run_case(ks[:7], C=8, Cout=16, groups=8)   # dim != dim_out -> fused 1x1 residual
    run_case(ks[7:], C=8, Cout=8, groups=8)    # dim == dim_out -> Identity residual
    print("KERNEL_OK")
</pallas_src>

<mosaic_0001>
module attributes {stable_mosaic.version = 11 : i64} {
  func.func @resnet_block_kernel(%arg0: i32, %arg1: i32, %arg2: memref<1x16x16x8xf32, #tpu.memory_space<vmem>>, %arg3: memref<8x8xf32, #tpu.memory_space<vmem>>, %arg4: memref<8x8xf32, #tpu.memory_space<vmem>>, %arg5: memref<1x8xf32, #tpu.memory_space<vmem>>, %arg6: memref<1x8xf32, #tpu.memory_space<vmem>>, %arg7: memref<80x128xbf16, #tpu.memory_space<vmem>>, %arg8: memref<1x128xf32, #tpu.memory_space<vmem>>, %arg9: memref<1x256x128xf32, #tpu.memory_space<vmem>>, %arg10: memref<18x18x8xbf16, #tpu.memory_space<vmem>>, %arg11: memref<16x16x80xbf16, #tpu.memory_space<vmem>>) attributes {dimension_semantics = [#tpu.dimension_semantics<parallel>, #tpu.dimension_semantics<arbitrary>], iteration_bounds = array<i64: 2, 1>, scalar_prefetch = 0 : i64, scratch_operands = 2 : i64, tpu.core_type = #tpu.core_type<tc>, window_params = [{transform_indices = @transform_0, window_bounds = array<i64: 1, 16, 16, 8>}, {pipeline_mode = #tpu.pipeline_mode<synchronous>, transform_indices = @transform_1, window_bounds = array<i64: 8, 8>}, {pipeline_mode = #tpu.pipeline_mode<synchronous>, transform_indices = @transform_2, window_bounds = array<i64: 8, 8>}, {pipeline_mode = #tpu.pipeline_mode<synchronous>, transform_indices = @transform_3, window_bounds = array<i64: 1, 8>}, {pipeline_mode = #tpu.pipeline_mode<synchronous>, transform_indices = @transform_4, window_bounds = array<i64: 1, 8>}, {transform_indices = @transform_5, window_bounds = array<i64: 80, 128>}, {transform_indices = @transform_6, window_bounds = array<i64: 1, 128>}, {transform_indices = @transform_7, window_bounds = array<i64: 1, 256, 128>}]} {
    %c0 = arith.constant 0 : index
    %c0_0 = arith.constant 0 : index
    %c0_1 = arith.constant 0 : index
    %c0_2 = arith.constant 0 : index
    %0 = vector.load %arg2[%c0, %c0_0, %c0_1, %c0_2] : memref<1x16x16x8xf32, #tpu.memory_space<vmem>>, vector<1x16x16x8xf32>
    %1 = vector.shape_cast %0 : vector<1x16x16x8xf32> to vector<16x16x8xf32>
    %2 = vector.shape_cast %1 : vector<16x16x8xf32> to vector<256x8xf32>
    %c0_i32 = arith.constant 0 : i32
    %3 = arith.cmpi eq, %arg1, %c0_i32 : i32
    %4 = arith.extui %3 : i1 to i32
    %c0_i32_3 = arith.constant 0 : i32
    %5 = arith.cmpi ne, %4, %c0_i32_3 : i32
    scf.if %5 {
      %cst_14 = arith.constant dense<0.000000e+00> : vector<8xf32>
      %16 = vector.multi_reduction <add>, %2, %cst_14 [0] : vector<256x8xf32> to vector<8xf32>
      %17 = vector.shape_cast %16 : vector<8xf32> to vector<1x8xf32>
      %18 = arith.mulf %2, %2 : vector<256x8xf32>
      %cst_15 = arith.constant dense<0.000000e+00> : vector<8xf32>
      %19 = vector.multi_reduction <add>, %18, %cst_15 [0] : vector<256x8xf32> to vector<8xf32>
      %20 = vector.shape_cast %19 : vector<8xf32> to vector<1x8xf32>
      %c0_16 = arith.constant 0 : index
      %c0_17 = arith.constant 0 : index
      %21 = vector.load %arg3[%c0_16, %c0_17] : memref<8x8xf32, #tpu.memory_space<vmem>>, vector<8x8xf32>
      %cst_18 = arith.constant dense<0.000000e+00> : vector<1x8xf32>
      %22 = tpu.matmul %17, %21, %cst_18 {dimension_numbers = #tpu.dot_dimension_numbers<[1], [0], [0], [1], [0, 0, 1, 1], [], []>} : vector<1x8xf32>, vector<8x8xf32>, vector<1x8xf32> -> vector<1x8xf32>
      %c0_19 = arith.constant 0 : index
      %c0_20 = arith.constant 0 : index
      %23 = vector.load %arg4[%c0_19, %c0_20] : memref<8x8xf32, #tpu.memory_space<vmem>>, vector<8x8xf32>
      %cst_21 = arith.constant dense<0.000000e+00> : vector<1x8xf32>
      %24 = tpu.matmul %22, %23, %cst_21 {dimension_numbers = #tpu.dot_dimension_numbers<[1], [0], [0], [1], [0, 0, 1, 1], [], []>} : vector<1x8xf32>, vector<8x8xf32>, vector<1x8xf32> -> vector<1x8xf32>
      %c0_22 = arith.constant 0 : index
      %c0_23 = arith.constant 0 : index
      %25 = vector.load %arg3[%c0_22, %c0_23] : memref<8x8xf32, #tpu.memory_space<vmem>>, vector<8x8xf32>
      %cst_24 = arith.constant dense<0.000000e+00> : vector<1x8xf32>
      %26 = tpu.matmul %20, %25, %cst_24 {dimension_numbers = #tpu.dot_dimension_numbers<[1], [0], [0], [1], [0, 0, 1, 1], [], []>} : vector<1x8xf32>, vector<8x8xf32>, vector<1x8xf32> -> vector<1x8xf32>
      %c0_25 = arith.constant 0 : index
      %c0_26 = arith.constant 0 : index
      %27 = vector.load %arg4[%c0_25, %c0_26] : memref<8x8xf32, #tpu.memory_space<vmem>>, vector<8x8xf32>
      %cst_27 = arith.constant dense<0.000000e+00> : vector<1x8xf32>
      %28 = tpu.matmul %26, %27, %cst_27 {dimension_numbers = #tpu.dot_dimension_numbers<[1], [0], [0], [1], [0, 0, 1, 1], [], []>} : vector<1x8xf32>, vector<8x8xf32>, vector<1x8xf32> -> vector<1x8xf32>
      %29 = arith.mulf %24, %24 : vector<1x8xf32>
      %30 = arith.subf %28, %29 : vector<1x8xf32>
      %cst_28 = arith.constant 0.000000e+00 : f32
      %31 = vector.broadcast %cst_28 : f32 to vector<1x8xf32>
      %32 = arith.maximumf %30, %31 : vector<1x8xf32>
      %cst_29 = arith.constant 9.99999974E-6 : f32
      %33 = vector.broadcast %cst_29 : f32 to vector<1x8xf32>
      %34 = arith.addf %32, %33 : vector<1x8xf32>
      %35 = math.rsqrt %34 : vector<1x8xf32>
      %c0_30 = arith.constant 0 : index
      %c0_31 = arith.constant 0 : index
      %36 = vector.load %arg5[%c0_30, %c0_31] : memref<1x8xf32, #tpu.memory_space<vmem>>, vector<1x8xf32>
      %37 = arith.mulf %35, %36 : vector<1x8xf32>
      %c0_32 = arith.constant 0 : index
      %c0_33 = arith.constant 0 : index
      %38 = vector.load %arg6[%c0_32, %c0_33] : memref<1x8xf32, #tpu.memory_space<vmem>>, vector<1x8xf32>
      %39 = arith.mulf %24, %37 : vector<1x8xf32>
      %40 = arith.subf %38, %39 : vector<1x8xf32>
      %41 = vector.broadcast %37 : vector<1x8xf32> to vector<256x8xf32>
      %42 = arith.mulf %2, %41 : vector<256x8xf32>
      %43 = vector.broadcast %40 : vector<1x8xf32> to vector<256x8xf32>
      %44 = arith.addf %42, %43 : vector<256x8xf32>
      %cst_34 = arith.constant 0.000000e+00 : f32
      %45 = vector.broadcast %cst_34 : f32 to vector<256x8xf32>
      %46 = arith.cmpf ogt, %44, %45 : vector<256x8xf32>
      %cst_35 = arith.constant 1.000000e-01 : f32
      %47 = vector.broadcast %cst_35 : f32 to vector<256x8xf32>
      %48 = arith.mulf %47, %44 : vector<256x8xf32>
      %49 = arith.select %46, %44, %48 : vector<256x8xi1>, vector<256x8xf32>
      %cst_36 = arith.constant 0.000000e+00 : bf16
      %50 = vector.broadcast %cst_36 : bf16 to vector<1x18x8xbf16>
      %c0_37 = arith.constant 0 : index
      %c0_38 = arith.constant 0 : index
      %c0_39 = arith.constant 0 : index
      %51 = vector.load %arg10[%c0_37, %c0_38, %c0_39] : memref<18x18x8xbf16, #tpu.memory_space<vmem>>, vector<1x18x8xbf16>
      tpu.vector_store %arg10[%c0_37, %c0_38, %c0_39], %50 {strides = array<i32>} : memref<18x18x8xbf16, #tpu.memory_space<vmem>>, vector<1x18x8xbf16>,
      %cst_40 = arith.constant 0.000000e+00 : bf16
      %52 = vector.broadcast %cst_40 : bf16 to vector<1x18x8xbf16>
      %c17 = arith.constant 17 : index
      %c0_41 = arith.constant 0 : index
      %c0_42 = arith.constant 0 : index
      %53 = vector.load %arg10[%c17, %c0_41, %c0_42] : memref<18x18x8xbf16, #tpu.memory_space<vmem>>, vector<1x18x8xbf16>
      tpu.vector_store %arg10[%c17, %c0_41, %c0_42], %52 {strides = array<i32>} : memref<18x18x8xbf16, #tpu.memory_space<vmem>>, vector<1x18x8xbf16>,
      %cst_43 = arith.constant 0.000000e+00 : bf16
      %54 = vector.broadcast %cst_43 : bf16 to vector<16x1x8xbf16>
      %c1 = arith.constant 1 : index
      %c0_44 = arith.constant 0 : index
      %c0_45 = arith.constant 0 : index
      %55 = vector.load %arg10[%c1, %c0_44, %c0_45] : memref<18x18x8xbf16, #tpu.memory_space<vmem>>, vector<16x1x8xbf16>
      tpu.vector_store %arg10[%c1, %c0_44, %c0_45], %54 {strides = array<i32>} : memref<18x18x8xbf16, #tpu.memory_space<vmem>>, vector<16x1x8xbf16>,
      %cst_46 = arith.constant 0.000000e+00 : bf16
      %56 = vector.broadcast %cst_46 : bf16 to vector<16x1x8xbf16>
      %c1_47 = arith.constant 1 : index
      %c17_48 = arith.constant 17 : index
      %c0_49 = arith.constant 0 : index
      %57 = vector.load %arg10[%c1_47, %c17_48, %c0_49] : memref<18x18x8xbf16, #tpu.memory_space<vmem>>, vector<16x1x8xbf16>
      tpu.vector_store %arg10[%c1_47, %c17_48, %c0_49], %56 {strides = array<i32>} : memref<18x18x8xbf16, #tpu.memory_space<vmem>>, vector<16x1x8xbf16>,
      %58 = vector.shape_cast %49 : vector<256x8xf32> to vector<16x16x8xf32>
      %59 = arith.truncf %58 : vector<16x16x8xf32> to vector<16x16x8xbf16>
      %c1_50 = arith.constant 1 : index
      %c1_51 = arith.constant 1 : index
      %c0_52 = arith.constant 0 : index
      %60 = vector.load %arg10[%c1_50, %c1_51, %c0_52] : memref<18x18x8xbf16, #tpu.memory_space<vmem>>, vector<16x16x8xbf16>
      tpu.vector_store %arg10[%c1_50, %c1_51, %c0_52], %59 {strides = array<i32>} : memref<18x18x8xbf16, #tpu.memory_space<vmem>>, vector<16x16x8xbf16>,
      %c0_53 = arith.constant 0 : index
      %c0_54 = arith.constant 0 : index
      %c0_55 = arith.constant 0 : index
      %61 = vector.load %arg10[%c0_53, %c0_54, %c0_55] : memref<18x18x8xbf16, #tpu.memory_space<vmem>>, vector<16x16x8xbf16>
      %c0_56 = arith.constant 0 : index
      %c0_57 = arith.constant 0 : index
      %c0_58 = arith.constant 0 : index
      %62 = vector.load %arg11[%c0_56, %c0_57, %c0_58] : memref<16x16x80xbf16, #tpu.memory_space<vmem>>, vector<16x16x8xbf16>
      tpu.vector_store %arg11[%c0_56, %c0_57, %c0_58], %61 {strides = array<i32>} : memref<16x16x80xbf16, #tpu.memory_space<vmem>>, vector<16x16x8xbf16>,
      %c0_59 = arith.constant 0 : index
      %c1_60 = arith.constant 1 : index
      %c0_61 = arith.constant 0 : index
      %63 = vector.load %arg10[%c0_59, %c1_60, %c0_61] : memref<18x18x8xbf16, #tpu.memory_space<vmem>>, vector<16x16x8xbf16>
      %c0_62 = arith.constant 0 : index
      %c0_63 = arith.constant 0 : index
      %c8 = arith.constant 8 : index
      %64 = vector.load %arg11[%c0_62, %c0_63, %c8] : memref<16x16x80xbf16, #tpu.memory_space<vmem>>, vector<16x16x8xbf16>
      tpu.vector_store %arg11[%c0_62, %c0_63, %c8], %63 {strides = array<i32>} : memref<16x16x80xbf16, #tpu.memory_space<vmem>>, vector<16x16x8xbf16>,
      %c0_64 = arith.constant 0 : index
      %c2 = arith.constant 2 : index
      %c0_65 = arith.constant 0 : index
      %65 = vector.load %arg10[%c0_64, %c2, %c0_65] : memref<18x18x8xbf16, #tpu.memory_space<vmem>>, vector<16x16x8xbf16>
      %c0_66 = arith.constant 0 : index
      %c0_67 = arith.constant 0 : index
      %c16 = arith.constant 16 : index
      %66 = vector.load %arg11[%c0_66, %c0_67, %c16] : memref<16x16x80xbf16, #tpu.memory_space<vmem>>, vector<16x16x8xbf16>
      tpu.vector_store %arg11[%c0_66, %c0_67, %c16], %65 {strides = array<i32>} : memref<16x16x80xbf16, #tpu.memory_space<vmem>>, vector<16x16x8xbf16>,
      %c1_68 = arith.constant 1 : index
      %c0_69 = arith.constant 0 : index
      %c0_70 = arith.constant 0 : index
      %67 = vector.load %arg10[%c1_68, %c0_69, %c0_70] : memref<18x18x8xbf16, #tpu.memory_space<vmem>>, vector<16x16x8xbf16>
      %c0_71 = arith.constant 0 : index
      %c0_72 = arith.constant 0 : index
      %c24 = arith.constant 24 : index
      %68 = vector.load %arg11[%c0_71, %c0_72, %c24] : memref<16x16x80xbf16, #tpu.memory_space<vmem>>, vector<16x16x8xbf16>
      tpu.vector_store %arg11[%c0_71, %c0_72, %c24], %67 {strides = array<i32>} : memref<16x16x80xbf16, #tpu.memory_space<vmem>>, vector<16x16x8xbf16>,
      %c1_73 = arith.constant 1 : index
      %c1_74 = arith.constant 1 : index
      %c0_75 = arith.constant 0 : index
      %69 = vector.load %arg10[%c1_73, %c1_74, %c0_75] : memref<18x18x8xbf16, #tpu.memory_space<vmem>>, vector<16x16x8xbf16>
      %c0_76 = arith.constant 0 : index
      %c0_77 = arith.constant 0 : index
      %c32 = arith.constant 32 : index
      %70 = vector.load %arg11[%c0_76, %c0_77, %c32] : memref<16x16x80xbf16, #tpu.memory_space<vmem>>, vector<16x16x8xbf16>
      tpu.vector_store %arg11[%c0_76, %c0_77, %c32], %69 {strides = array<i32>} : memref<16x16x80xbf16, #tpu.memory_space<vmem>>, vector<16x16x8xbf16>,
      %c1_78 = arith.constant 1 : index
      %c2_79 = arith.constant 2 : index
      %c0_80 = arith.constant 0 : index
      %71 = vector.load %arg10[%c1_78, %c2_79, %c0_80] : memref<18x18x8xbf16, #tpu.memory_space<vmem>>, vector<16x16x8xbf16>
      %c0_81 = arith.constant 0 : index
      %c0_82 = arith.constant 0 : index
      %c40 = arith.constant 40 : index
      %72 = vector.load %arg11[%c0_81, %c0_82, %c40] : memref<16x16x80xbf16, #tpu.memory_space<vmem>>, vector<16x16x8xbf16>
      tpu.vector_store %arg11[%c0_81, %c0_82, %c40], %71 {strides = array<i32>} : memref<16x16x80xbf16, #tpu.memory_space<vmem>>, vector<16x16x8xbf16>,
      %c2_83 = arith.constant 2 : index
      %c0_84 = arith.constant 0 : index
      %c0_85 = arith.constant 0 : index
      %73 = vector.load %arg10[%c2_83, %c0_84, %c0_85] : memref<18x18x8xbf16, #tpu.memory_space<vmem>>, vector<16x16x8xbf16>
      %c0_86 = arith.constant 0 : index
      %c0_87 = arith.constant 0 : index
      %c48 = arith.constant 48 : index
      %74 = vector.load %arg11[%c0_86, %c0_87, %c48] : memref<16x16x80xbf16, #tpu.memory_space<vmem>>, vector<16x16x8xbf16>
      tpu.vector_store %arg11[%c0_86, %c0_87, %c48], %73 {strides = array<i32>} : memref<16x16x80xbf16, #tpu.memory_space<vmem>>, vector<16x16x8xbf16>,
      %c2_88 = arith.constant 2 : index
      %c1_89 = arith.constant 1 : index
      %c0_90 = arith.constant 0 : index
      %75 = vector.load %arg10[%c2_88, %c1_89, %c0_90] : memref<18x18x8xbf16, #tpu.memory_space<vmem>>, vector<16x16x8xbf16>
      %c0_91 = arith.constant 0 : index
      %c0_92 = arith.constant 0 : index
      %c56 = arith.constant 56 : index
      %76 = vector.load %arg11[%c0_91, %c0_92, %c56] : memref<16x16x80xbf16, #tpu.memory_space<vmem>>, vector<16x16x8xbf16>
      tpu.vector_store %arg11[%c0_91, %c0_92, %c56], %75 {strides = array<i32>} : memref<16x16x80xbf16, #tpu.memory_space<vmem>>, vector<16x16x8xbf16>,
      %c2_93 = arith.constant 2 : index
      %c2_94 = arith.constant 2 : index
      %c0_95 = arith.constant 0 : index
      %77 = vector.load %arg10[%c2_93, %c2_94, %c0_95] : memref<18x18x8xbf16, #tpu.memory_space<vmem>>, vector<16x16x8xbf16>
      %c0_96 = arith.constant 0 : index
      %c0_97 = arith.constant 0 : index
      %c64 = arith.constant 64 : index
      %78 = vector.load %arg11[%c0_96, %c0_97, %c64] : memref<16x16x80xbf16, #tpu.memory_space<vmem>>, vector<16x16x8xbf16>
      tpu.vector_store %arg11[%c0_96, %c0_97, %c64], %77 {strides = array<i32>} : memref<16x16x80xbf16, #tpu.memory_space<vmem>>, vector<16x16x8xbf16>,
      %c0_98 = arith.constant 0 : index
      %c0_99 = arith.constant 0 : index
      %c0_100 = arith.constant 0 : index
      %c0_101 = arith.constant 0 : index
      %79 = vector.load %arg2[%c0_98, %c0_99, %c0_100, %c0_101] : memref<1x16x16x8xf32, #tpu.memory_space<vmem>>, vector<1x16x16x8xf32>
      %80 = vector.shape_cast %79 : vector<1x16x16x8xf32> to vector<16x16x8xf32>
      %81 = arith.truncf %80 : vector<16x16x8xf32> to vector<16x16x8xbf16>
      %c0_102 = arith.constant 0 : index
      %c0_103 = arith.constant 0 : index
      %c72 = arith.constant 72 : index
      %82 = vector.load %arg11[%c0_102, %c0_103, %c72] : memref<16x16x80xbf16, #tpu.memory_space<vmem>>, vector<16x16x8xbf16>
      tpu.vector_store %arg11[%c0_102, %c0_103, %c72], %81 {strides = array<i32>} : memref<16x16x80xbf16, #tpu.memory_space<vmem>>, vector<16x16x8xbf16>,
    } else {
    }
    %c0_4 = arith.constant 0 : index
    %c0_5 = arith.constant 0 : index
    %c0_6 = arith.constant 0 : index
    %6 = vector.load %arg11[%c0_4, %c0_5, %c0_6] : memref<16x16x80xbf16, #tpu.memory_space<vmem>>, vector<16x16x80xbf16>
    %7 = vector.shape_cast %6 : vector<16x16x80xbf16> to vector<256x80xbf16>
    %c0_7 = arith.constant 0 : index
    %c0_8 = arith.constant 0 : index
    %8 = vector.load %arg7[%c0_7, %c0_8] : memref<80x128xbf16, #tpu.memory_space<vmem>>, vector<80x128xbf16>
    %cst = arith.constant dense<0.000000e+00> : vector<256x128xf32>
    %9 = tpu.matmul %7, %8, %cst {dimension_numbers = #tpu.dot_dimension_numbers<[1], [0], [0], [1], [0, 0, 1, 1], [], []>} : vector<256x80xbf16>, vector<80x128xbf16>, vector<256x128xf32> -> vector<256x128xf32>
    %c0_9 = arith.constant 0 : index
    %c0_10 = arith.constant 0 : index
    %10 = vector.load %arg8[%c0_9, %c0_10] : memref<1x128xf32, #tpu.memory_space<vmem>>, vector<1x128xf32>
    %11 = vector.broadcast %10 : vector<1x128xf32> to vector<256x128xf32>
    %12 = arith.addf %9, %11 : vector<256x128xf32>
    %c0_11 = arith.constant 0 : index
    %c0_12 = arith.constant 0 : index
    %c0_13 = arith.constant 0 : index
    %13 = vector.load %arg9[%c0_11, %c0_12, %c0_13] : memref<1x256x128xf32, #tpu.memory_space<vmem>>, vector<1x256x128xf32>
    %14 = vector.shape_cast %13 : vector<1x256x128xf32> to vector<256x128xf32>
    %15 = vector.shape_cast %12 : vector<256x128xf32> to vector<1x256x128xf32>
    tpu.vector_store %arg9[%c0_11, %c0_12, %c0_13], %15 {strides = array<i32>} : memref<1x256x128xf32, #tpu.memory_space<vmem>>, vector<1x256x128xf32>,
    return
  }
  func.func @transform_0(%arg0: i32, %arg1: i32) -> (i32, i32, i32, i32) {
    %c0_i32 = arith.constant 0 : i32
    %c0_i32_0 = arith.constant 0 : i32
    %c0_i32_1 = arith.constant 0 : i32
    %c0_i32_2 = arith.constant 0 : i32
    return %arg0, %c0_i32, %c0_i32_0, %c0_i32_1 : i32, i32, i32, i32
  }
  func.func @transform_1(%arg0: i32, %arg1: i32) -> (i32, i32) {
    %c0_i32 = arith.constant 0 : i32
    %c0_i32_0 = arith.constant 0 : i32
    %c0_i32_1 = arith.constant 0 : i32
    return %c0_i32, %c0_i32_0 : i32, i32
  }
  func.func @transform_2(%arg0: i32, %arg1: i32) -> (i32, i32) {
    %c0_i32 = arith.constant 0 : i32
    %c0_i32_0 = arith.constant 0 : i32
    %c0_i32_1 = arith.constant 0 : i32
    return %c0_i32, %c0_i32_0 : i32, i32
  }
  func.func @transform_3(%arg0: i32, %arg1: i32) -> (i32, i32) {
    %c0_i32 = arith.constant 0 : i32
    %c0_i32_0 = arith.constant 0 : i32
    %c0_i32_1 = arith.constant 0 : i32
    return %c0_i32, %c0_i32_0 : i32, i32
  }
  func.func @transform_4(%arg0: i32, %arg1: i32) -> (i32, i32) {
    %c0_i32 = arith.constant 0 : i32
    %c0_i32_0 = arith.constant 0 : i32
    %c0_i32_1 = arith.constant 0 : i32
    return %c0_i32, %c0_i32_0 : i32, i32
  }
  func.func @transform_5(%arg0: i32, %arg1: i32) -> (i32, i32) {
    %c0_i32 = arith.constant 0 : i32
    %c0_i32_0 = arith.constant 0 : i32
    return %c0_i32, %arg1 : i32, i32
  }
  func.func @transform_6(%arg0: i32, %arg1: i32) -> (i32, i32) {
    %c0_i32 = arith.constant 0 : i32
    %c0_i32_0 = arith.constant 0 : i32
    return %c0_i32, %arg1 : i32, i32
  }
  func.func @transform_7(%arg0: i32, %arg1: i32) -> (i32, i32, i32) {
    %c0_i32 = arith.constant 0 : i32
    %c0_i32_0 = arith.constant 0 : i32
    return %arg0, %c0_i32, %arg1 : i32, i32, i32
  }
}

</mosaic_0001>

<llo_original>
// kernel: tpu_custom_call.1
$region0: #{tpu_custom_call.1}
  #allocation0 [shape = 'u32[]', space=smem, size = 0x4, offset = 0x4, fixed_abs, tag = 'smem constant byte address 0x4 - core index']
  #allocation1 [shape = 'u32[72,128]{1,0:T(1,128)}', space=vmem, size = 0x9000, scoped, tag = 'internal scratch']
  #allocation2 [shape = 'bf16[18,18,8]{2,1,0:T(8,128)(2,1)}', space=vmem, size = 0x1b000, scoped, tag = 'scratch operand']
  #allocation3 [shape = 'bf16[16,16,80]{2,1,0:T(8,128)(2,1)}', space=vmem, size = 0x10000, scoped, tag = 'scratch operand']
  %s0 = inlined_call_operand.vmem [shape: f32[2,16,16,8], index: 0, kind: input, shape index: {}]
  %s1 = inlined_call_operand.vmem [shape: f32[8,8], index: 1, kind: input, shape index: {}]
  %s2 = inlined_call_operand.vmem [shape: f32[8,8], index: 2, kind: input, shape index: {}]
  %s3 = inlined_call_operand.vmem [shape: f32[1,8], index: 3, kind: input, shape index: {}]
  %s4 = inlined_call_operand.vmem [shape: f32[1,8], index: 4, kind: input, shape index: {}]
  %s5 = inlined_call_operand.vmem [shape: bf16[80,128], index: 5, kind: input, shape index: {}]
  %s6 = inlined_call_operand.vmem [shape: f32[1,128], index: 6, kind: input, shape index: {}]
  %s7 = inlined_call_operand.hbm [shape: f32[2,256,128], index: 7, kind: output, shape index: {}]
  %s8 = sld [smem:[#allocation0]]
  $region65: #{tpu_custom_call.1} parent=0
    _
  %s10 = ssub.s32 1, %s8
  %s11 = scalar_select 0, %s10, %s8
  $region1: #{tpu_custom_call.1} parent=0
    #allocation4 [shape = 'u8[262144]{0}', space=vmem, size = 0x40000, scoped, tag = 'output window, operand 0']
    #allocation5 [shape = 's32[2]{0}', space=sflag, size = 0x8, scoped, tag = 'scoped memory for tpu_custom_call.1']
    %12 = vsyncpa [#allocation5], 0
    %s13 = scalar_lea.sflag [#allocation5], 1
    %14 = vsyncpa %s13, 0
    loop: start=0, step=1, limit=4
    $region2: #{tpu_custom_call.1} parent=1 // loop_pre_header
      _
    $region3: #{tpu_custom_call.1} parent=1 // loop_header
      %s16 = sphi 0, %s20
      %p17 = scmp.ge.s32.totalorder %s16, 4
      %s23 = sphi 0, %s35
      %s24 = sphi 0, %s31
      %s25 = sphi 0, %s23
      %s26 = sphi 0, %s24
      %s27 = sphi 0, %s25
      %s28 = sphi 0, %s26
      %s38 = sphi 0, %s40
      %s41 = sphi 0, %s38
      %s42 = sphi 0, %s41
      %s58 = sphi 0, %s42
      %s62 = sphi 0, %s62
      %s64 = sphi 0, %s62
      %s65 = sphi 0, %s64
      %s79 = sphi 0, %s65
      %s83 = sphi 0, %s83
      %s85 = sphi 0, %s83
      %s86 = sphi 0, %s85
      %s100 = sphi 0, %s86
      %s104 = sphi 0, %s104
      %s106 = sphi 0, %s104
      %s107 = sphi 0, %s106
      %s121 = sphi 0, %s107
      %s125 = sphi 0, %s125
      %s127 = sphi 0, %s125
      %s128 = sphi 0, %s127
      %s142 = sphi 0, %s128
      %s148 = sphi 0, %s150
      %s151 = sphi 0, %s148
      %s152 = sphi 0, %s151
      %s168 = sphi 0, %s152
      %s174 = sphi 0, %s176
      %s177 = sphi 0, %s174
      %s178 = sphi 0, %s177
      %s194 = sphi 0, %s178
      %s202 = sphi 0, %s204
      %s205 = sphi 0, %s202
      %s206 = sphi 0, %s205
      %s222 = sphi 0, %s206
    $region4: #{tpu_custom_call.1} parent=1 // loop_header_branch
      %19 = sbr.rel (%p17) target = $region8
    $region5: #{tpu_custom_call.1} parent=1 // loop_body
      %s21 = ssub.s32 %s16, 1
      %s22 = ssub.s32 %s16, 2
      %s29 = sadd.s32 1, %s24
      %p30 = scmp.ge.s32.totalorder %s29, 1
      %s31 = scalar_select %p30, 0, %s29
      %s32 = sadd.s32 1, %s23
      %s33 = scalar_select %p30, %s32, %s23
      %p34 = scmp.ge.s32.totalorder %s33, 2
      %s35 = scalar_select %p34, 0, %s33
      %s36 = ssub.s32 %s23, %s35
      %p37 = scmp.eq.s32.totalorder %s36, 0
      %s39 = sadd.s32 %s38, 1
      %s40 = scalar_select %p37, %s38, %s39
      %p43 = pneg %p37
      %p44 = scmp.eq.s32.totalorder %s16, 1
      %p45 = por %p43, %p44
      %p46 = scmp.ne.s32.totalorder %s38, %s41
      %p47 = scmp.eq.s32.totalorder %s16, 0
      %p48 = por %p46, %p47
      %p49 = scmp.ne.s32.totalorder %s38, %s41
      %p50 = scmp.eq.s32.totalorder %s21, 1
      %p51 = por %p49, %p50
      %p52 = scmp.ne.s32.totalorder %s41, %s42
      %p53 = scmp.eq.s32.totalorder %s21, 0
      %p54 = por %p52, %p53
      %p55 = scmp.ne.s32.totalorder %s41, %s42
      %p56 = scmp.eq.s32.totalorder %s22, 1
      %p57 = por %p55, %p56
      %p59 = scmp.ne.s32.totalorder %s42, %s58
      %p60 = scmp.eq.s32.totalorder %s22, 0
      %p61 = por %p59, %p60
      %s63 = sadd.s32 %s62, 1
      %p66 = scmp.eq.s32.totalorder %s16, 1
      %p67 = scmp.ne.s32.totalorder %s62, %s64
      %p68 = scmp.eq.s32.totalorder %s16, 0
      %p69 = por %p67, %p68
      %p70 = scmp.ne.s32.totalorder %s62, %s64
      %p71 = scmp.eq.s32.totalorder %s21, 1
      %p72 = por %p70, %p71
      %p73 = scmp.ne.s32.totalorder %s64, %s65
      %p74 = scmp.eq.s32.totalorder %s21, 0
      %p75 = por %p73, %p74
      %p76 = scmp.ne.s32.totalorder %s64, %s65
      %p77 = scmp.eq.s32.totalorder %s22, 1
      %p78 = por %p76, %p77
      %p80 = scmp.ne.s32.totalorder %s65, %s79
      %p81 = scmp.eq.s32.totalorder %s22, 0
      %p82 = por %p80, %p81
      %s84 = sadd.s32 %s83, 1
      %p87 = scmp.eq.s32.totalorder %s16, 1
      %p88 = scmp.ne.s32.totalorder %s83, %s85
      %p89 = scmp.eq.s32.totalorder %s16, 0
      %p90 = por %p88, %p89
      %p91 = scmp.ne.s32.totalorder %s83, %s85
      %p92 = scmp.eq.s32.totalorder %s21, 1
      %p93 = por %p91, %p92
      %p94 = scmp.ne.s32.totalorder %s85, %s86
      %p95 = scmp.eq.s32.totalorder %s21, 0
      %p96 = por %p94, %p95
      %p97 = scmp.ne.s32.totalorder %s85, %s86
      %p98 = scmp.eq.s32.totalorder %s22, 1
      %p99 = por %p97, %p98
      %p101 = scmp.ne.s32.totalorder %s86, %s100
      %p102 = scmp.eq.s32.totalorder %s22, 0
      %p103 = por %p101, %p102
      %s105 = sadd.s32 %s104, 1
      %p108 = scmp.eq.s32.totalorder %s16, 1
      %p109 = scmp.ne.s32.totalorder %s104, %s106
      %p110 = scmp.eq.s32.totalorder %s16, 0
      %p111 = por %p109, %p110
      %p112 = scmp.ne.s32.totalorder %s104, %s106
      %p113 = scmp.eq.s32.totalorder %s21, 1
      %p114 = por %p112, %p113
      %p115 = scmp.ne.s32.totalorder %s106, %s107
      %p116 = scmp.eq.s32.totalorder %s21, 0
      %p117 = por %p115, %p116
      %p118 = scmp.ne.s32.totalorder %s106, %s107
      %p119 = scmp.eq.s32.totalorder %s22, 1
      %p120 = por %p118, %p119
      %p122 = scmp.ne.s32.totalorder %s107, %s121
      %p123 = scmp.eq.s32.totalorder %s22, 0
      %p124 = por %p122, %p123
      %s126 = sadd.s32 %s125, 1
      %p129 = scmp.eq.s32.totalorder %s16, 1
      %p130 = scmp.ne.s32.totalorder %s125, %s127
      %p131 = scmp.eq.s32.totalorder %s16, 0
      %p132 = por %p130, %p131
      %p133 = scmp.ne.s32.totalorder %s125, %s127
      %p134 = scmp.eq.s32.totalorder %s21, 1
      %p135 = por %p133, %p134
      %p136 = scmp.ne.s32.totalorder %s127, %s128
      %p137 = scmp.eq.s32.totalorder %s21, 0
      %p138 = por %p136, %p137
      %p139 = scmp.ne.s32.totalorder %s127, %s128
      %p140 = scmp.eq.s32.totalorder %s22, 1
      %p141 = por %p139, %p140
      %p143 = scmp.ne.s32.totalorder %s128, %s142
      %p144 = scmp.eq.s32.totalorder %s22, 0
      %p145 = por %p143, %p144
      %s146 = ssub.s32 %s24, %s31
      %p147 = scmp.eq.s32.totalorder %s146, 0
      %s149 = sadd.s32 %s148, 1
      %s150 = scalar_select %p147, %s148, %s149
      %p153 = pneg %p147
      %p154 = scmp.eq.s32.totalorder %s16, 1
      %p155 = por %p153, %p154
      %p156 = scmp.ne.s32.totalorder %s148, %s151
      %p157 = scmp.eq.s32.totalorder %s16, 0
      %p158 = por %p156, %p157
      %p159 = scmp.ne.s32.totalorder %s148, %s151
      %p160 = scmp.eq.s32.totalorder %s21, 1
      %p161 = por %p159, %p160
      %p162 = scmp.ne.s32.totalorder %s151, %s152
      %p163 = scmp.eq.s32.totalorder %s21, 0
      %p164 = por %p162, %p163
      %p165 = scmp.ne.s32.totalorder %s151, %s152
      %p166 = scmp.eq.s32.totalorder %s22, 1
      %p167 = por %p165, %p166
      %p169 = scmp.ne.s32.totalorder %s152, %s168
      %p170 = scmp.eq.s32.totalorder %s22, 0
      %p171 = por %p169, %p170
      %s172 = ssub.s32 %s24, %s31
      %p173 = scmp.eq.s32.totalorder %s172, 0
      %s175 = sadd.s32 %s174, 1
      %s176 = scalar_select %p173, %s174, %s175
      %p179 = pneg %p173
      %p180 = scmp.eq.s32.totalorder %s16, 1
      %p181 = por %p179, %p180
      %p182 = scmp.ne.s32.totalorder %s174, %s177
      %p183 = scmp.eq.s32.totalorder %s16, 0
      %p184 = por %p182, %p183
      %p185 = scmp.ne.s32.totalorder %s174, %s177
      %p186 = scmp.eq.s32.totalorder %s21, 1
      %p187 = por %p185, %p186
      %p188 = scmp.ne.s32.totalorder %s177, %s178
      %p189 = scmp.eq.s32.totalorder %s21, 0
      %p190 = por %p188, %p189
      %p191 = scmp.ne.s32.totalorder %s177, %s178
      %p192 = scmp.eq.s32.totalorder %s22, 1
      %p193 = por %p191, %p192
      %p195 = scmp.ne.s32.totalorder %s178, %s194
      %p196 = scmp.eq.s32.totalorder %s22, 0
      %p197 = por %p195, %p196
      %s198 = ssub.s32 %s23, %s35
      %s199 = ssub.s32 %s24, %s31
      %s200 = sor.u32 %s198, %s199
      %p201 = scmp.eq.s32.totalorder %s200, 0
      %s203 = sadd.s32 %s202, 1
      %s204 = scalar_select %p201, %s202, %s203
      %p207 = pneg %p201
      %p208 = scmp.eq.s32.totalorder %s16, 1
      %p209 = por %p207, %p208
      %p210 = scmp.ne.s32.totalorder %s202, %s205
      %p211 = scmp.eq.s32.totalorder %s16, 0
      %p212 = por %p210, %p211
      %p213 = scmp.ne.s32.totalorder %s202, %s205
      %p214 = scmp.eq.s32.totalorder %s21, 1
      %p215 = por %p213, %p214
      %p216 = scmp.ne.s32.totalorder %s205, %s206
      %p217 = scmp.eq.s32.totalorder %s21, 0
      %p218 = por %p216, %p217
      %p219 = scmp.ne.s32.totalorder %s205, %s206
      %p220 = scmp.eq.s32.totalorder %s22, 1
      %p221 = por %p219, %p220
      %p223 = scmp.ne.s32.totalorder %s206, %s222
      %p224 = scmp.eq.s32.totalorder %s22, 0
      %p225 = por %p223, %p224
      %p226 = scmp.le.s32.totalorder 1, %s16
      %p227 = scmp.lt.s32.totalorder %s16, 3
      %p228 = pnand %p226, %p227
      %p229 = pneg %p228
      // Predicated region
      $region9: #{tpu_custom_call.1} parent=5 // pred_check
        _
      $region10: #{tpu_custom_call.1} parent=5 // pred_check_branch
        %231 = sbr.rel (%p228) target = $region12
      $region11: #{tpu_custom_call.1} parent=5 // pred_region
        %s232 = ssub.s32 %s16, 1
        // Predicated region
        $region13: #{tpu_custom_call.1} parent=11 // pred_check
          %p233 = pneg %p75
        $region14: #{tpu_custom_call.1} parent=11 // pred_check_branch
          %235 = sbr.rel (%p233) target = $region16
        $region15: #{tpu_custom_call.1} parent=11 // pred_region
          _
        $region16: #{tpu_custom_call.1} parent=11 // pred_fallthru
          _
        // Predicated region
        $region17: #{tpu_custom_call.1} parent=11 // pred_check
          %p236 = pneg %p96
        $region18: #{tpu_custom_call.1} parent=11 // pred_check_branch
          %238 = sbr.rel (%p236) target = $region20
        $region19: #{tpu_custom_call.1} parent=11 // pred_region
          _
        $region20: #{tpu_custom_call.1} parent=11 // pred_fallthru
          _
        // Predicated region
        $region21: #{tpu_custom_call.1} parent=11 // pred_check
          %p239 = pneg %p117
        $region22: #{tpu_custom_call.1} parent=11 // pred_check_branch
          %241 = sbr.rel (%p239) target = $region24
        $region23: #{tpu_custom_call.1} parent=11 // pred_region
          _
        $region24: #{tpu_custom_call.1} parent=11 // pred_fallthru
          _
        // Predicated region
        $region25: #{tpu_custom_call.1} parent=11 // pred_check
          %p242 = pneg %p138
        $region26: #{tpu_custom_call.1} parent=11 // pred_check_branch
          %244 = sbr.rel (%p242) target = $region28
        $region27: #{tpu_custom_call.1} parent=11 // pred_region
          _
        $region28: #{tpu_custom_call.1} parent=11 // pred_fallthru
          _
        // Predicated region
        $region29: #{tpu_custom_call.1} parent=11 // pred_check
          %p245 = pneg %p164
        $region30: #{tpu_custom_call.1} parent=11 // pred_check_branch
          %247 = sbr.rel (%p245) target = $region32
        $region31: #{tpu_custom_call.1} parent=11 // pred_region
          %p248 = scmp.lt.s32.totalorder %s26, 0
          %s249 = scalar_select %p248, %s26, 0
          %s250 = smul.addr %s249, 4
          %s251 = scalar_lea.vmem %s5, %s250
        $region32: #{tpu_custom_call.1} parent=11 // pred_fallthru
          _
        // Predicated region
        $region33: #{tpu_custom_call.1} parent=11 // pred_check
          %p252 = pneg %p190
        $region34: #{tpu_custom_call.1} parent=11 // pred_check_branch
          %254 = sbr.rel (%p252) target = $region36
        $region35: #{tpu_custom_call.1} parent=11 // pred_region
          %p255 = scmp.lt.s32.totalorder %s26, 0
          %s256 = scalar_select %p255, %s26, 0
          %s257 = scalar_lea.vmem %s6, %s256
        $region36: #{tpu_custom_call.1} parent=11 // pred_fallthru
          _
      $region12: #{tpu_custom_call.1} parent=5 // pred_fallthru
        _
      %p258 = scmp.lt.s32.totalorder %s16, 2
      // Predicated region
      $region37: #{tpu_custom_call.1} parent=5 // pred_check
        %p259 = pneg %p258
      $region38: #{tpu_custom_call.1} parent=5 // pred_check_branch
        %261 = sbr.rel (%p259) target = $region40
      $region39: #{tpu_custom_call.1} parent=5 // pred_region
        // Predicated region
        $region41: #{tpu_custom_call.1} parent=39 // pred_check
          %p262 = pneg %p48
        $region42: #{tpu_custom_call.1} parent=39 // pred_check_branch
          %264 = sbr.rel (%p262) target = $region44
        $region43: #{tpu_custom_call.1} parent=39 // pred_region
          %p265 = scmp.lt.s32.totalorder %s23, 1
          %s266 = scalar_select %p265, %s23, 1
          %s267 = smul.addr %s266, 32
          %s268 = smul.addr %s267, 8
          %s269 = scalar_lea.vmem %s0, %s268
        $region44: #{tpu_custom_call.1} parent=39 // pred_fallthru
          _
      $region40: #{tpu_custom_call.1} parent=5 // pred_fallthru
        _
      %p270 = scmp.le.s32.totalorder 1, %s16
      %p271 = scmp.lt.s32.totalorder %s16, 3
      %p272 = pnand %p270, %p271
      %p273 = pneg %p272
      // Predicated region
      $region45: #{tpu_custom_call.1} parent=5 // pred_check
        _
      $region46: #{tpu_custom_call.1} parent=5 // pred_check_branch
        %275 = sbr.rel (%p272) target = $region48
      $region47: #{tpu_custom_call.1} parent=5 // pred_region
        %s276 = ssub.s32 %s16, 1
        %p277 = scmp.lt.s32.totalorder %s25, 1
        %s278 = scalar_select %p277, %s25, 1
        %s279 = smul.addr %s278, 32
        %s280 = smul.addr %s279, 8
        %s281 = scalar_lea.vmem %s0, %s280
        %p282 = pneg %p54
        %p283 = pneg %p51
        %p284 = pneg %p75
        %p285 = pneg %p72
        %p286 = pneg %p96
        %p287 = pneg %p93
        %p288 = pneg %p117
        %p289 = pneg %p114
        %p290 = pneg %p138
        %p291 = pneg %p135
        %p292 = scmp.lt.s32.totalorder %s26, 0
        %s293 = scalar_select %p292, %s26, 0
        %s294 = smul.addr %s293, 4
        %s295 = scalar_lea.vmem %s5, %s294
        %p296 = pneg %p164
        %p297 = pneg %p161
        %p298 = scmp.lt.s32.totalorder %s26, 0
        %s299 = scalar_select %p298, %s26, 0
        %s300 = scalar_lea.vmem %s6, %s299
        %p301 = pneg %p190
        %p302 = pneg %p187
        %p303 = pneg %p218
        %p304 = pneg %p215
        %s305 = sand.u32 %s205, 1
        %s306 = scalar_lea.sflag [#allocation5], %s305
        %s307 = sand.u32 %s205, 1
        %s308 = smul.addr %s307, 256
        %s309 = scalar_lea.vmem [#allocation4], %s308
        %p310 = scmp.lt.s32.totalorder %s25, 1
        %s311 = scalar_select %p310, %s25, 1
        %s312 = smul.addr %s311, 32
        %s313 = smul.addr %s312, 8
        %s314 = scalar_lea.vmem %s0, %s313
        %p315 = scmp.lt.s32.totalorder %s26, 0
        %s316 = scalar_select %p315, %s26, 0
        %s317 = smul.addr %s316, 4
        %s318 = scalar_lea.vmem %s5, %s317
        %p319 = scmp.lt.s32.totalorder %s26, 0
        %s320 = scalar_select %p319, %s26, 0
        %s321 = scalar_lea.vmem %s6, %s320
        %v323 = vld [vmem:[%s314] sm:$0xff]
        %v324 = vld [vmem:[%s314 + $0x8] sm:$0xff]
        %v325 = vld [vmem:[%s314 + $0x10] sm:$0xff]
        %v326 = vld [vmem:[%s314 + $0x18] sm:$0xff]
        %v327 = vld [vmem:[%s314 + $0x20] sm:$0xff]
        %v328 = vld [vmem:[%s314 + $0x28] sm:$0xff]
        %v329 = vld [vmem:[%s314 + $0x30] sm:$0xff]
        %v330 = vld [vmem:[%s314 + $0x38] sm:$0xff]
        %v331 = vld [vmem:[%s314 + $0x40] sm:$0xff]
        %v332 = vld [vmem:[%s314 + $0x48] sm:$0xff]
        %v333 = vld [vmem:[%s314 + $0x50] sm:$0xff]
        %v334 = vld [vmem:[%s314 + $0x58] sm:$0xff]
        %v335 = vld [vmem:[%s314 + $0x60] sm:$0xff]
        %v336 = vld [vmem:[%s314 + $0x68] sm:$0xff]
        %v337 = vld [vmem:[%s314 + $0x70] sm:$0xff]
        %v338 = vld [vmem:[%s314 + $0x78] sm:$0xff]
        %v339 = vld [vmem:[%s314 + $0x80] sm:$0xff]
        %v340 = vld [vmem:[%s314 + $0x88] sm:$0xff]
        %v341 = vld [vmem:[%s314 + $0x90] sm:$0xff]
        %v342 = vld [vmem:[%s314 + $0x98] sm:$0xff]
        %v343 = vld [vmem:[%s314 + $0xa0] sm:$0xff]
        %v344 = vld [vmem:[%s314 + $0xa8] sm:$0xff]
        %v345 = vld [vmem:[%s314 + $0xb0] sm:$0xff]
        %v346 = vld [vmem:[%s314 + $0xb8] sm:$0xff]
        %v347 = vld [vmem:[%s314 + $0xc0] sm:$0xff]
        %v348 = vld [vmem:[%s314 + $0xc8] sm:$0xff]
        %v349 = vld [vmem:[%s314 + $0xd0] sm:$0xff]
        %v350 = vld [vmem:[%s314 + $0xd8] sm:$0xff]
        %v351 = vld [vmem:[%s314 + $0xe0] sm:$0xff]
        %v352 = vld [vmem:[%s314 + $0xe8] sm:$0xff]
        %v353 = vld [vmem:[%s314 + $0xf0] sm:$0xff]
        %v354 = vld [vmem:[%s314 + $0xf8] sm:$0xff]
        %p355 = scmp.eq.s32.totalorder %s26, 0
        // Predicated region
        $region49: #{tpu_custom_call.1} parent=47 // pred_check
          %p356 = pneg %p355
        $region50: #{tpu_custom_call.1} parent=47 // pred_check_branch
          %358 = sbr.rel (%p356) target = $region52
        $region51: #{tpu_custom_call.1} parent=47 // pred_region
          %vm359 = vcmask 64512
          %v360 = vsel %vm359, %v323, 0.0
          %v361 = vsel %vm359, %v324, 0.0
          %v362 = vadd.f32 %v360, %v361
          %v363 = vsel %vm359, %v325, 0.0
          %v364 = vadd.f32 %v362, %v363
          %v365 = vsel %vm359, %v326, 0.0
          %v366 = vadd.f32 %v364, %v365
          %v367 = vsel %vm359, %v327, 0.0
          %v368 = vadd.f32 %v366, %v367
          %v369 = vsel %vm359, %v328, 0.0
          %v370 = vadd.f32 %v368, %v369
          %v371 = vsel %vm359, %v329, 0.0
          %v372 = vadd.f32 %v370, %v371
          %v373 = vsel %vm359, %v330, 0.0
          %v374 = vadd.f32 %v372, %v373
          %v375 = vsel %vm359, %v331, 0.0
          %v376 = vadd.f32 %v374, %v375
          %v377 = vsel %vm359, %v332, 0.0
          %v378 = vadd.f32 %v376, %v377
          %v379 = vsel %vm359, %v333, 0.0
          %v380 = vadd.f32 %v378, %v379
          %v381 = vsel %vm359, %v334, 0.0
          %v382 = vadd.f32 %v380, %v381
          %v383 = vsel %vm359, %v335, 0.0
          %v384 = vadd.f32 %v382, %v383
          %v385 = vsel %vm359, %v336, 0.0
          %v386 = vadd.f32 %v384, %v385
          %v387 = vsel %vm359, %v337, 0.0
          %v388 = vadd.f32 %v386, %v387
          %v389 = vsel %vm359, %v338, 0.0
          %v390 = vadd.f32 %v388, %v389
          %v391 = vsel %vm359, %v339, 0.0
          %v392 = vadd.f32 %v390, %v391
          %v393 = vsel %vm359, %v340, 0.0
          %v394 = vadd.f32 %v392, %v393
          %v395 = vsel %vm359, %v341, 0.0
          %v396 = vadd.f32 %v394, %v395
          %v397 = vsel %vm359, %v342, 0.0
          %v398 = vadd.f32 %v396, %v397
          %v399 = vsel %vm359, %v343, 0.0
          %v400 = vadd.f32 %v398, %v399
          %v401 = vsel %vm359, %v344, 0.0
          %v402 = vadd.f32 %v400, %v401
          %v403 = vsel %vm359, %v345, 0.0
          %v404 = vadd.f32 %v402, %v403
          %v405 = vsel %vm359, %v346, 0.0
          %v406 = vadd.f32 %v404, %v405
          %v407 = vsel %vm359, %v347, 0.0
          %v408 = vadd.f32 %v406, %v407
          %v409 = vsel %vm359, %v348, 0.0
          %v410 = vadd.f32 %v408, %v409
          %v411 = vsel %vm359, %v349, 0.0
          %v412 = vadd.f32 %v410, %v411
          %v413 = vsel %vm359, %v350, 0.0
          %v414 = vadd.f32 %v412, %v413
          %v415 = vsel %vm359, %v351, 0.0
          %v416 = vadd.f32 %v414, %v415
          %v417 = vsel %vm359, %v352, 0.0
          %v418 = vadd.f32 %v416, %v417
          %v419 = vsel %vm359, %v353, 0.0
          %v420 = vadd.f32 %v418, %v419
          %v421 = vsel %vm359, %v354, 0.0
          %v422 = vadd.f32 %v420, %v421
          %v423 = vrot.slane %v422, 4
          %v424 = vadd.f32 %v422, %v423
          %v425 = vrot.slane %v424, 2
          %v426 = vadd.f32 %v424, %v425
          %v427 = vrot.slane %v426, 1
          %v428 = vadd.f32 %v426, %v427
          %v429 = vmul.f32 %v323, %v323
          %v430 = vmul.f32 %v324, %v324
          %v431 = vmul.f32 %v325, %v325
          %v432 = vmul.f32 %v326, %v326
          %v433 = vmul.f32 %v327, %v327
          %v434 = vmul.f32 %v328, %v328
          %v435 = vmul.f32 %v329, %v329
          %v436 = vmul.f32 %v330, %v330
          %v437 = vmul.f32 %v331, %v331
          %v438 = vmul.f32 %v332, %v332
          %v439 = vmul.f32 %v333, %v333
          %v440 = vmul.f32 %v334, %v334
          %v441 = vmul.f32 %v335, %v335
          %v442 = vmul.f32 %v336, %v336
          %v443 = vmul.f32 %v337, %v337
          %v444 = vmul.f32 %v338, %v338
          %v445 = vmul.f32 %v339, %v339
          %v446 = vmul.f32 %v340, %v340
          %v447 = vmul.f32 %v341, %v341
          %v448 = vmul.f32 %v342, %v342
          %v449 = vmul.f32 %v343, %v343
          %v450 = vmul.f32 %v344, %v344
          %v451 = vmul.f32 %v345, %v345
          %v452 = vmul.f32 %v346, %v346
          %v453 = vmul.f32 %v347, %v347
          %v454 = vmul.f32 %v348, %v348
          %v455 = vmul.f32 %v349, %v349
          %v456 = vmul.f32 %v350, %v350
          %v457 = vmul.f32 %v351, %v351
          %v458 = vmul.f32 %v352, %v352
          %v459 = vmul.f32 %v353, %v353
          %v460 = vmul.f32 %v354, %v354
          %v461 = vsel %vm359, %v429, 0.0
          %v462 = vsel %vm359, %v430, 0.0
          %v463 = vadd.f32 %v461, %v462
          %v464 = vsel %vm359, %v431, 0.0
          %v465 = vadd.f32 %v463, %v464
          %v466 = vsel %vm359, %v432, 0.0
          %v467 = vadd.f32 %v465, %v466
          %v468 = vsel %vm359, %v433, 0.0
          %v469 = vadd.f32 %v467, %v468
          %v470 = vsel %vm359, %v434, 0.0
          %v471 = vadd.f32 %v469, %v470
          %v472 = vsel %vm359, %v435, 0.0
          %v473 = vadd.f32 %v471, %v472
          %v474 = vsel %vm359, %v436, 0.0
          %v475 = vadd.f32 %v473, %v474
          %v476 = vsel %vm359, %v437, 0.0
          %v477 = vadd.f32 %v475, %v476
          %v478 = vsel %vm359, %v438, 0.0
          %v479 = vadd.f32 %v477, %v478
          %v480 = vsel %vm359, %v439, 0.0
          %v481 = vadd.f32 %v479, %v480
          %v482 = vsel %vm359, %v440, 0.0
          %v483 = vadd.f32 %v481, %v482
          %v484 = vsel %vm359, %v441, 0.0
          %v485 = vadd.f32 %v483, %v484
          %v486 = vsel %vm359, %v442, 0.0
          %v487 = vadd.f32 %v485, %v486
          %v488 = vsel %vm359, %v443, 0.0
          %v489 = vadd.f32 %v487, %v488
          %v490 = vsel %vm359, %v444, 0.0
          %v491 = vadd.f32 %v489, %v490
          %v492 = vsel %vm359, %v445, 0.0
          %v493 = vadd.f32 %v491, %v492
          %v494 = vsel %vm359, %v446, 0.0
          %v495 = vadd.f32 %v493, %v494
          %v496 = vsel %vm359, %v447, 0.0
          %v497 = vadd.f32 %v495, %v496
          %v498 = vsel %vm359, %v448, 0.0
          %v499 = vadd.f32 %v497, %v498
          %v500 = vsel %vm359, %v449, 0.0
          %v501 = vadd.f32 %v499, %v500
          %v502 = vsel %vm359, %v450, 0.0
          %v503 = vadd.f32 %v501, %v502
          %v504 = vsel %vm359, %v451, 0.0
          %v505 = vadd.f32 %v503, %v504
          %v506 = vsel %vm359, %v452, 0.0
          %v507 = vadd.f32 %v505, %v506
          %v508 = vsel %vm359, %v453, 0.0
          %v509 = vadd.f32 %v507, %v508
          %v510 = vsel %vm359, %v454, 0.0
          %v511 = vadd.f32 %v509, %v510
          %v512 = vsel %vm359, %v455, 0.0
          %v513 = vadd.f32 %v511, %v512
          %v514 = vsel %vm359, %v456, 0.0
          %v515 = vadd.f32 %v513, %v514
          %v516 = vsel %vm359, %v457, 0.0
          %v517 = vadd.f32 %v515, %v516
          %v518 = vsel %vm359, %v458, 0.0
          %v519 = vadd.f32 %v517, %v518
          %v520 = vsel %vm359, %v459, 0.0
          %v521 = vadd.f32 %v519, %v520
          %v522 = vsel %vm359, %v460, 0.0
          %v523 = vadd.f32 %v521, %v522
          %v524 = vrot.slane %v523, 4
          %v525 = vadd.f32 %v523, %v524
          %v526 = vrot.slane %v525, 2
          %v527 = vadd.f32 %v525, %v526
          %v528 = vrot.slane %v527, 1
          %v529 = vadd.f32 %v527, %v528
          %v530 = vld [vmem:[%s1] sm:$0xff]
          %v532 = vsel %vm359, %v428, 0
          %534 = vmatpush.msra.mxu0 0.0
          %535 = vmatpush.msra.mxu0 0.0
          %536 = vmatpush.msra.mxu0 0.0
          %537 = vmatpush.msra.mxu0 0.0
          %538 = vmatpush.msra.mxu0 0.0
          %539 = vmatpush.msra.mxu0 0.0
          %540 = vmatpush.msra.mxu0 0.0
          %541 = vmatpush.msra.mxu0 0.0
          %542 = vmatpush.msra.mxu0 0.0
          %543 = vmatpush.msra.mxu0 0.0
          %544 = vmatpush.msra.mxu0 0.0
          %545 = vmatpush.msra.mxu0 0.0
          %546 = vmatpush.msra.mxu0 0.0
          %547 = vmatpush.msra.mxu0 0.0
          %548 = vmatpush.msra.mxu0 0.0
          %549 = vmatpush.msra.mxu0 %v530
          %550 = vmatmul.f32.gmra.mxu0 %v532
          %v551 = vpop.f32.mrf.mxu0
          %v552 = vadd.f32 0.0, %v551
          %553 = vdwg.mxu0
          %v554 = vld [vmem:[%s2] sm:$0xff]
          %v556 = vsel %vm359, %v552, 0
          %558 = vmatpush.msra.mxu0 0.0
          %559 = vmatpush.msra.mxu0 0.0
          %560 = vmatpush.msra.mxu0 0.0
          %561 = vmatpush.msra.mxu0 0.0
          %562 = vmatpush.msra.mxu0 0.0
          %563 = vmatpush.msra.mxu0 0.0
          %564 = vmatpush.msra.mxu0 0.0
          %565 = vmatpush.msra.mxu0 0.0
          %566 = vmatpush.msra.mxu0 0.0
          %567 = vmatpush.msra.mxu0 0.0
          %568 = vmatpush.msra.mxu0 0.0
          %569 = vmatpush.msra.mxu0 0.0
          %570 = vmatpush.msra.mxu0 0.0
          %571 = vmatpush.msra.mxu0 0.0
          %572 = vmatpush.msra.mxu0 0.0
          %573 = vmatpush.msra.mxu0 %v554
          %574 = vmatmul.f32.gmra.mxu0 %v556
          %v575 = vpop.f32.mrf.mxu0
          %v576 = vadd.f32 0.0, %v575
          %577 = vdwg.mxu0
          %v579 = vsel %vm359, %v529, 0
          %581 = vmatpush.msra.mxu0 0.0
          %582 = vmatpush.msra.mxu0 0.0
          %583 = vmatpush.msra.mxu0 0.0
          %584 = vmatpush.msra.mxu0 0.0
          %585 = vmatpush.msra.mxu0 0.0
          %586 = vmatpush.msra.mxu0 0.0
          %587 = vmatpush.msra.mxu0 0.0
          %588 = vmatpush.msra.mxu0 0.0
          %589 = vmatpush.msra.mxu0 0.0
          %590 = vmatpush.msra.mxu0 0.0
          %591 = vmatpush.msra.mxu0 0.0
          %592 = vmatpush.msra.mxu0 0.0
          %593 = vmatpush.msra.mxu0 0.0
          %594 = vmatpush.msra.mxu0 0.0
          %595 = vmatpush.msra.mxu0 0.0
          %596 = vmatpush.msra.mxu0 %v530
          %597 = vmatmul.f32.gmra.mxu0 %v579
          %v598 = vpop.f32.mrf.mxu0
          %v599 = vadd.f32 0.0, %v598
          %600 = vdwg.mxu0
          %v602 = vsel %vm359, %v599, 0
          %604 = vmatpush.msra.mxu0 0.0
          %605 = vmatpush.msra.mxu0 0.0
          %606 = vmatpush.msra.mxu0 0.0
          %607 = vmatpush.msra.mxu0 0.0
          %608 = vmatpush.msra.mxu0 0.0
          %609 = vmatpush.msra.mxu0 0.0
          %610 = vmatpush.msra.mxu0 0.0
          %611 = vmatpush.msra.mxu0 0.0
          %612 = vmatpush.msra.mxu0 0.0
          %613 = vmatpush.msra.mxu0 0.0
          %614 = vmatpush.msra.mxu0 0.0
          %615 = vmatpush.msra.mxu0 0.0
          %616 = vmatpush.msra.mxu0 0.0
          %617 = vmatpush.msra.mxu0 0.0
          %618 = vmatpush.msra.mxu0 0.0
          %619 = vmatpush.msra.mxu0 %v554
          %620 = vmatmul.f32.gmra.mxu0 %v602
          %v621 = vpop.f32.mrf.mxu0
          %v622 = vadd.f32 0.0, %v621
          %623 = vdwg.mxu0
          %v624 = vmul.f32 %v576, %v576
          %v625 = vsub.f32 %v622, %v624
          %v626 = vmax.f32 %v625, 0.0
          %v627 = vadd.f32 %v626, 1e-05
          %v628 = vrsqrt.pop %v627
          %v629 = vmul.f32 %v628, %v627
          %v630 = vmul.f32 %v629, %v628
          %v631 = vmul.f32 0.5, %v630
          %v632 = vsub.f32 1.5, %v631
          %v633 = vmul.f32 %v628, %v632
          %vm634 = vweird.f32 %v627
          %vm635 = vweird.f32 %v628
          %vm636 = vmor %vm634, %vm635
          %v637 = vsel %vm636, %v628, %v633
          %v638 = vld [vmem:[%s3] sm:$0x1]
          %v639 = vmul.f32 %v637, %v638
          %v640 = vld [vmem:[%s4] sm:$0x1]
          %v641 = vmul.f32 %v576, %v639
          %v642 = vsub.f32 %v640, %v641
          %v643 = vperm.slane %v639, 0
          %v644 = vmul.f32 %v323, %v643
          %v645 = vmul.f32 %v324, %v643
          %v646 = vmul.f32 %v325, %v643
          %v647 = vmul.f32 %v326, %v643
          %v648 = vmul.f32 %v327, %v643
          %v649 = vmul.f32 %v328, %v643
          %v650 = vmul.f32 %v329, %v643
          %v651 = vmul.f32 %v330, %v643
          %v652 = vmul.f32 %v331, %v643
          %v653 = vmul.f32 %v332, %v643
          %v654 = vmul.f32 %v333, %v643
          %v655 = vmul.f32 %v334, %v643
          %v656 = vmul.f32 %v335, %v643
          %v657 = vmul.f32 %v336, %v643
          %v658 = vmul.f32 %v337, %v643
          %v659 = vmul.f32 %v338, %v643
          %v660 = vmul.f32 %v339, %v643
          %v661 = vmul.f32 %v340, %v643
          %v662 = vmul.f32 %v341, %v643
          %v663 = vmul.f32 %v342, %v643
          %v664 = vmul.f32 %v343, %v643
          %v665 = vmul.f32 %v344, %v643
          %v666 = vmul.f32 %v345, %v643
          %v667 = vmul.f32 %v346, %v643
          %v668 = vmul.f32 %v347, %v643
          %v669 = vmul.f32 %v348, %v643
          %v670 = vmul.f32 %v349, %v643
          %v671 = vmul.f32 %v350, %v643
          %v672 = vmul.f32 %v351, %v643
          %v673 = vmul.f32 %v352, %v643
          %v674 = vmul.f32 %v353, %v643
          %v675 = vmul.f32 %v354, %v643
          %v677 = vperm.slane %v642, 0
          %v679 = vadd.f32 %v644, %v677
          %v680 = vadd.f32 %v645, %v677
          %v681 = vadd.f32 %v646, %v677
          %v682 = vadd.f32 %v647, %v677
          %v683 = vadd.f32 %v648, %v677
          %v684 = vadd.f32 %v649, %v677
          %v685 = vadd.f32 %v650, %v677
          %v686 = vadd.f32 %v651, %v677
          %v687 = vadd.f32 %v652, %v677
          %v688 = vadd.f32 %v653, %v677
          %v689 = vadd.f32 %v654, %v677
          %v690 = vadd.f32 %v655, %v677
          %v691 = vadd.f32 %v656, %v677
          %v692 = vadd.f32 %v657, %v677
          %v693 = vadd.f32 %v658, %v677
          %v694 = vadd.f32 %v659, %v677
          %v695 = vadd.f32 %v660, %v677
          %v696 = vadd.f32 %v661, %v677
          %v697 = vadd.f32 %v662, %v677
          %v698 = vadd.f32 %v663, %v677
          %v699 = vadd.f32 %v664, %v677
          %v700 = vadd.f32 %v665, %v677
          %v701 = vadd.f32 %v666, %v677
          %v702 = vadd.f32 %v667, %v677
          %v703 = vadd.f32 %v668, %v677
          %v704 = vadd.f32 %v669, %v677
          %v705 = vadd.f32 %v670, %v677
          %v706 = vadd.f32 %v671, %v677
          %v707 = vadd.f32 %v672, %v677
          %v708 = vadd.f32 %v673, %v677
          %v709 = vadd.f32 %v674, %v677
          %v710 = vadd.f32 %v675, %v677
          %vm711 = vcmp.gt.f32.partialorder %v679, 0.0
          %vm712 = vcmp.gt.f32.partialorder %v680, 0.0
          %vm713 = vcmp.gt.f32.partialorder %v681, 0.0
          %vm714 = vcmp.gt.f32.partialorder %v682, 0.0
          %vm715 = vcmp.gt.f32.partialorder %v683, 0.0
          %vm716 = vcmp.gt.f32.partialorder %v684, 0.0
          %vm717 = vcmp.gt.f32.partialorder %v685, 0.0
          %vm718 = vcmp.gt.f32.partialorder %v686, 0.0
          %vm719 = vcmp.gt.f32.partialorder %v687, 0.0
          %vm720 = vcmp.gt.f32.partialorder %v688, 0.0
          %vm721 = vcmp.gt.f32.partialorder %v689, 0.0
          %vm722 = vcmp.gt.f32.partialorder %v690, 0.0
          %vm723 = vcmp.gt.f32.partialorder %v691, 0.0
          %vm724 = vcmp.gt.f32.partialorder %v692, 0.0
          %vm725 = vcmp.gt.f32.partialorder %v693, 0.0
          %vm726 = vcmp.gt.f32.partialorder %v694, 0.0
          %vm727 = vcmp.gt.f32.partialorder %v695, 0.0
          %vm728 = vcmp.gt.f32.partialorder %v696, 0.0
          %vm729 = vcmp.gt.f32.partialorder %v697, 0.0
          %vm730 = vcmp.gt.f32.partialorder %v698, 0.0
          %vm731 = vcmp.gt.f32.partialorder %v699, 0.0
          %vm732 = vcmp.gt.f32.partialorder %v700, 0.0
          %vm733 = vcmp.gt.f32.partialorder %v701, 0.0
          %vm734 = vcmp.gt.f32.partialorder %v702, 0.0
          %vm735 = vcmp.gt.f32.partialorder %v703, 0.0
          %vm736 = vcmp.gt.f32.partialorder %v704, 0.0
          %vm737 = vcmp.gt.f32.partialorder %v705, 0.0
          %vm738 = vcmp.gt.f32.partialorder %v706, 0.0
          %vm739 = vcmp.gt.f32.partialorder %v707, 0.0
          %vm740 = vcmp.gt.f32.partialorder %v708, 0.0
          %vm741 = vcmp.gt.f32.partialorder %v709, 0.0
          %vm742 = vcmp.gt.f32.partialorder %v710, 0.0
          %v743 = vmul.f32 %v679, 0.1
          %v744 = vmul.f32 %v680, 0.1
          %v745 = vmul.f32 %v681, 0.1
          %v746 = vmul.f32 %v682, 0.1
          %v747 = vmul.f32 %v683, 0.1
          %v748 = vmul.f32 %v684, 0.1
          %v749 = vmul.f32 %v685, 0.1
          %v750 = vmul.f32 %v686, 0.1
          %v751 = vmul.f32 %v687, 0.1
          %v752 = vmul.f32 %v688, 0.1
          %v753 = vmul.f32 %v689, 0.1
          %v754 = vmul.f32 %v690, 0.1
          %v755 = vmul.f32 %v691, 0.1
          %v756 = vmul.f32 %v692, 0.1
          %v757 = vmul.f32 %v693, 0.1
          %v758 = vmul.f32 %v694, 0.1
          %v759 = vmul.f32 %v695, 0.1
          %v760 = vmul.f32 %v696, 0.1
          %v761 = vmul.f32 %v697, 0.1
          %v762 = vmul.f32 %v698, 0.1
          %v763 = vmul.f32 %v699, 0.1
          %v764 = vmul.f32 %v700, 0.1
          %v765 = vmul.f32 %v701, 0.1
          %v766 = vmul.f32 %v702, 0.1
          %v767 = vmul.f32 %v703, 0.1
          %v768 = vmul.f32 %v704, 0.1
          %v769 = vmul.f32 %v705, 0.1
          %v770 = vmul.f32 %v706, 0.1
          %v771 = vmul.f32 %v707, 0.1
          %v772 = vmul.f32 %v708, 0.1
          %v773 = vmul.f32 %v709, 0.1
          %v774 = vmul.f32 %v710, 0.1
          %v775 = vsel %vm711, %v679, %v743
          %v776 = vsel %vm712, %v680, %v744
          %v777 = vsel %vm713, %v681, %v745
          %v778 = vsel %vm714, %v682, %v746
          %v779 = vsel %vm715, %v683, %v747
          %v780 = vsel %vm716, %v684, %v748
          %v781 = vsel %vm717, %v685, %v749
          %v782 = vsel %vm718, %v686, %v750
          %v783 = vsel %vm719, %v687, %v751
          %v784 = vsel %vm720, %v688, %v752
          %v785 = vsel %vm721, %v689, %v753
          %v786 = vsel %vm722, %v690, %v754
          %v787 = vsel %vm723, %v691, %v755
          %v788 = vsel %vm724, %v692, %v756
          %v789 = vsel %vm725, %v693, %v757
          %v790 = vsel %vm726, %v694, %v758
          %v791 = vsel %vm727, %v695, %v759
          %v792 = vsel %vm728, %v696, %v760
          %v793 = vsel %vm729, %v697, %v761
          %v794 = vsel %vm730, %v698, %v762
          %v795 = vsel %vm731, %v699, %v763
          %v796 = vsel %vm732, %v700, %v764
          %v797 = vsel %vm733, %v701, %v765
          %v798 = vsel %vm734, %v702, %v766
          %v799 = vsel %vm735, %v703, %v767
          %v800 = vsel %vm736, %v704, %v768
          %v801 = vsel %vm737, %v705, %v769
          %v802 = vsel %vm738, %v706, %v770
          %v803 = vsel %vm739, %v707, %v771
          %v804 = vsel %vm740, %v708, %v772
          %v805 = vsel %vm741, %v709, %v773
          %v806 = vsel %vm742, %v710, %v774
          %vm807 = vcmask 60416
          %808 = vst.msk [vmem:[#allocation2] sm:$0xf] %vm807, 0
          %809 = vst.msk [vmem:[#allocation2 + $0x4] sm:$0xf] %vm807, 0
          %vm810 = vcmask 57344
          %811 = vst.msk [vmem:[#allocation2 + $0x8] sm:$0x1] %vm810, 0
          %s812 = scalar_lea.vmem [#allocation2], 204
          %813 = vst.msk [vmem:[%s812] sm:$0xf] %vm807, 0
          %814 = vst.msk [vmem:[%s812 + $0x4] sm:$0xf] %vm807, 0
          %815 = vst.msk [vmem:[%s812 + $0x8] sm:$0x1] %vm810, 0
          %s816 = scalar_lea.vmem [#allocation2], 12
          %vm817 = vcmask 57344
          %vm818 = vsmask.f32 256
          %vm819 = vmand %vm817, %vm818
          %v820 = vld [vmem:[%s816] sm:$0x1]
          %v821 = vsel %vm819, 0, %v820
          %822 = vst [vmem:[%s816] sm:$0x1] %v821
          %v823 = vld [vmem:[%s816 + $0xc] sm:$0x1]
          %v824 = vsel %vm819, 0, %v823
          %825 = vst [vmem:[%s816 + $0xc] sm:$0x1] %v824
          %v826 = vld [vmem:[%s816 + $0x18] sm:$0x1]
          %v827 = vsel %vm819, 0, %v826
          %828 = vst [vmem:[%s816 + $0x18] sm:$0x1] %v827
          %v829 = vld [vmem:[%s816 + $0x24] sm:$0x1]
          %v830 = vsel %vm819, 0, %v829
          %831 = vst [vmem:[%s816 + $0x24] sm:$0x1] %v830
          %v832 = vld [vmem:[%s816 + $0x30] sm:$0x1]
          %v833 = vsel %vm819, 0, %v832
          %834 = vst [vmem:[%s816 + $0x30] sm:$0x1] %v833
          %v835 = vld [vmem:[%s816 + $0x3c] sm:$0x1]
          %v836 = vsel %vm819, 0, %v835
          %837 = vst [vmem:[%s816 + $0x3c] sm:$0x1] %v836
          %v838 = vld [vmem:[%s816 + $0x48] sm:$0x1]
          %v839 = vsel %vm819, 0, %v838
          %840 = vst [vmem:[%s816 + $0x48] sm:$0x1] %v839
          %v841 = vld [vmem:[%s816 + $0x54] sm:$0x1]
          %v842 = vsel %vm819, 0, %v841
          %843 = vst [vmem:[%s816 + $0x54] sm:$0x1] %v842
          %v844 = vld [vmem:[%s816 + $0x60] sm:$0x1]
          %v845 = vsel %vm819, 0, %v844
          %846 = vst [vmem:[%s816 + $0x60] sm:$0x1] %v845
          %v847 = vld [vmem:[%s816 + $0x6c] sm:$0x1]
          %v848 = vsel %vm819, 0, %v847
          %849 = vst [vmem:[%s816 + $0x6c] sm:$0x1] %v848
          %v850 = vld [vmem:[%s816 + $0x78] sm:$0x1]
          %v851 = vsel %vm819, 0, %v850
          %852 = vst [vmem:[%s816 + $0x78] sm:$0x1] %v851
          %v853 = vld [vmem:[%s816 + $0x84] sm:$0x1]
          %v854 = vsel %vm819, 0, %v853
          %855 = vst [vmem:[%s816 + $0x84] sm:$0x1] %v854
          %v856 = vld [vmem:[%s816 + $0x90] sm:$0x1]
          %v857 = vsel %vm819, 0, %v856
          %858 = vst [vmem:[%s816 + $0x90] sm:$0x1] %v857
          %v859 = vld [vmem:[%s816 + $0x9c] sm:$0x1]
          %v860 = vsel %vm819, 0, %v859
          %861 = vst [vmem:[%s816 + $0x9c] sm:$0x1] %v860
          %v862 = vld [vmem:[%s816 + $0xa8] sm:$0x1]
          %v863 = vsel %vm819, 0, %v862
          %864 = vst [vmem:[%s816 + $0xa8] sm:$0x1] %v863
          %v865 = vld [vmem:[%s816 + $0xb4] sm:$0x1]
          %v866 = vsel %vm819, 0, %v865
          %867 = vst [vmem:[%s816 + $0xb4] sm:$0x1] %v866
          %vm868 = vsmask.f32 7938
          %vm869 = vmand %vm817, %vm868
          %v870 = vld [vmem:[%s816 + $0x8] sm:$0x1]
          %v871 = vsel %vm869, 0, %v870
          %872 = vst [vmem:[%s816 + $0x8] sm:$0x1] %v871
          %v873 = vld [vmem:[%s816 + $0x14] sm:$0x1]
          %v874 = vsel %vm869, 0, %v873
          %875 = vst [vmem:[%s816 + $0x14] sm:$0x1] %v874
          %v876 = vld [vmem:[%s816 + $0x20] sm:$0x1]
          %v877 = vsel %vm869, 0, %v876
          %878 = vst [vmem:[%s816 + $0x20] sm:$0x1] %v877
          %v879 = vld [vmem:[%s816 + $0x2c] sm:$0x1]
          %v880 = vsel %vm869, 0, %v879
          %881 = vst [vmem:[%s816 + $0x2c] sm:$0x1] %v880
          %v882 = vld [vmem:[%s816 + $0x38] sm:$0x1]
          %v883 = vsel %vm869, 0, %v882
          %884 = vst [vmem:[%s816 + $0x38] sm:$0x1] %v883
          %v885 = vld [vmem:[%s816 + $0x44] sm:$0x1]
          %v886 = vsel %vm869, 0, %v885
          %887 = vst [vmem:[%s816 + $0x44] sm:$0x1] %v886
          %v888 = vld [vmem:[%s816 + $0x50] sm:$0x1]
          %v889 = vsel %vm869, 0, %v888
          %890 = vst [vmem:[%s816 + $0x50] sm:$0x1] %v889
          %v891 = vld [vmem:[%s816 + $0x5c] sm:$0x1]
          %v892 = vsel %vm869, 0, %v891
          %893 = vst [vmem:[%s816 + $0x5c] sm:$0x1] %v892
          %v894 = vld [vmem:[%s816 + $0x68] sm:$0x1]
          %v895 = vsel %vm869, 0, %v894
          %896 = vst [vmem:[%s816 + $0x68] sm:$0x1] %v895
          %v897 = vld [vmem:[%s816 + $0x74] sm:$0x1]
          %v898 = vsel %vm869, 0, %v897
          %899 = vst [vmem:[%s816 + $0x74] sm:$0x1] %v898
          %v900 = vld [vmem:[%s816 + $0x80] sm:$0x1]
          %v901 = vsel %vm869, 0, %v900
          %902 = vst [vmem:[%s816 + $0x80] sm:$0x1] %v901
          %v903 = vld [vmem:[%s816 + $0x8c] sm:$0x1]
          %v904 = vsel %vm869, 0, %v903
          %905 = vst [vmem:[%s816 + $0x8c] sm:$0x1] %v904
          %v906 = vld [vmem:[%s816 + $0x98] sm:$0x1]
          %v907 = vsel %vm869, 0, %v906
          %908 = vst [vmem:[%s816 + $0x98] sm:$0x1] %v907
          %v909 = vld [vmem:[%s816 + $0xa4] sm:$0x1]
          %v910 = vsel %vm869, 0, %v909
          %911 = vst [vmem:[%s816 + $0xa4] sm:$0x1] %v910
          %v912 = vld [vmem:[%s816 + $0xb0] sm:$0x1]
          %v913 = vsel %vm869, 0, %v912
          %914 = vst [vmem:[%s816 + $0xb0] sm:$0x1] %v913
          %v915 = vld [vmem:[%s816 + $0xbc] sm:$0x1]
          %v916 = vsel %vm869, 0, %v915
          %917 = vst [vmem:[%s816 + $0xbc] sm:$0x1] %v916
          %v918 = vpack.c.bf16 %v775, %v775
          %v919 = vpack.c.bf16 %v776, %v776
          %v920 = vpack.c.bf16 %v777, %v777
          %v921 = vpack.c.bf16 %v778, %v778
          %v922 = vpack.c.bf16 %v779, %v779
          %v923 = vpack.c.bf16 %v780, %v780
          %v924 = vpack.c.bf16 %v781, %v781
          %v925 = vpack.c.bf16 %v782, %v782
          %v926 = vpack.c.bf16 %v783, %v783
          %v927 = vpack.c.bf16 %v784, %v784
          %v928 = vpack.c.bf16 %v785, %v785
          %v929 = vpack.c.bf16 %v786, %v786
          %v930 = vpack.c.bf16 %v787, %v787
          %v931 = vpack.c.bf16 %v788, %v788
          %v932 = vpack.c.bf16 %v789, %v789
          %v933 = vpack.c.bf16 %v790, %v790
          %v934 = vpack.c.bf16 %v791, %v791
          %v935 = vpack.c.bf16 %v792, %v792
          %v936 = vpack.c.bf16 %v793, %v793
          %v937 = vpack.c.bf16 %v794, %v794
          %v938 = vpack.c.bf16 %v795, %v795
          %v939 = vpack.c.bf16 %v796, %v796
          %v940 = vpack.c.bf16 %v797, %v797
          %v941 = vpack.c.bf16 %v798, %v798
          %v942 = vpack.c.bf16 %v799, %v799
          %v943 = vpack.c.bf16 %v800, %v800
          %v944 = vpack.c.bf16 %v801, %v801
          %v945 = vpack.c.bf16 %v802, %v802
          %v946 = vpack.c.bf16 %v803, %v803
          %v947 = vpack.c.bf16 %v804, %v804
          %v948 = vpack.c.bf16 %v805, %v805
          %v949 = vpack.c.bf16 %v806, %v806
          %vm950 = vsmask.f32 4368
          %vm951 = vmor %vm818, %vm950
          %v953 = vshrl.u32 %v918, 16
          %v955 = vrot.slane %v953, 7
          %v956 = vshll.u32 %v918, 16
          %v958 = vor.u32 %v955, %v956
          %v959 = vrot.slane %v955, 4
          %v961 = vshrl.u32 %v919, 16
          %v963 = vrot.slane %v961, 7
          %v964 = vshll.u32 %v919, 16
          %v966 = vor.u32 %v963, %v964
          %v967 = vsel %vm951, %v959, %v966
          %v968 = vrot.slane %v963, 4
          %v970 = vshrl.u32 %v920, 16
          %v972 = vrot.slane %v970, 7
          %v973 = vshll.u32 %v920, 16
          %v975 = vor.u32 %v972, %v973
          %v976 = vrot.slane %v972, 4
          %v978 = vshrl.u32 %v921, 16
          %v980 = vrot.slane %v978, 7
          %v981 = vshll.u32 %v921, 16
          %v983 = vor.u32 %v980, %v981
          %v984 = vsel %vm951, %v976, %v983
          %v985 = vrot.slane %v980, 4
          %v987 = vshrl.u32 %v922, 16
          %v989 = vrot.slane %v987, 7
          %v990 = vshll.u32 %v922, 16
          %v992 = vor.u32 %v989, %v990
          %v993 = vrot.slane %v989, 4
          %v995 = vshrl.u32 %v923, 16
          %v997 = vrot.slane %v995, 7
          %v998 = vshll.u32 %v923, 16
          %v1000 = vor.u32 %v997, %v998
          %v1001 = vsel %vm951, %v993, %v1000
          %v1002 = vrot.slane %v997, 4
          %v1004 = vshrl.u32 %v924, 16
          %v1006 = vrot.slane %v1004, 7
          %v1007 = vshll.u32 %v924, 16
          %v1009 = vor.u32 %v1006, %v1007
          %v1010 = vrot.slane %v1006, 4
          %v1012 = vshrl.u32 %v925, 16
          %v1014 = vrot.slane %v1012, 7
          %v1015 = vshll.u32 %v925, 16
          %v1017 = vor.u32 %v1014, %v1015
          %v1018 = vsel %vm951, %v1010, %v1017
          %v1019 = vrot.slane %v1014, 4
          %v1021 = vshrl.u32 %v926, 16
          %v1023 = vrot.slane %v1021, 7
          %v1024 = vshll.u32 %v926, 16
          %v1026 = vor.u32 %v1023, %v1024
          %v1027 = vrot.slane %v1023, 4
          %v1029 = vshrl.u32 %v927, 16
          %v1031 = vrot.slane %v1029, 7
          %v1032 = vshll.u32 %v927, 16
          %v1034 = vor.u32 %v1031, %v1032
          %v1035 = vsel %vm951, %v1027, %v1034
          %v1036 = vrot.slane %v1031, 4
          %v1038 = vshrl.u32 %v928, 16
          %v1040 = vrot.slane %v1038, 7
          %v1041 = vshll.u32 %v928, 16
          %v1043 = vor.u32 %v1040, %v1041
          %v1044 = vrot.slane %v1040, 4
          %v1046 = vshrl.u32 %v929, 16
          %v1048 = vrot.slane %v1046, 7
          %v1049 = vshll.u32 %v929, 16
          %v1051 = vor.u32 %v1048, %v1049
          %v1052 = vsel %vm951, %v1044, %v1051
          %v1053 = vrot.slane %v1048, 4
          %v1055 = vshrl.u32 %v930, 16
          %v1057 = vrot.slane %v1055, 7
          %v1058 = vshll.u32 %v930, 16
          %v1060 = vor.u32 %v1057, %v1058
          %v1061 = vrot.slane %v1057, 4
          %v1063 = vshrl.u32 %v931, 16
          %v1065 = vrot.slane %v1063, 7
          %v1066 = vshll.u32 %v931, 16
          %v1068 = vor.u32 %v1065, %v1066
          %v1069 = vsel %vm951, %v1061, %v1068
          %v1070 = vrot.slane %v1065, 4
          %v1072 = vshrl.u32 %v932, 16
          %v1074 = vrot.slane %v1072, 7
          %v1075 = vshll.u32 %v932, 16
          %v1077 = vor.u32 %v1074, %v1075
          %v1078 = vrot.slane %v1074, 4
          %v1080 = vshrl.u32 %v933, 16
          %v1082 = vrot.slane %v1080, 7
          %v1083 = vshll.u32 %v933, 16
          %v1085 = vor.u32 %v1082, %v1083
          %v1086 = vsel %vm951, %v1078, %v1085
          %v1087 = vrot.slane %v1082, 4
          %v1089 = vshrl.u32 %v934, 16
          %v1091 = vrot.slane %v1089, 7
          %v1092 = vshll.u32 %v934, 16
          %v1094 = vor.u32 %v1091, %v1092
          %v1095 = vrot.slane %v1091, 4
          %v1097 = vshrl.u32 %v935, 16
          %v1099 = vrot.slane %v1097, 7
          %v1100 = vshll.u32 %v935, 16
          %v1102 = vor.u32 %v1099, %v1100
          %v1103 = vsel %vm951, %v1095, %v1102
          %v1104 = vrot.slane %v1099, 4
          %v1106 = vshrl.u32 %v936, 16
          %v1108 = vrot.slane %v1106, 7
          %v1109 = vshll.u32 %v936, 16
          %v1111 = vor.u32 %v1108, %v1109
          %v1112 = vrot.slane %v1108, 4
          %v1114 = vshrl.u32 %v937, 16
          %v1116 = vrot.slane %v1114, 7
          %v1117 = vshll.u32 %v937, 16
          %v1119 = vor.u32 %v1116, %v1117
          %v1120 = vsel %vm951, %v1112, %v1119
          %v1121 = vrot.slane %v1116, 4
          %v1123 = vshrl.u32 %v938, 16
          %v1125 = vrot.slane %v1123, 7
          %v1126 = vshll.u32 %v938, 16
          %v1128 = vor.u32 %v1125, %v1126
          %v1129 = vrot.slane %v1125, 4
          %v1131 = vshrl.u32 %v939, 16
          %v1133 = vrot.slane %v1131, 7
          %v1134 = vshll.u32 %v939, 16
          %v1136 = vor.u32 %v1133, %v1134
          %v1137 = vsel %vm951, %v1129, %v1136
          %v1138 = vrot.slane %v1133, 4
          %v1140 = vshrl.u32 %v940, 16
          %v1142 = vrot.slane %v1140, 7
          %v1143 = vshll.u32 %v940, 16
          %v1145 = vor.u32 %v1142, %v1143
          %v1146 = vrot.slane %v1142, 4
          %v1148 = vshrl.u32 %v941, 16
          %v1150 = vrot.slane %v1148, 7
          %v1151 = vshll.u32 %v941, 16
          %v1153 = vor.u32 %v1150, %v1151
          %v1154 = vsel %vm951, %v1146, %v1153
          %v1155 = vrot.slane %v1150, 4
          %v1157 = vshrl.u32 %v942, 16
          %v1159 = vrot.slane %v1157, 7
          %v1160 = vshll.u32 %v942, 16
          %v1162 = vor.u32 %v1159, %v1160
          %v1163 = vrot.slane %v1159, 4
          %v1165 = vshrl.u32 %v943, 16
          %v1167 = vrot.slane %v1165, 7
          %v1168 = vshll.u32 %v943, 16
          %v1170 = vor.u32 %v1167, %v1168
          %v1171 = vsel %vm951, %v1163, %v1170
          %v1172 = vrot.slane %v1167, 4
          %v1174 = vshrl.u32 %v944, 16
          %v1176 = vrot.slane %v1174, 7
          %v1177 = vshll.u32 %v944, 16
          %v1179 = vor.u32 %v1176, %v1177
          %v1180 = vrot.slane %v1176, 4
          %v1182 = vshrl.u32 %v945, 16
          %v1184 = vrot.slane %v1182, 7
          %v1185 = vshll.u32 %v945, 16
          %v1187 = vor.u32 %v1184, %v1185
          %v1188 = vsel %vm951, %v1180, %v1187
          %v1189 = vrot.slane %v1184, 4
          %v1191 = vshrl.u32 %v946, 16
          %v1193 = vrot.slane %v1191, 7
          %v1194 = vshll.u32 %v946, 16
          %v1196 = vor.u32 %v1193, %v1194
          %v1197 = vrot.slane %v1193, 4
          %v1199 = vshrl.u32 %v947, 16
          %v1201 = vrot.slane %v1199, 7
          %v1202 = vshll.u32 %v947, 16
          %v1204 = vor.u32 %v1201, %v1202
          %v1205 = vsel %vm951, %v1197, %v1204
          %v1206 = vrot.slane %v1201, 4
          %v1208 = vshrl.u32 %v948, 16
          %v1210 = vrot.slane %v1208, 7
          %v1211 = vshll.u32 %v948, 16
          %v1213 = vor.u32 %v1210, %v1211
          %v1214 = vrot.slane %v1210, 4
          %v1216 = vshrl.u32 %v949, 16
          %v1218 = vrot.slane %v1216, 7
          %v1219 = vshll.u32 %v949, 16
          %v1221 = vor.u32 %v1218, %v1219
          %v1222 = vsel %vm951, %v1214, %v1221
          %v1223 = vrot.slane %v1218, 4
          %vm1272 = vcmask 60416
          %vm1273 = vmand %vm1272, %vm868
          %v1274 = vld [vmem:[%s816] sm:$0xf]
          %v1275 = vsel %vm1273, %v958, %v1274
          %1276 = vst [vmem:[%s816] sm:$0xf] %v1275
          %1277 = vst.msk [vmem:[%s816 + $0x4] sm:$0xf] %vm807, %v967
          %v1278 = vld [vmem:[%s816 + $0x8] sm:$0x1]
          %v1279 = vsel %vm819, %v968, %v1278
          %1280 = vst [vmem:[%s816 + $0x8] sm:$0x1] %v1279
          %v1281 = vld [vmem:[%s816 + $0xc] sm:$0xf]
          %v1282 = vsel %vm1273, %v975, %v1281
          %1283 = vst [vmem:[%s816 + $0xc] sm:$0xf] %v1282
          %1284 = vst.msk [vmem:[%s816 + $0x10] sm:$0xf] %vm807, %v984
          %v1285 = vld [vmem:[%s816 + $0x14] sm:$0x1]
          %v1286 = vsel %vm819, %v985, %v1285
          %1287 = vst [vmem:[%s816 + $0x14] sm:$0x1] %v1286
          %v1288 = vld [vmem:[%s816 + $0x18] sm:$0xf]
          %v1289 = vsel %vm1273, %v992, %v1288
          %1290 = vst [vmem:[%s816 + $0x18] sm:$0xf] %v1289
          %1291 = vst.msk [vmem:[%s816 + $0x1c] sm:$0xf] %vm807, %v1001
          %v1292 = vld [vmem:[%s816 + $0x20] sm:$0x1]
          %v1293 = vsel %vm819, %v1002, %v1292
          %1294 = vst [vmem:[%s816 + $0x20] sm:$0x1] %v1293
          %v1295 = vld [vmem:[%s816 + $0x24] sm:$0xf]
          %v1296 = vsel %vm1273, %v1009, %v1295
          %1297 = vst [vmem:[%s816 + $0x24] sm:$0xf] %v1296
          %1298 = vst.msk [vmem:[%s816 + $0x28] sm:$0xf] %vm807, %v1018
          %v1299 = vld [vmem:[%s816 + $0x2c] sm:$0x1]
          %v1300 = vsel %vm819, %v1019, %v1299
          %1301 = vst [vmem:[%s816 + $0x2c] sm:$0x1] %v1300
          %v1302 = vld [vmem:[%s816 + $0x30] sm:$0xf]
          %v1303 = vsel %vm1273, %v1026, %v1302
          %1304 = vst [vmem:[%s816 + $0x30] sm:$0xf] %v1303
          %1305 = vst.msk [vmem:[%s816 + $0x34] sm:$0xf] %vm807, %v1035
          %v1306 = vld [vmem:[%s816 + $0x38] sm:$0x1]
          %v1307 = vsel %vm819, %v1036, %v1306
          %1308 = vst [vmem:[%s816 + $0x38] sm:$0x1] %v1307
          %v1309 = vld [vmem:[%s816 + $0x3c] sm:$0xf]
          %v1310 = vsel %vm1273, %v1043, %v1309
          %1311 = vst [vmem:[%s816 + $0x3c] sm:$0xf] %v1310
          %1312 = vst.msk [vmem:[%s816 + $0x40] sm:$0xf] %vm807, %v1052
          %v1313 = vld [vmem:[%s816 + $0x44] sm:$0x1]
          %v1314 = vsel %vm819, %v1053, %v1313
          %1315 = vst [vmem:[%s816 + $0x44] sm:$0x1] %v1314
          %v1316 = vld [vmem:[%s816 + $0x48] sm:$0xf]
          %v1317 = vsel %vm1273, %v1060, %v1316
          %1318 = vst [vmem:[%s816 + $0x48] sm:$0xf] %v1317
          %1319 = vst.msk [vmem:[%s816 + $0x4c] sm:$0xf] %vm807, %v1069
          %v1320 = vld [vmem:[%s816 + $0x50] sm:$0x1]
          %v1321 = vsel %vm819, %v1070, %v1320
          %1322 = vst [vmem:[%s816 + $0x50] sm:$0x1] %v1321
          %v1323 = vld [vmem:[%s816 + $0x54] sm:$0xf]
          %v1324 = vsel %vm1273, %v1077, %v1323
          %1325 = vst [vmem:[%s816 + $0x54] sm:$0xf] %v1324
          %1326 = vst.msk [vmem:[%s816 + $0x58] sm:$0xf] %vm807, %v1086
          %v1327 = vld [vmem:[%s816 + $0x5c] sm:$0x1]
          %v1328 = vsel %vm819, %v1087, %v1327
          %1329 = vst [vmem:[%s816 + $0x5c] sm:$0x1] %v1328
          %v1330 = vld [vmem:[%s816 + $0x60] sm:$0xf]
          %v1331 = vsel %vm1273, %v1094, %v1330
          %1332 = vst [vmem:[%s816 + $0x60] sm:$0xf] %v1331
          %1333 = vst.msk [vmem:[%s816 + $0x64] sm:$0xf] %vm807, %v1103
          %v1334 = vld [vmem:[%s816 + $0x68] sm:$0x1]
          %v1335 = vsel %vm819, %v1104, %v1334
          %1336 = vst [vmem:[%s816 + $0x68] sm:$0x1] %v1335
          %v1337 = vld [vmem:[%s816 + $0x6c] sm:$0xf]
          %v1338 = vsel %vm1273, %v1111, %v1337
          %1339 = vst [vmem:[%s816 + $0x6c] sm:$0xf] %v1338
          %1340 = vst.msk [vmem:[%s816 + $0x70] sm:$0xf] %vm807, %v1120
          %v1341 = vld [vmem:[%s816 + $0x74] sm:$0x1]
          %v1342 = vsel %vm819, %v1121, %v1341
          %1343 = vst [vmem:[%s816 + $0x74] sm:$0x1] %v1342
          %v1344 = vld [vmem:[%s816 + $0x78] sm:$0xf]
          %v1345 = vsel %vm1273, %v1128, %v1344
          %1346 = vst [vmem:[%s816 + $0x78] sm:$0xf] %v1345
          %1347 = vst.msk [vmem:[%s816 + $0x7c] sm:$0xf] %vm807, %v1137
          %v1348 = vld [vmem:[%s816 + $0x80] sm:$0x1]
          %v1349 = vsel %vm819, %v1138, %v1348
          %1350 = vst [vmem:[%s816 + $0x80] sm:$0x1] %v1349
          %v1351 = vld [vmem:[%s816 + $0x84] sm:$0xf]
          %v1352 = vsel %vm1273, %v1145, %v1351
          %1353 = vst [vmem:[%s816 + $0x84] sm:$0xf] %v1352
          %1354 = vst.msk [vmem:[%s816 + $0x88] sm:$0xf] %vm807, %v1154
          %v1355 = vld [vmem:[%s816 + $0x8c] sm:$0x1]
          %v1356 = vsel %vm819, %v1155, %v1355
          %1357 = vst [vmem:[%s816 + $0x8c] sm:$0x1] %v1356
          %v1358 = vld [vmem:[%s816 + $0x90] sm:$0xf]
          %v1359 = vsel %vm1273, %v1162, %v1358
          %1360 = vst [vmem:[%s816 + $0x90] sm:$0xf] %v1359
          %1361 = vst.msk [vmem:[%s816 + $0x94] sm:$0xf] %vm807, %v1171
          %v1362 = vld [vmem:[%s816 + $0x98] sm:$0x1]
          %v1363 = vsel %vm819, %v1172, %v1362
          %1364 = vst [vmem:[%s816 + $0x98] sm:$0x1] %v1363
          %v1365 = vld [vmem:[%s816 + $0x9c] sm:$0xf]
          %v1366 = vsel %vm1273, %v1179, %v1365
          %1367 = vst [vmem:[%s816 + $0x9c] sm:$0xf] %v1366
          %1368 = vst.msk [vmem:[%s816 + $0xa0] sm:$0xf] %vm807, %v1188
          %v1369 = vld [vmem:[%s816 + $0xa4] sm:$0x1]
          %v1370 = vsel %vm819, %v1189, %v1369
          %1371 = vst [vmem:[%s816 + $0xa4] sm:$0x1] %v1370
          %v1372 = vld [vmem:[%s816 + $0xa8] sm:$0xf]
          %v1373 = vsel %vm1273, %v1196, %v1372
          %1374 = vst [vmem:[%s816 + $0xa8] sm:$0xf] %v1373
          %1375 = vst.msk [vmem:[%s816 + $0xac] sm:$0xf] %vm807, %v1205
          %v1376 = vld [vmem:[%s816 + $0xb0] sm:$0x1]
          %v1377 = vsel %vm819, %v1206, %v1376
          %1378 = vst [vmem:[%s816 + $0xb0] sm:$0x1] %v1377
          %v1379 = vld [vmem:[%s816 + $0xb4] sm:$0xf]
          %v1380 = vsel %vm1273, %v1213, %v1379
          %1381 = vst [vmem:[%s816 + $0xb4] sm:$0xf] %v1380
          %1382 = vst.msk [vmem:[%s816 + $0xb8] sm:$0xf] %vm807, %v1222
          %v1383 = vld [vmem:[%s816 + $0xbc] sm:$0x1]
          %v1384 = vsel %vm819, %v1223, %v1383
          %1385 = vst [vmem:[%s816 + $0xbc] sm:$0x1] %v1384
          %v1386 = vld [vmem:[#allocation2] sm:$0xf]
          %v1387 = vld [vmem:[#allocation2 + $0x4] sm:$0xf]
          %v1388 = vld [vmem:[#allocation2 + $0xc] sm:$0xf]
          %v1389 = vld [vmem:[#allocation2 + $0x10] sm:$0xf]
          %v1390 = vld [vmem:[#allocation2 + $0x18] sm:$0xf]
          %v1391 = vld [vmem:[#allocation2 + $0x1c] sm:$0xf]
          %v1392 = vld [vmem:[#allocation2 + $0x24] sm:$0xf]
          %v1393 = vld [vmem:[#allocation2 + $0x28] sm:$0xf]
          %v1394 = vld [vmem:[#allocation2 + $0x30] sm:$0xf]
          %v1395 = vld [vmem:[#allocation2 + $0x34] sm:$0xf]
          %v1396 = vld [vmem:[#allocation2 + $0x3c] sm:$0xf]
          %v1397 = vld [vmem:[#allocation2 + $0x40] sm:$0xf]
          %v1398 = vld [vmem:[#allocation2 + $0x48] sm:$0xf]
          %v1399 = vld [vmem:[#allocation2 + $0x4c] sm:$0xf]
          %v1400 = vld [vmem:[#allocation2 + $0x54] sm:$0xf]
          %v1401 = vld [vmem:[#allocation2 + $0x58] sm:$0xf]
          %v1402 = vld [vmem:[#allocation2 + $0x60] sm:$0xf]
          %v1403 = vld [vmem:[#allocation2 + $0x64] sm:$0xf]
          %v1404 = vld [vmem:[#allocation2 + $0x6c] sm:$0xf]
          %v1405 = vld [vmem:[#allocation2 + $0x70] sm:$0xf]
          %v1406 = vld [vmem:[#allocation2 + $0x78] sm:$0xf]
          %v1407 = vld [vmem:[#allocation2 + $0x7c] sm:$0xf]
          %v1408 = vld [vmem:[#allocation2 + $0x84] sm:$0xf]
          %v1409 = vld [vmem:[#allocation2 + $0x88] sm:$0xf]
          %v1410 = vld [vmem:[#allocation2 + $0x90] sm:$0xf]
          %v1411 = vld [vmem:[#allocation2 + $0x94] sm:$0xf]
          %v1412 = vld [vmem:[#allocation2 + $0x9c] sm:$0xf]
          %v1413 = vld [vmem:[#allocation2 + $0xa0] sm:$0xf]
          %v1414 = vld [vmem:[#allocation2 + $0xa8] sm:$0xf]
          %v1415 = vld [vmem:[#allocation2 + $0xac] sm:$0xf]
          %v1416 = vld [vmem:[#allocation2 + $0xb4] sm:$0xf]
          %v1417 = vld [vmem:[#allocation2 + $0xb8] sm:$0xf]
          %1418 = vst.msk [vmem:[#allocation3] sm:$0xf] %vm807, %v1386
          %1419 = vst.msk [vmem:[#allocation3 + $0x4] sm:$0xf] %vm807, %v1387
          %1420 = vst.msk [vmem:[#allocation3 + $0x8] sm:$0xf] %vm807, %v1388
          %1421 = vst.msk [vmem:[#allocation3 + $0xc] sm:$0xf] %vm807, %v1389
          %1422 = vst.msk [vmem:[#allocation3 + $0x10] sm:$0xf] %vm807, %v1390
          %1423 = vst.msk [vmem:[#allocation3 + $0x14] sm:$0xf] %vm807, %v1391
          %1424 = vst.msk [vmem:[#allocation3 + $0x18] sm:$0xf] %vm807, %v1392
          %1425 = vst.msk [vmem:[#allocation3 + $0x1c] sm:$0xf] %vm807, %v1393
          %1426 = vst.msk [vmem:[#allocation3 + $0x20] sm:$0xf] %vm807, %v1394
          %1427 = vst.msk [vmem:[#allocation3 + $0x24] sm:$0xf] %vm807, %v1395
          %1428 = vst.msk [vmem:[#allocation3 + $0x28] sm:$0xf] %vm807, %v1396
          %1429 = vst.msk [vmem:[#allocation3 + $0x2c] sm:$0xf] %vm807, %v1397
          %1430 = vst.msk [vmem:[#allocation3 + $0x30] sm:$0xf] %vm807, %v1398
          %1431 = vst.msk [vmem:[#allocation3 + $0x34] sm:$0xf] %vm807, %v1399
          %1432 = vst.msk [vmem:[#allocation3 + $0x38] sm:$0xf] %vm807, %v1400
          %1433 = vst.msk [vmem:[#allocation3 + $0x3c] sm:$0xf] %vm807, %v1401
          %1434 = vst.msk [vmem:[#allocation3 + $0x40] sm:$0xf] %vm807, %v1402
          %1435 = vst.msk [vmem:[#allocation3 + $0x44] sm:$0xf] %vm807, %v1403
          %1436 = vst.msk [vmem:[#allocation3 + $0x48] sm:$0xf] %vm807, %v1404
          %1437 = vst.msk [vmem:[#allocation3 + $0x4c] sm:$0xf] %vm807, %v1405
          %1438 = vst.msk [vmem:[#allocation3 + $0x50] sm:$0xf] %vm807, %v1406
          %1439 = vst.msk [vmem:[#allocation3 + $0x54] sm:$0xf] %vm807, %v1407
          %1440 = vst.msk [vmem:[#allocation3 + $0x58] sm:$0xf] %vm807, %v1408
          %1441 = vst.msk [vmem:[#allocation3 + $0x5c] sm:$0xf] %vm807, %v1409
          %1442 = vst.msk [vmem:[#allocation3 + $0x60] sm:$0xf] %vm807, %v1410
          %1443 = vst.msk [vmem:[#allocation3 + $0x64] sm:$0xf] %vm807, %v1411
          %1444 = vst.msk [vmem:[#allocation3 + $0x68] sm:$0xf] %vm807, %v1412
          %1445 = vst.msk [vmem:[#allocation3 + $0x6c] sm:$0xf] %vm807, %v1413
          %1446 = vst.msk [vmem:[#allocation3 + $0x70] sm:$0xf] %vm807, %v1414
          %1447 = vst.msk [vmem:[#allocation3 + $0x74] sm:$0xf] %vm807, %v1415
          %1448 = vst.msk [vmem:[#allocation3 + $0x78] sm:$0xf] %vm807, %v1416
          %1449 = vst.msk [vmem:[#allocation3 + $0x7c] sm:$0xf] %vm807, %v1417
          %v1450 = vld [vmem:[#allocation2] sm:$0xf]
          %v1451 = vld [vmem:[#allocation2 + $0x4] sm:$0xf]
          %v1452 = vld [vmem:[#allocation2 + $0x8] sm:$0x1]
          %v1453 = vld [vmem:[#allocation2 + $0xc] sm:$0xf]
          %v1454 = vld [vmem:[#allocation2 + $0x10] sm:$0xf]
          %v1455 = vld [vmem:[#allocation2 + $0x14] sm:$0x1]
          %v1456 = vld [vmem:[#allocation2 + $0x18] sm:$0xf]
          %v1457 = vld [vmem:[#allocation2 + $0x1c] sm:$0xf]
          %v1458 = vld [vmem:[#allocation2 + $0x20] sm:$0x1]
          %v1459 = vld [vmem:[#allocation2 + $0x24] sm:$0xf]
          %v1460 = vld [vmem:[#allocation2 + $0x28] sm:$0xf]
          %v1461 = vld [vmem:[#allocation2 + $0x2c] sm:$0x1]
          %v1462 = vld [vmem:[#allocation2 + $0x30] sm:$0xf]
          %v1463 = vld [vmem:[#allocation2 + $0x34] sm:$0xf]
          %v1464 = vld [vmem:[#allocation2 + $0x38] sm:$0x1]
          %v1465 = vld [vmem:[#allocation2 + $0x3c] sm:$0xf]
          %v1466 = vld [vmem:[#allocation2 + $0x40] sm:$0xf]
          %v1467 = vld [vmem:[#allocation2 + $0x44] sm:$0x1]
          %v1468 = vld [vmem:[#allocation2 + $0x48] sm:$0xf]
          %v1469 = vld [vmem:[#allocation2 + $0x4c] sm:$0xf]
          %v1470 = vld [vmem:[#allocation2 + $0x50] sm:$0x1]
          %v1471 = vld [vmem:[#allocation2 + $0x54] sm:$0xf]
          %v1472 = vld [vmem:[#allocation2 + $0x58] sm:$0xf]
          %v1473 = vld [vmem:[#allocation2 + $0x5c] sm:$0x1]
          %v1474 = vld [vmem:[#allocation2 + $0x60] sm:$0xf]
          %v1475 = vld [vmem:[#allocation2 + $0x64] sm:$0xf]
          %v1476 = vld [vmem:[#allocation2 + $0x68] sm:$0x1]
          %v1477 = vld [vmem:[#allocation2 + $0x6c] sm:$0xf]
          %v1478 = vld [vmem:[#allocation2 + $0x70] sm:$0xf]
          %v1479 = vld [vmem:[#allocation2 + $0x74] sm:$0x1]
          %v1480 = vld [vmem:[#allocation2 + $0x78] sm:$0xf]
          %v1481 = vld [vmem:[#allocation2 + $0x7c] sm:$0xf]
          %v1482 = vld [vmem:[#allocation2 + $0x80] sm:$0x1]
          %v1483 = vld [vmem:[#allocation2 + $0x84] sm:$0xf]
          %v1484 = vld [vmem:[#allocation2 + $0x88] sm:$0xf]
          %v1485 = vld [vmem:[#allocation2 + $0x8c] sm:$0x1]
          %v1486 = vld [vmem:[#allocation2 + $0x90] sm:$0xf]
          %v1487 = vld [vmem:[#allocation2 + $0x94] sm:$0xf]
          %v1488 = vld [vmem:[#allocation2 + $0x98] sm:$0x1]
          %v1489 = vld [vmem:[#allocation2 + $0x9c] sm:$0xf]
          %v1490 = vld [vmem:[#allocation2 + $0xa0] sm:$0xf]
          %v1491 = vld [vmem:[#allocation2 + $0xa4] sm:$0x1]
          %v1492 = vld [vmem:[#allocation2 + $0xa8] sm:$0xf]
          %v1493 = vld [vmem:[#allocation2 + $0xac] sm:$0xf]
          %v1494 = vld [vmem:[#allocation2 + $0xb0] sm:$0x1]
          %v1495 = vld [vmem:[#allocation2 + $0xb4] sm:$0xf]
          %v1496 = vld [vmem:[#allocation2 + $0xb8] sm:$0xf]
          %v1497 = vld [vmem:[#allocation2 + $0xbc] sm:$0x1]
          %vm1498 = vsmask.f32 3328
          %vm1499 = vsmask.f32 7440
          %vm1500 = vmor %vm1498, %vm1499
          %v1502 = vshrl.u32 %v1450, 16
          %v1504 = vrot.slane %v1502, 4
          %v1505 = vshll.u32 %v1450, 16
          %v1507 = vrot.slane %v1505, 5
          %v1508 = vor.u32 %v1504, %v1507
          %v1509 = vrot.slane %v1508, 4
          %v1511 = vshll.u32 %v1451, 16
          %v1513 = vrot.slane %v1511, 5
          %v1514 = vsel %vm1500, %v1509, %v1513
          %v1515 = vshrl.u32 %v1451, 16
          %v1517 = vrot.slane %v1515, 4
          %v1518 = vor.u32 %v1517, %v1513
          %v1519 = vrot.slane %v1518, 4
          %v1521 = vshll.u32 %v1452, 16
          %v1523 = vrot.slane %v1521, 5
          %v1524 = vsel %vm1500, %v1519, %v1523
          %v1526 = vshrl.u32 %v1453, 16
          %v1528 = vrot.slane %v1526, 4
          %v1529 = vshll.u32 %v1453, 16
          %v1531 = vrot.slane %v1529, 5
          %v1532 = vor.u32 %v1528, %v1531
          %v1533 = vrot.slane %v1532, 4
          %v1535 = vshll.u32 %v1454, 16
          %v1537 = vrot.slane %v1535, 5
          %v1538 = vsel %vm1500, %v1533, %v1537
          %v1539 = vshrl.u32 %v1454, 16
          %v1541 = vrot.slane %v1539, 4
          %v1542 = vor.u32 %v1541, %v1537
          %v1543 = vrot.slane %v1542, 4
          %v1545 = vshll.u32 %v1455, 16
          %v1547 = vrot.slane %v1545, 5
          %v1548 = vsel %vm1500, %v1543, %v1547
          %v1550 = vshrl.u32 %v1456, 16
          %v1552 = vrot.slane %v1550, 4
          %v1553 = vshll.u32 %v1456, 16
          %v1555 = vrot.slane %v1553, 5
          %v1556 = vor.u32 %v1552, %v1555
          %v1557 = vrot.slane %v1556, 4
          %v1559 = vshll.u32 %v1457, 16
          %v1561 = vrot.slane %v1559, 5
          %v1562 = vsel %vm1500, %v1557, %v1561
          %v1563 = vshrl.u32 %v1457, 16
          %v1565 = vrot.slane %v1563, 4
          %v1566 = vor.u32 %v1565, %v1561
          %v1567 = vrot.slane %v1566, 4
          %v1569 = vshll.u32 %v1458, 16
          %v1571 = vrot.slane %v1569, 5
          %v1572 = vsel %vm1500, %v1567, %v1571
          %v1574 = vshrl.u32 %v1459, 16
          %v1576 = vrot.slane %v1574, 4
          %v1577 = vshll.u32 %v1459, 16
          %v1579 = vrot.slane %v1577, 5
          %v1580 = vor.u32 %v1576, %v1579
          %v1581 = vrot.slane %v1580, 4
          %v1583 = vshll.u32 %v1460, 16
          %v1585 = vrot.slane %v1583, 5
          %v1586 = vsel %vm1500, %v1581, %v1585
          %v1587 = vshrl.u32 %v1460, 16
          %v1589 = vrot.slane %v1587, 4
          %v1590 = vor.u32 %v1589, %v1585
          %v1591 = vrot.slane %v1590, 4
          %v1593 = vshll.u32 %v1461, 16
          %v1595 = vrot.slane %v1593, 5
          %v1596 = vsel %vm1500, %v1591, %v1595
          %v1598 = vshrl.u32 %v1462, 16
          %v1600 = vrot.slane %v1598, 4
          %v1601 = vshll.u32 %v1462, 16
          %v1603 = vrot.slane %v1601, 5
          %v1604 = vor.u32 %v1600, %v1603
          %v1605 = vrot.slane %v1604, 4
          %v1607 = vshll.u32 %v1463, 16
          %v1609 = vrot.slane %v1607, 5
          %v1610 = vsel %vm1500, %v1605, %v1609
          %v1611 = vshrl.u32 %v1463, 16
          %v1613 = vrot.slane %v1611, 4
          %v1614 = vor.u32 %v1613, %v1609
          %v1615 = vrot.slane %v1614, 4
          %v1617 = vshll.u32 %v1464, 16
          %v1619 = vrot.slane %v1617, 5
          %v1620 = vsel %vm1500, %v1615, %v1619
          %v1622 = vshrl.u32 %v1465, 16
          %v1624 = vrot.slane %v1622, 4
          %v1625 = vshll.u32 %v1465, 16
          %v1627 = vrot.slane %v1625, 5
          %v1628 = vor.u32 %v1624, %v1627
          %v1629 = vrot.slane %v1628, 4
          %v1631 = vshll.u32 %v1466, 16
          %v1633 = vrot.slane %v1631, 5
          %v1634 = vsel %vm1500, %v1629, %v1633
          %v1635 = vshrl.u32 %v1466, 16
          %v1637 = vrot.slane %v1635, 4
          %v1638 = vor.u32 %v1637, %v1633
          %v1639 = vrot.slane %v1638, 4
          %v1641 = vshll.u32 %v1467, 16
          %v1643 = vrot.slane %v1641, 5
          %v1644 = vsel %vm1500, %v1639, %v1643
          %v1646 = vshrl.u32 %v1468, 16
          %v1648 = vrot.slane %v1646, 4
          %v1649 = vshll.u32 %v1468, 16
          %v1651 = vrot.slane %v1649, 5
          %v1652 = vor.u32 %v1648, %v1651
          %v1653 = vrot.slane %v1652, 4
          %v1655 = vshll.u32 %v1469, 16
          %v1657 = vrot.slane %v1655, 5
          %v1658 = vsel %vm1500, %v1653, %v1657
          %v1659 = vshrl.u32 %v1469, 16
          %v1661 = vrot.slane %v1659, 4
          %v1662 = vor.u32 %v1661, %v1657
          %v1663 = vrot.slane %v1662, 4
          %v1665 = vshll.u32 %v1470, 16
          %v1667 = vrot.slane %v1665, 5
          %v1668 = vsel %vm1500, %v1663, %v1667
          %v1670 = vshrl.u32 %v1471, 16
          %v1672 = vrot.slane %v1670, 4
          %v1673 = vshll.u32 %v1471, 16
          %v1675 = vrot.slane %v1673, 5
          %v1676 = vor.u32 %v1672, %v1675
          %v1677 = vrot.slane %v1676, 4
          %v1679 = vshll.u32 %v1472, 16
          %v1681 = vrot.slane %v1679, 5
          %v1682 = vsel %vm1500, %v1677, %v1681
          %v1683 = vshrl.u32 %v1472, 16
          %v1685 = vrot.slane %v1683, 4
          %v1686 = vor.u32 %v1685, %v1681
          %v1687 = vrot.slane %v1686, 4
          %v1689 = vshll.u32 %v1473, 16
          %v1691 = vrot.slane %v1689, 5
          %v1692 = vsel %vm1500, %v1687, %v1691
          %v1694 = vshrl.u32 %v1474, 16
          %v1696 = vrot.slane %v1694, 4
          %v1697 = vshll.u32 %v1474, 16
          %v1699 = vrot.slane %v1697, 5
          %v1700 = vor.u32 %v1696, %v1699
          %v1701 = vrot.slane %v1700, 4
          %v1703 = vshll.u32 %v1475, 16
          %v1705 = vrot.slane %v1703, 5
          %v1706 = vsel %vm1500, %v1701, %v1705
          %v1707 = vshrl.u32 %v1475, 16
          %v1709 = vrot.slane %v1707, 4
          %v1710 = vor.u32 %v1709, %v1705
          %v1711 = vrot.slane %v1710, 4
          %v1713 = vshll.u32 %v1476, 16
          %v1715 = vrot.slane %v1713, 5
          %v1716 = vsel %vm1500, %v1711, %v1715
          %v1718 = vshrl.u32 %v1477, 16
          %v1720 = vrot.slane %v1718, 4
          %v1721 = vshll.u32 %v1477, 16
          %v1723 = vrot.slane %v1721, 5
          %v1724 = vor.u32 %v1720, %v1723
          %v1725 = vrot.slane %v1724, 4
          %v1727 = vshll.u32 %v1478, 16
          %v1729 = vrot.slane %v1727, 5
          %v1730 = vsel %vm1500, %v1725, %v1729
          %v1731 = vshrl.u32 %v1478, 16
          %v1733 = vrot.slane %v1731, 4
          %v1734 = vor.u32 %v1733, %v1729
          %v1735 = vrot.slane %v1734, 4
          %v1737 = vshll.u32 %v1479, 16
          %v1739 = vrot.slane %v1737, 5
          %v1740 = vsel %vm1500, %v1735, %v1739
          %v1742 = vshrl.u32 %v1480, 16
          %v1744 = vrot.slane %v1742, 4
          %v1745 = vshll.u32 %v1480, 16
          %v1747 = vrot.slane %v1745, 5
          %v1748 = vor.u32 %v1744, %v1747
          %v1749 = vrot.slane %v1748, 4
          %v1751 = vshll.u32 %v1481, 16
          %v1753 = vrot.slane %v1751, 5
          %v1754 = vsel %vm1500, %v1749, %v1753
          %v1755 = vshrl.u32 %v1481, 16
          %v1757 = vrot.slane %v1755, 4
          %v1758 = vor.u32 %v1757, %v1753
          %v1759 = vrot.slane %v1758, 4
          %v1761 = vshll.u32 %v1482, 16
          %v1763 = vrot.slane %v1761, 5
          %v1764 = vsel %vm1500, %v1759, %v1763
          %v1766 = vshrl.u32 %v1483, 16
          %v1768 = vrot.slane %v1766, 4
          %v1769 = vshll.u32 %v1483, 16
          %v1771 = vrot.slane %v1769, 5
          %v1772 = vor.u32 %v1768, %v1771
          %v1773 = vrot.slane %v1772, 4
          %v1775 = vshll.u32 %v1484, 16
          %v1777 = vrot.slane %v1775, 5
          %v1778 = vsel %vm1500, %v1773, %v1777
          %v1779 = vshrl.u32 %v1484, 16
          %v1781 = vrot.slane %v1779, 4
          %v1782 = vor.u32 %v1781, %v1777
          %v1783 = vrot.slane %v1782, 4
          %v1785 = vshll.u32 %v1485, 16
          %v1787 = vrot.slane %v1785, 5
          %v1788 = vsel %vm1500, %v1783, %v1787
          %v1790 = vshrl.u32 %v1486, 16
          %v1792 = vrot.slane %v1790, 4
          %v1793 = vshll.u32 %v1486, 16
          %v1795 = vrot.slane %v1793, 5
          %v1796 = vor.u32 %v1792, %v1795
          %v1797 = vrot.slane %v1796, 4
          %v1799 = vshll.u32 %v1487, 16
          %v1801 = vrot.slane %v1799, 5
          %v1802 = vsel %vm1500, %v1797, %v1801
          %v1803 = vshrl.u32 %v1487, 16
          %v1805 = vrot.slane %v1803, 4
          %v1806 = vor.u32 %v1805, %v1801
          %v1807 = vrot.slane %v1806, 4
          %v1809 = vshll.u32 %v1488, 16
          %v1811 = vrot.slane %v1809, 5
          %v1812 = vsel %vm1500, %v1807, %v1811
          %v1814 = vshrl.u32 %v1489, 16
          %v1816 = vrot.slane %v1814, 4
          %v1817 = vshll.u32 %v1489, 16
          %v1819 = vrot.slane %v1817, 5
          %v1820 = vor.u32 %v1816, %v1819
          %v1821 = vrot.slane %v1820, 4
          %v1823 = vshll.u32 %v1490, 16
          %v1825 = vrot.slane %v1823, 5
          %v1826 = vsel %vm1500, %v1821, %v1825
          %v1827 = vshrl.u32 %v1490, 16
          %v1829 = vrot.slane %v1827, 4
          %v1830 = vor.u32 %v1829, %v1825
          %v1831 = vrot.slane %v1830, 4
          %v1833 = vshll.u32 %v1491, 16
          %v1835 = vrot.slane %v1833, 5
          %v1836 = vsel %vm1500, %v1831, %v1835
          %v1838 = vshrl.u32 %v1492, 16
          %v1840 = vrot.slane %v1838, 4
          %v1841 = vshll.u32 %v1492, 16
          %v1843 = vrot.slane %v1841, 5
          %v1844 = vor.u32 %v1840, %v1843
          %v1845 = vrot.slane %v1844, 4
          %v1847 = vshll.u32 %v1493, 16
          %v1849 = vrot.slane %v1847, 5
          %v1850 = vsel %vm1500, %v1845, %v1849
          %v1851 = vshrl.u32 %v1493, 16
          %v1853 = vrot.slane %v1851, 4
          %v1854 = vor.u32 %v1853, %v1849
          %v1855 = vrot.slane %v1854, 4
          %v1857 = vshll.u32 %v1494, 16
          %v1859 = vrot.slane %v1857, 5
          %v1860 = vsel %vm1500, %v1855, %v1859
          %v1862 = vshrl.u32 %v1495, 16
          %v1864 = vrot.slane %v1862, 4
          %v1865 = vshll.u32 %v1495, 16
          %v1867 = vrot.slane %v1865, 5
          %v1868 = vor.u32 %v1864, %v1867
          %v1869 = vrot.slane %v1868, 4
          %v1871 = vshll.u32 %v1496, 16
          %v1873 = vrot.slane %v1871, 5
          %v1874 = vsel %vm1500, %v1869, %v1873
          %v1875 = vshrl.u32 %v1496, 16
          %v1877 = vrot.slane %v1875, 4
          %v1878 = vor.u32 %v1877, %v1873
          %v1879 = vrot.slane %v1878, 4
          %v1881 = vshll.u32 %v1497, 16
          %v1883 = vrot.slane %v1881, 5
          %v1884 = vsel %vm1500, %v1879, %v1883
          %1885 = vrot.lane.b32.xlu0 %v1514, 8
          %v1886 = vpop.permute.xlu0 %1885
          %1887 = vrot.lane.b32.xlu0 %v1524, 8
          %v1888 = vpop.permute.xlu0 %1887
          %1889 = vrot.lane.b32.xlu0 %v1538, 8
          %v1890 = vpop.permute.xlu0 %1889
          %1891 = vrot.lane.b32.xlu0 %v1548, 8
          %v1892 = vpop.permute.xlu0 %1891
          %1893 = vrot.lane.b32.xlu0 %v1562, 8
          %v1894 = vpop.permute.xlu0 %1893
          %1895 = vrot.lane.b32.xlu0 %v1572, 8
          %v1896 = vpop.permute.xlu0 %1895
          %1897 = vrot.lane.b32.xlu0 %v1586, 8
          %v1898 = vpop.permute.xlu0 %1897
          %1899 = vrot.lane.b32.xlu0 %v1596, 8
          %v1900 = vpop.permute.xlu0 %1899
          %1901 = vrot.lane.b32.xlu0 %v1610, 8
          %v1902 = vpop.permute.xlu0 %1901
          %1903 = vrot.lane.b32.xlu0 %v1620, 8
          %v1904 = vpop.permute.xlu0 %1903
          %1905 = vrot.lane.b32.xlu0 %v1634, 8
          %v1906 = vpop.permute.xlu0 %1905
          %1907 = vrot.lane.b32.xlu0 %v1644, 8
          %v1908 = vpop.permute.xlu0 %1907
          %1909 = vrot.lane.b32.xlu0 %v1658, 8
          %v1910 = vpop.permute.xlu0 %1909
          %1911 = vrot.lane.b32.xlu0 %v1668, 8
          %v1912 = vpop.permute.xlu0 %1911
          %1913 = vrot.lane.b32.xlu0 %v1682, 8
          %v1914 = vpop.permute.xlu0 %1913
          %1915 = vrot.lane.b32.xlu0 %v1692, 8
          %v1916 = vpop.permute.xlu0 %1915
          %1917 = vrot.lane.b32.xlu0 %v1706, 8
          %v1918 = vpop.permute.xlu0 %1917
          %1919 = vrot.lane.b32.xlu0 %v1716, 8
          %v1920 = vpop.permute.xlu0 %1919
          %1921 = vrot.lane.b32.xlu0 %v1730, 8
          %v1922 = vpop.permute.xlu0 %1921
          %1923 = vrot.lane.b32.xlu0 %v1740, 8
          %v1924 = vpop.permute.xlu0 %1923
          %1925 = vrot.lane.b32.xlu0 %v1754, 8
          %v1926 = vpop.permute.xlu0 %1925
          %1927 = vrot.lane.b32.xlu0 %v1764, 8
          %v1928 = vpop.permute.xlu0 %1927
          %1929 = vrot.lane.b32.xlu0 %v1778, 8
          %v1930 = vpop.permute.xlu0 %1929
          %1931 = vrot.lane.b32.xlu0 %v1788, 8
          %v1932 = vpop.permute.xlu0 %1931
          %1933 = vrot.lane.b32.xlu0 %v1802, 8
          %v1934 = vpop.permute.xlu0 %1933
          %1935 = vrot.lane.b32.xlu0 %v1812, 8
          %v1936 = vpop.permute.xlu0 %1935
          %1937 = vrot.lane.b32.xlu0 %v1826, 8
          %v1938 = vpop.permute.xlu0 %1937
          %1939 = vrot.lane.b32.xlu0 %v1836, 8
          %v1940 = vpop.permute.xlu0 %1939
          %1941 = vrot.lane.b32.xlu0 %v1850, 8
          %v1942 = vpop.permute.xlu0 %1941
          %1943 = vrot.lane.b32.xlu0 %v1860, 8
          %v1944 = vpop.permute.xlu0 %1943
          %1945 = vrot.lane.b32.xlu0 %v1874, 8
          %v1946 = vpop.permute.xlu0 %1945
          %1947 = vrot.lane.b32.xlu0 %v1884, 8
          %v1948 = vpop.permute.xlu0 %1947
          %vm1981 = vcmask 126016
          %1982 = vst.msk [vmem:[#allocation3] sm:$0xf] %vm1981, %v1886
          %1983 = vst.msk [vmem:[#allocation3 + $0x4] sm:$0xf] %vm1981, %v1888
          %1984 = vst.msk [vmem:[#allocation3 + $0x8] sm:$0xf] %vm1981, %v1890
          %1985 = vst.msk [vmem:[#allocation3 + $0xc] sm:$0xf] %vm1981, %v1892
          %1986 = vst.msk [vmem:[#allocation3 + $0x10] sm:$0xf] %vm1981, %v1894
          %1987 = vst.msk [vmem:[#allocation3 + $0x14] sm:$0xf] %vm1981, %v1896
          %1988 = vst.msk [vmem:[#allocation3 + $0x18] sm:$0xf] %vm1981, %v1898
          %1989 = vst.msk [vmem:[#allocation3 + $0x1c] sm:$0xf] %vm1981, %v1900
          %1990 = vst.msk [vmem:[#allocation3 + $0x20] sm:$0xf] %vm1981, %v1902
          %1991 = vst.msk [vmem:[#allocation3 + $0x24] sm:$0xf] %vm1981, %v1904
          %1992 = vst.msk [vmem:[#allocation3 + $0x28] sm:$0xf] %vm1981, %v1906
          %1993 = vst.msk [vmem:[#allocation3 + $0x2c] sm:$0xf] %vm1981, %v1908
          %1994 = vst.msk [vmem:[#allocation3 + $0x30] sm:$0xf] %vm1981, %v1910
          %1995 = vst.msk [vmem:[#allocation3 + $0x34] sm:$0xf] %vm1981, %v1912
          %1996 = vst.msk [vmem:[#allocation3 + $0x38] sm:$0xf] %vm1981, %v1914
          %1997 = vst.msk [vmem:[#allocation3 + $0x3c] sm:$0xf] %vm1981, %v1916
          %1998 = vst.msk [vmem:[#allocation3 + $0x40] sm:$0xf] %vm1981, %v1918
          %1999 = vst.msk [vmem:[#allocation3 + $0x44] sm:$0xf] %vm1981, %v1920
          %2000 = vst.msk [vmem:[#allocation3 + $0x48] sm:$0xf] %vm1981, %v1922
          %2001 = vst.msk [vmem:[#allocation3 + $0x4c] sm:$0xf] %vm1981, %v1924
          %2002 = vst.msk [vmem:[#allocation3 + $0x50] sm:$0xf] %vm1981, %v1926
          %2003 = vst.msk [vmem:[#allocation3 + $0x54] sm:$0xf] %vm1981, %v1928
          %2004 = vst.msk [vmem:[#allocation3 + $0x58] sm:$0xf] %vm1981, %v1930
          %2005 = vst.msk [vmem:[#allocation3 + $0x5c] sm:$0xf] %vm1981, %v1932
          %2006 = vst.msk [vmem:[#allocation3 + $0x60] sm:$0xf] %vm1981, %v1934
          %2007 = vst.msk [vmem:[#allocation3 + $0x64] sm:$0xf] %vm1981, %v1936
          %2008 = vst.msk [vmem:[#allocation3 + $0x68] sm:$0xf] %vm1981, %v1938
          %2009 = vst.msk [vmem:[#allocation3 + $0x6c] sm:$0xf] %vm1981, %v1940
          %2010 = vst.msk [vmem:[#allocation3 + $0x70] sm:$0xf] %vm1981, %v1942
          %2011 = vst.msk [vmem:[#allocation3 + $0x74] sm:$0xf] %vm1981, %v1944
          %2012 = vst.msk [vmem:[#allocation3 + $0x78] sm:$0xf] %vm1981, %v1946
          %2013 = vst.msk [vmem:[#allocation3 + $0x7c] sm:$0xf] %vm1981, %v1948
          %v2014 = vld [vmem:[#allocation2] sm:$0xe]
          %v2015 = vld [vmem:[#allocation2 + $0x4] sm:$0xf]
          %v2016 = vld [vmem:[#allocation2 + $0x8] sm:$0x1]
          %v2017 = vld [vmem:[#allocation2 + $0xc] sm:$0xe]
          %v2018 = vld [vmem:[#allocation2 + $0x10] sm:$0xf]
          %v2019 = vld [vmem:[#allocation2 + $0x14] sm:$0x1]
          %v2020 = vld [vmem:[#allocation2 + $0x18] sm:$0xe]
          %v2021 = vld [vmem:[#allocation2 + $0x1c] sm:$0xf]
          %v2022 = vld [vmem:[#allocation2 + $0x20] sm:$0x1]
          %v2023 = vld [vmem:[#allocation2 + $0x24] sm:$0xe]
          %v2024 = vld [vmem:[#allocation2 + $0x28] sm:$0xf]
          %v2025 = vld [vmem:[#allocation2 + $0x2c] sm:$0x1]
          %v2026 = vld [vmem:[#allocation2 + $0x30] sm:$0xe]
          %v2027 = vld [vmem:[#allocation2 + $0x34] sm:$0xf]
          %v2028 = vld [vmem:[#allocation2 + $0x38] sm:$0x1]
          %v2029 = vld [vmem:[#allocation2 + $0x3c] sm:$0xe]
          %v2030 = vld [vmem:[#allocation2 + $0x40] sm:$0xf]
          %v2031 = vld [vmem:[#allocation2 + $0x44] sm:$0x1]
          %v2032 = vld [vmem:[#allocation2 + $0x48] sm:$0xe]
          %v2033 = vld [vmem:[#allocation2 + $0x4c] sm:$0xf]
          %v2034 = vld [vmem:[#allocation2 + $0x50] sm:$0x1]
          %v2035 = vld [vmem:[#allocation2 + $0x54] sm:$0xe]
          %v2036 = vld [vmem:[#allocation2 + $0x58] sm:$0xf]
          %v2037 = vld [vmem:[#allocation2 + $0x5c] sm:$0x1]
          %v2038 = vld [vmem:[#allocation2 + $0x60] sm:$0xe]
          %v2039 = vld [vmem:[#allocation2 + $0x64] sm:$0xf]
          %v2040 = vld [vmem:[#allocation2 + $0x68] sm:$0x1]
          %v2041 = vld [vmem:[#allocation2 + $0x6c] sm:$0xe]
          %v2042 = vld [vmem:[#allocation2 + $0x70] sm:$0xf]
          %v2043 = vld [vmem:[#allocation2 + $0x74] sm:$0x1]
          %v2044 = vld [vmem:[#allocation2 + $0x78] sm:$0xe]
          %v2045 = vld [vmem:[#allocation2 + $0x7c] sm:$0xf]
          %v2046 = vld [vmem:[#allocation2 + $0x80] sm:$0x1]
          %v2047 = vld [vmem:[#allocation2 + $0x84] sm:$0xe]
          %v2048 = vld [vmem:[#allocation2 + $0x88] sm:$0xf]
          %v2049 = vld [vmem:[#allocation2 + $0x8c] sm:$0x1]
          %v2050 = vld [vmem:[#allocation2 + $0x90] sm:$0xe]
          %v2051 = vld [vmem:[#allocation2 + $0x94] sm:$0xf]
          %v2052 = vld [vmem:[#allocation2 + $0x98] sm:$0x1]
          %v2053 = vld [vmem:[#allocation2 + $0x9c] sm:$0xe]
          %v2054 = vld [vmem:[#allocation2 + $0xa0] sm:$0xf]
          %v2055 = vld [vmem:[#allocation2 + $0xa4] sm:$0x1]
          %v2056 = vld [vmem:[#allocation2 + $0xa8] sm:$0xe]
          %v2057 = vld [vmem:[#allocation2 + $0xac] sm:$0xf]
          %v2058 = vld [vmem:[#allocation2 + $0xb0] sm:$0x1]
          %v2059 = vld [vmem:[#allocation2 + $0xb4] sm:$0xe]
          %v2060 = vld [vmem:[#allocation2 + $0xb8] sm:$0xf]
          %v2061 = vld [vmem:[#allocation2 + $0xbc] sm:$0x1]
          %vm2110 = vcmask 1042432
          %vm2111 = vcmask 1046532
          %vm2112 = vmor %vm2110, %vm2111
          %v2113 = vrot.slane %v2014, 5
          %v2114 = vrot.slane %v2113, 4
          %v2115 = vrot.slane %v2015, 5
          %v2116 = vsel %vm2112, %v2114, %v2115
          %v2117 = vrot.slane %v2115, 4
          %v2118 = vrot.slane %v2016, 5
          %v2119 = vsel %vm2112, %v2117, %v2118
          %v2120 = vrot.slane %v2017, 5
          %v2121 = vrot.slane %v2120, 4
          %v2122 = vrot.slane %v2018, 5
          %v2123 = vsel %vm2112, %v2121, %v2122
          %v2124 = vrot.slane %v2122, 4
          %v2125 = vrot.slane %v2019, 5
          %v2126 = vsel %vm2112, %v2124, %v2125
          %v2127 = vrot.slane %v2020, 5
          %v2128 = vrot.slane %v2127, 4
          %v2129 = vrot.slane %v2021, 5
          %v2130 = vsel %vm2112, %v2128, %v2129
          %v2131 = vrot.slane %v2129, 4
          %v2132 = vrot.slane %v2022, 5
          %v2133 = vsel %vm2112, %v2131, %v2132
          %v2134 = vrot.slane %v2023, 5
          %v2135 = vrot.slane %v2134, 4
          %v2136 = vrot.slane %v2024, 5
          %v2137 = vsel %vm2112, %v2135, %v2136
          %v2138 = vrot.slane %v2136, 4
          %v2139 = vrot.slane %v2025, 5
          %v2140 = vsel %vm2112, %v2138, %v2139
          %v2141 = vrot.slane %v2026, 5
          %v2142 = vrot.slane %v2141, 4
          %v2143 = vrot.slane %v2027, 5
          %v2144 = vsel %vm2112, %v2142, %v2143
          %v2145 = vrot.slane %v2143, 4
          %v2146 = vrot.slane %v2028, 5
          %v2147 = vsel %vm2112, %v2145, %v2146
          %v2148 = vrot.slane %v2029, 5
          %v2149 = vrot.slane %v2148, 4
          %v2150 = vrot.slane %v2030, 5
          %v2151 = vsel %vm2112, %v2149, %v2150
          %v2152 = vrot.slane %v2150, 4
          %v2153 = vrot.slane %v2031, 5
          %v2154 = vsel %vm2112, %v2152, %v2153
          %v2155 = vrot.slane %v2032, 5
          %v2156 = vrot.slane %v2155, 4
          %v2157 = vrot.slane %v2033, 5
          %v2158 = vsel %vm2112, %v2156, %v2157
          %v2159 = vrot.slane %v2157, 4
          %v2160 = vrot.slane %v2034, 5
          %v2161 = vsel %vm2112, %v2159, %v2160
          %v2162 = vrot.slane %v2035, 5
          %v2163 = vrot.slane %v2162, 4
          %v2164 = vrot.slane %v2036, 5
          %v2165 = vsel %vm2112, %v2163, %v2164
          %v2166 = vrot.slane %v2164, 4
          %v2167 = vrot.slane %v2037, 5
          %v2168 = vsel %vm2112, %v2166, %v2167
          %v2169 = vrot.slane %v2038, 5
          %v2170 = vrot.slane %v2169, 4
          %v2171 = vrot.slane %v2039, 5
          %v2172 = vsel %vm2112, %v2170, %v2171
          %v2173 = vrot.slane %v2171, 4
          %v2174 = vrot.slane %v2040, 5
          %v2175 = vsel %vm2112, %v2173, %v2174
          %v2176 = vrot.slane %v2041, 5
          %v2177 = vrot.slane %v2176, 4
          %v2178 = vrot.slane %v2042, 5
          %v2179 = vsel %vm2112, %v2177, %v2178
          %v2180 = vrot.slane %v2178, 4
          %v2181 = vrot.slane %v2043, 5
          %v2182 = vsel %vm2112, %v2180, %v2181
          %v2183 = vrot.slane %v2044, 5
          %v2184 = vrot.slane %v2183, 4
          %v2185 = vrot.slane %v2045, 5
          %v2186 = vsel %vm2112, %v2184, %v2185
          %v2187 = vrot.slane %v2185, 4
          %v2188 = vrot.slane %v2046, 5
          %v2189 = vsel %vm2112, %v2187, %v2188
          %v2190 = vrot.slane %v2047, 5
          %v2191 = vrot.slane %v2190, 4
          %v2192 = vrot.slane %v2048, 5
          %v2193 = vsel %vm2112, %v2191, %v2192
          %v2194 = vrot.slane %v2192, 4
          %v2195 = vrot.slane %v2049, 5
          %v2196 = vsel %vm2112, %v2194, %v2195
          %v2197 = vrot.slane %v2050, 5
          %v2198 = vrot.slane %v2197, 4
          %v2199 = vrot.slane %v2051, 5
          %v2200 = vsel %vm2112, %v2198, %v2199
          %v2201 = vrot.slane %v2199, 4
          %v2202 = vrot.slane %v2052, 5
          %v2203 = vsel %vm2112, %v2201, %v2202
          %v2204 = vrot.slane %v2053, 5
          %v2205 = vrot.slane %v2204, 4
          %v2206 = vrot.slane %v2054, 5
          %v2207 = vsel %vm2112, %v2205, %v2206
          %v2208 = vrot.slane %v2206, 4
          %v2209 = vrot.slane %v2055, 5
          %v2210 = vsel %vm2112, %v2208, %v2209
          %v2211 = vrot.slane %v2056, 5
          %v2212 = vrot.slane %v2211, 4
          %v2213 = vrot.slane %v2057, 5
          %v2214 = vsel %vm2112, %v2212, %v2213
          %v2215 = vrot.slane %v2213, 4
          %v2216 = vrot.slane %v2058, 5
          %v2217 = vsel %vm2112, %v2215, %v2216
          %v2218 = vrot.slane %v2059, 5
          %v2219 = vrot.slane %v2218, 4
          %v2220 = vrot.slane %v2060, 5
          %v2221 = vsel %vm2112, %v2219, %v2220
          %v2222 = vrot.slane %v2220, 4
          %v2223 = vrot.slane %v2061, 5
          %v2224 = vsel %vm2112, %v2222, %v2223
          %2225 = vrot.lane.b32.xlu0 %v2116, 16
          %v2226 = vpop.permute.xlu0 %2225
          %2227 = vrot.lane.b32.xlu0 %v2119, 16
          %v2228 = vpop.permute.xlu0 %2227
          %2229 = vrot.lane.b32.xlu0 %v2123, 16
          %v2230 = vpop.permute.xlu0 %2229
          %2231 = vrot.lane.b32.xlu0 %v2126, 16
          %v2232 = vpop.permute.xlu0 %2231
          %2233 = vrot.lane.b32.xlu0 %v2130, 16
          %v2234 = vpop.permute.xlu0 %2233
          %2235 = vrot.lane.b32.xlu0 %v2133, 16
          %v2236 = vpop.permute.xlu0 %2235
          %2237 = vrot.lane.b32.xlu0 %v2137, 16
          %v2238 = vpop.permute.xlu0 %2237
          %2239 = vrot.lane.b32.xlu0 %v2140, 16
          %v2240 = vpop.permute.xlu0 %2239
          %2241 = vrot.lane.b32.xlu0 %v2144, 16
          %v2242 = vpop.permute.xlu0 %2241
          %2243 = vrot.lane.b32.xlu0 %v2147, 16
          %v2244 = vpop.permute.xlu0 %2243
          %2245 = vrot.lane.b32.xlu0 %v2151, 16
          %v2246 = vpop.permute.xlu0 %2245
          %2247 = vrot.lane.b32.xlu0 %v2154, 16
          %v2248 = vpop.permute.xlu0 %2247
          %2249 = vrot.lane.b32.xlu0 %v2158, 16
          %v2250 = vpop.permute.xlu0 %2249
          %2251 = vrot.lane.b32.xlu0 %v2161, 16
          %v2252 = vpop.permute.xlu0 %2251
          %2253 = vrot.lane.b32.xlu0 %v2165, 16
          %v2254 = vpop.permute.xlu0 %2253
          %2255 = vrot.lane.b32.xlu0 %v2168, 16
          %v2256 = vpop.permute.xlu0 %2255
          %2257 = vrot.lane.b32.xlu0 %v2172, 16
          %v2258 = vpop.permute.xlu0 %2257
          %2259 = vrot.lane.b32.xlu0 %v2175, 16
          %v2260 = vpop.permute.xlu0 %2259
          %2261 = vrot.lane.b32.xlu0 %v2179, 16
          %v2262 = vpop.permute.xlu0 %2261
          %2263 = vrot.lane.b32.xlu0 %v2182, 16
          %v2264 = vpop.permute.xlu0 %2263
          %2265 = vrot.lane.b32.xlu0 %v2186, 16
          %v2266 = vpop.permute.xlu0 %2265
          %2267 = vrot.lane.b32.xlu0 %v2189, 16
          %v2268 = vpop.permute.xlu0 %2267
          %2269 = vrot.lane.b32.xlu0 %v2193, 16
          %v2270 = vpop.permute.xlu0 %2269
          %2271 = vrot.lane.b32.xlu0 %v2196, 16
          %v2272 = vpop.permute.xlu0 %2271
          %2273 = vrot.lane.b32.xlu0 %v2200, 16
          %v2274 = vpop.permute.xlu0 %2273
          %2275 = vrot.lane.b32.xlu0 %v2203, 16
          %v2276 = vpop.permute.xlu0 %2275
          %2277 = vrot.lane.b32.xlu0 %v2207, 16
          %v2278 = vpop.permute.xlu0 %2277
          %2279 = vrot.lane.b32.xlu0 %v2210, 16
          %v2280 = vpop.permute.xlu0 %2279
          %2281 = vrot.lane.b32.xlu0 %v2214, 16
          %v2282 = vpop.permute.xlu0 %2281
          %2283 = vrot.lane.b32.xlu0 %v2217, 16
          %v2284 = vpop.permute.xlu0 %2283
          %2285 = vrot.lane.b32.xlu0 %v2221, 16
          %v2286 = vpop.permute.xlu0 %2285
          %2287 = vrot.lane.b32.xlu0 %v2224, 16
          %v2288 = vpop.permute.xlu0 %2287
          %vm2321 = vcmask 191616
          %2322 = vst.msk [vmem:[#allocation3] sm:$0xf] %vm2321, %v2226
          %2323 = vst.msk [vmem:[#allocation3 + $0x4] sm:$0xf] %vm2321, %v2228
          %2324 = vst.msk [vmem:[#allocation3 + $0x8] sm:$0xf] %vm2321, %v2230
          %2325 = vst.msk [vmem:[#allocation3 + $0xc] sm:$0xf] %vm2321, %v2232
          %2326 = vst.msk [vmem:[#allocation3 + $0x10] sm:$0xf] %vm2321, %v2234
          %2327 = vst.msk [vmem:[#allocation3 + $0x14] sm:$0xf] %vm2321, %v2236
          %2328 = vst.msk [vmem:[#allocation3 + $0x18] sm:$0xf] %vm2321, %v2238
          %2329 = vst.msk [vmem:[#allocation3 + $0x1c] sm:$0xf] %vm2321, %v2240
          %2330 = vst.msk [vmem:[#allocation3 + $0x20] sm:$0xf] %vm2321, %v2242
          %2331 = vst.msk [vmem:[#allocation3 + $0x24] sm:$0xf] %vm2321, %v2244
          %2332 = vst.msk [vmem:[#allocation3 + $0x28] sm:$0xf] %vm2321, %v2246
          %2333 = vst.msk [vmem:[#allocation3 + $0x2c] sm:$0xf] %vm2321, %v2248
          %2334 = vst.msk [vmem:[#allocation3 + $0x30] sm:$0xf] %vm2321, %v2250
          %2335 = vst.msk [vmem:[#allocation3 + $0x34] sm:$0xf] %vm2321, %v2252
          %2336 = vst.msk [vmem:[#allocation3 + $0x38] sm:$0xf] %vm2321, %v2254
          %2337 = vst.msk [vmem:[#allocation3 + $0x3c] sm:$0xf] %vm2321, %v2256
          %2338 = vst.msk [vmem:[#allocation3 + $0x40] sm:$0xf] %vm2321, %v2258
          %2339 = vst.msk [vmem:[#allocation3 + $0x44] sm:$0xf] %vm2321, %v2260
          %2340 = vst.msk [vmem:[#allocation3 + $0x48] sm:$0xf] %vm2321, %v2262
          %2341 = vst.msk [vmem:[#allocation3 + $0x4c] sm:$0xf] %vm2321, %v2264
          %2342 = vst.msk [vmem:[#allocation3 + $0x50] sm:$0xf] %vm2321, %v2266
          %2343 = vst.msk [vmem:[#allocation3 + $0x54] sm:$0xf] %vm2321, %v2268
          %2344 = vst.msk [vmem:[#allocation3 + $0x58] sm:$0xf] %vm2321, %v2270
          %2345 = vst.msk [vmem:[#allocation3 + $0x5c] sm:$0xf] %vm2321, %v2272
          %2346 = vst.msk [vmem:[#allocation3 + $0x60] sm:$0xf] %vm2321, %v2274
          %2347 = vst.msk [vmem:[#allocation3 + $0x64] sm:$0xf] %vm2321, %v2276
          %2348 = vst.msk [vmem:[#allocation3 + $0x68] sm:$0xf] %vm2321, %v2278
          %2349 = vst.msk [vmem:[#allocation3 + $0x6c] sm:$0xf] %vm2321, %v2280
          %2350 = vst.msk [vmem:[#allocation3 + $0x70] sm:$0xf] %vm2321, %v2282
          %2351 = vst.msk [vmem:[#allocation3 + $0x74] sm:$0xf] %vm2321, %v2284
          %2352 = vst.msk [vmem:[#allocation3 + $0x78] sm:$0xf] %vm2321, %v2286
          %2353 = vst.msk [vmem:[#allocation3 + $0x7c] sm:$0xf] %vm2321, %v2288
          %v2354 = vld [vmem:[%s816] sm:$0xf]
          %v2355 = vld [vmem:[%s816 + $0x4] sm:$0xf]
          %v2356 = vld [vmem:[%s816 + $0xc] sm:$0xf]
          %v2357 = vld [vmem:[%s816 + $0x10] sm:$0xf]
          %v2358 = vld [vmem:[%s816 + $0x18] sm:$0xf]
          %v2359 = vld [vmem:[%s816 + $0x1c] sm:$0xf]
          %v2360 = vld [vmem:[%s816 + $0x24] sm:$0xf]
          %v2361 = vld [vmem:[%s816 + $0x28] sm:$0xf]
          %v2362 = vld [vmem:[%s816 + $0x30] sm:$0xf]
          %v2363 = vld [vmem:[%s816 + $0x34] sm:$0xf]
          %v2364 = vld [vmem:[%s816 + $0x3c] sm:$0xf]
          %v2365 = vld [vmem:[%s816 + $0x40] sm:$0xf]
          %v2366 = vld [vmem:[%s816 + $0x48] sm:$0xf]
          %v2367 = vld [vmem:[%s816 + $0x4c] sm:$0xf]
          %v2368 = vld [vmem:[%s816 + $0x54] sm:$0xf]
          %v2369 = vld [vmem:[%s816 + $0x58] sm:$0xf]
          %v2370 = vld [vmem:[%s816 + $0x60] sm:$0xf]
          %v2371 = vld [vmem:[%s816 + $0x64] sm:$0xf]
          %v2372 = vld [vmem:[%s816 + $0x6c] sm:$0xf]
          %v2373 = vld [vmem:[%s816 + $0x70] sm:$0xf]
          %v2374 = vld [vmem:[%s816 + $0x78] sm:$0xf]
          %v2375 = vld [vmem:[%s816 + $0x7c] sm:$0xf]
          %v2376 = vld [vmem:[%s816 + $0x84] sm:$0xf]
          %v2377 = vld [vmem:[%s816 + $0x88] sm:$0xf]
          %v2378 = vld [vmem:[%s816 + $0x90] sm:$0xf]
          %v2379 = vld [vmem:[%s816 + $0x94] sm:$0xf]
          %v2380 = vld [vmem:[%s816 + $0x9c] sm:$0xf]
          %v2381 = vld [vmem:[%s816 + $0xa0] sm:$0xf]
          %v2382 = vld [vmem:[%s816 + $0xa8] sm:$0xf]
          %v2383 = vld [vmem:[%s816 + $0xac] sm:$0xf]
          %v2384 = vld [vmem:[%s816 + $0xb4] sm:$0xf]
          %v2385 = vld [vmem:[%s816 + $0xb8] sm:$0xf]
          %2418 = vrot.lane.b32.xlu0 %v2354, 24
          %v2419 = vpop.permute.xlu0 %2418
          %2420 = vrot.lane.b32.xlu0 %v2355, 24
          %v2421 = vpop.permute.xlu0 %2420
          %2422 = vrot.lane.b32.xlu0 %v2356, 24
          %v2423 = vpop.permute.xlu0 %2422
          %2424 = vrot.lane.b32.xlu0 %v2357, 24
          %v2425 = vpop.permute.xlu0 %2424
          %2426 = vrot.lane.b32.xlu0 %v2358, 24
          %v2427 = vpop.permute.xlu0 %2426
          %2428 = vrot.lane.b32.xlu0 %v2359, 24
          %v2429 = vpop.permute.xlu0 %2428
          %2430 = vrot.lane.b32.xlu0 %v2360, 24
          %v2431 = vpop.permute.xlu0 %2430
          %2432 = vrot.lane.b32.xlu0 %v2361, 24
          %v2433 = vpop.permute.xlu0 %2432
          %2434 = vrot.lane.b32.xlu0 %v2362, 24
          %v2435 = vpop.permute.xlu0 %2434
          %2436 = vrot.lane.b32.xlu0 %v2363, 24
          %v2437 = vpop.permute.xlu0 %2436
          %2438 = vrot.lane.b32.xlu0 %v2364, 24
          %v2439 = vpop.permute.xlu0 %2438
          %2440 = vrot.lane.b32.xlu0 %v2365, 24
          %v2441 = vpop.permute.xlu0 %2440
          %2442 = vrot.lane.b32.xlu0 %v2366, 24
          %v2443 = vpop.permute.xlu0 %2442
          %2444 = vrot.lane.b32.xlu0 %v2367, 24
          %v2445 = vpop.permute.xlu0 %2444
          %2446 = vrot.lane.b32.xlu0 %v2368, 24
          %v2447 = vpop.permute.xlu0 %2446
          %2448 = vrot.lane.b32.xlu0 %v2369, 24
          %v2449 = vpop.permute.xlu0 %2448
          %2450 = vrot.lane.b32.xlu0 %v2370, 24
          %v2451 = vpop.permute.xlu0 %2450
          %2452 = vrot.lane.b32.xlu0 %v2371, 24
          %v2453 = vpop.permute.xlu0 %2452
          %2454 = vrot.lane.b32.xlu0 %v2372, 24
          %v2455 = vpop.permute.xlu0 %2454
          %2456 = vrot.lane.b32.xlu0 %v2373, 24
          %v2457 = vpop.permute.xlu0 %2456
          %2458 = vrot.lane.b32.xlu0 %v2374, 24
          %v2459 = vpop.permute.xlu0 %2458
          %2460 = vrot.lane.b32.xlu0 %v2375, 24
          %v2461 = vpop.permute.xlu0 %2460
          %2462 = vrot.lane.b32.xlu0 %v2376, 24
          %v2463 = vpop.permute.xlu0 %2462
          %2464 = vrot.lane.b32.xlu0 %v2377, 24
          %v2465 = vpop.permute.xlu0 %2464
          %2466 = vrot.lane.b32.xlu0 %v2378, 24
          %v2467 = vpop.permute.xlu0 %2466
          %2468 = vrot.lane.b32.xlu0 %v2379, 24
          %v2469 = vpop.permute.xlu0 %2468
          %2470 = vrot.lane.b32.xlu0 %v2380, 24
          %v2471 = vpop.permute.xlu0 %2470
          %2472 = vrot.lane.b32.xlu0 %v2381, 24
          %v2473 = vpop.permute.xlu0 %2472
          %2474 = vrot.lane.b32.xlu0 %v2382, 24
          %v2475 = vpop.permute.xlu0 %2474
          %2476 = vrot.lane.b32.xlu0 %v2383, 24
          %v2477 = vpop.permute.xlu0 %2476
          %2478 = vrot.lane.b32.xlu0 %v2384, 24
          %v2479 = vpop.permute.xlu0 %2478
          %2480 = vrot.lane.b32.xlu0 %v2385, 24
          %v2481 = vpop.permute.xlu0 %2480
          %vm2514 = vcmask 257216
          %2515 = vst.msk [vmem:[#allocation3] sm:$0xf] %vm2514, %v2419
          %2516 = vst.msk [vmem:[#allocation3 + $0x4] sm:$0xf] %vm2514, %v2421
          %2517 = vst.msk [vmem:[#allocation3 + $0x8] sm:$0xf] %vm2514, %v2423
          %2518 = vst.msk [vmem:[#allocation3 + $0xc] sm:$0xf] %vm2514, %v2425
          %2519 = vst.msk [vmem:[#allocation3 + $0x10] sm:$0xf] %vm2514, %v2427
          %2520 = vst.msk [vmem:[#allocation3 + $0x14] sm:$0xf] %vm2514, %v2429
          %2521 = vst.msk [vmem:[#allocation3 + $0x18] sm:$0xf] %vm2514, %v2431
          %2522 = vst.msk [vmem:[#allocation3 + $0x1c] sm:$0xf] %vm2514, %v2433
          %2523 = vst.msk [vmem:[#allocation3 + $0x20] sm:$0xf] %vm2514, %v2435
          %2524 = vst.msk [vmem:[#allocation3 + $0x24] sm:$0xf] %vm2514, %v2437
          %2525 = vst.msk [vmem:[#allocation3 + $0x28] sm:$0xf] %vm2514, %v2439
          %2526 = vst.msk [vmem:[#allocation3 + $0x2c] sm:$0xf] %vm2514, %v2441
          %2527 = vst.msk [vmem:[#allocation3 + $0x30] sm:$0xf] %vm2514, %v2443
          %2528 = vst.msk [vmem:[#allocation3 + $0x34] sm:$0xf] %vm2514, %v2445
          %2529 = vst.msk [vmem:[#allocation3 + $0x38] sm:$0xf] %vm2514, %v2447
          %2530 = vst.msk [vmem:[#allocation3 + $0x3c] sm:$0xf] %vm2514, %v2449
          %2531 = vst.msk [vmem:[#allocation3 + $0x40] sm:$0xf] %vm2514, %v2451
          %2532 = vst.msk [vmem:[#allocation3 + $0x44] sm:$0xf] %vm2514, %v2453
          %2533 = vst.msk [vmem:[#allocation3 + $0x48] sm:$0xf] %vm2514, %v2455
          %2534 = vst.msk [vmem:[#allocation3 + $0x4c] sm:$0xf] %vm2514, %v2457
          %2535 = vst.msk [vmem:[#allocation3 + $0x50] sm:$0xf] %vm2514, %v2459
          %2536 = vst.msk [vmem:[#allocation3 + $0x54] sm:$0xf] %vm2514, %v2461
          %2537 = vst.msk [vmem:[#allocation3 + $0x58] sm:$0xf] %vm2514, %v2463
          %2538 = vst.msk [vmem:[#allocation3 + $0x5c] sm:$0xf] %vm2514, %v2465
          %2539 = vst.msk [vmem:[#allocation3 + $0x60] sm:$0xf] %vm2514, %v2467
          %2540 = vst.msk [vmem:[#allocation3 + $0x64] sm:$0xf] %vm2514, %v2469
          %2541 = vst.msk [vmem:[#allocation3 + $0x68] sm:$0xf] %vm2514, %v2471
          %2542 = vst.msk [vmem:[#allocation3 + $0x6c] sm:$0xf] %vm2514, %v2473
          %2543 = vst.msk [vmem:[#allocation3 + $0x70] sm:$0xf] %vm2514, %v2475
          %2544 = vst.msk [vmem:[#allocation3 + $0x74] sm:$0xf] %vm2514, %v2477
          %2545 = vst.msk [vmem:[#allocation3 + $0x78] sm:$0xf] %vm2514, %v2479
          %2546 = vst.msk [vmem:[#allocation3 + $0x7c] sm:$0xf] %vm2514, %v2481
          %v2547 = vld [vmem:[%s816] sm:$0xf]
          %v2548 = vld [vmem:[%s816 + $0x4] sm:$0xf]
          %v2549 = vld [vmem:[%s816 + $0x8] sm:$0x1]
          %v2550 = vld [vmem:[%s816 + $0xc] sm:$0xf]
          %v2551 = vld [vmem:[%s816 + $0x10] sm:$0xf]
          %v2552 = vld [vmem:[%s816 + $0x14] sm:$0x1]
          %v2553 = vld [vmem:[%s816 + $0x18] sm:$0xf]
          %v2554 = vld [vmem:[%s816 + $0x1c] sm:$0xf]
          %v2555 = vld [vmem:[%s816 + $0x20] sm:$0x1]
          %v2556 = vld [vmem:[%s816 + $0x24] sm:$0xf]
          %v2557 = vld [vmem:[%s816 + $0x28] sm:$0xf]
          %v2558 = vld [vmem:[%s816 + $0x2c] sm:$0x1]
          %v2559 = vld [vmem:[%s816 + $0x30] sm:$0xf]
          %v2560 = vld [vmem:[%s816 + $0x34] sm:$0xf]
          %v2561 = vld [vmem:[%s816 + $0x38] sm:$0x1]
          %v2562 = vld [vmem:[%s816 + $0x3c] sm:$0xf]
          %v2563 = vld [vmem:[%s816 + $0x40] sm:$0xf]
          %v2564 = vld [vmem:[%s816 + $0x44] sm:$0x1]
          %v2565 = vld [vmem:[%s816 + $0x48] sm:$0xf]
          %v2566 = vld [vmem:[%s816 + $0x4c] sm:$0xf]
          %v2567 = vld [vmem:[%s816 + $0x50] sm:$0x1]
          %v2568 = vld [vmem:[%s816 + $0x54] sm:$0xf]
          %v2569 = vld [vmem:[%s816 + $0x58] sm:$0xf]
          %v2570 = vld [vmem:[%s816 + $0x5c] sm:$0x1]
          %v2571 = vld [vmem:[%s816 + $0x60] sm:$0xf]
          %v2572 = vld [vmem:[%s816 + $0x64] sm:$0xf]
          %v2573 = vld [vmem:[%s816 + $0x68] sm:$0x1]
          %v2574 = vld [vmem:[%s816 + $0x6c] sm:$0xf]
          %v2575 = vld [vmem:[%s816 + $0x70] sm:$0xf]
          %v2576 = vld [vmem:[%s816 + $0x74] sm:$0x1]
          %v2577 = vld [vmem:[%s816 + $0x78] sm:$0xf]
          %v2578 = vld [vmem:[%s816 + $0x7c] sm:$0xf]
          %v2579 = vld [vmem:[%s816 + $0x80] sm:$0x1]
          %v2580 = vld [vmem:[%s816 + $0x84] sm:$0xf]
          %v2581 = vld [vmem:[%s816 + $0x88] sm:$0xf]
          %v2582 = vld [vmem:[%s816 + $0x8c] sm:$0x1]
          %v2583 = vld [vmem:[%s816 + $0x90] sm:$0xf]
          %v2584 = vld [vmem:[%s816 + $0x94] sm:$0xf]
          %v2585 = vld [vmem:[%s816 + $0x98] sm:$0x1]
          %v2586 = vld [vmem:[%s816 + $0x9c] sm:$0xf]
          %v2587 = vld [vmem:[%s816 + $0xa0] sm:$0xf]
          %v2588 = vld [vmem:[%s816 + $0xa4] sm:$0x1]
          %v2589 = vld [vmem:[%s816 + $0xa8] sm:$0xf]
          %v2590 = vld [vmem:[%s816 + $0xac] sm:$0xf]
          %v2591 = vld [vmem:[%s816 + $0xb0] sm:$0x1]
          %v2592 = vld [vmem:[%s816 + $0xb4] sm:$0xf]
          %v2593 = vld [vmem:[%s816 + $0xb8] sm:$0xf]
          %v2594 = vld [vmem:[%s816 + $0xbc] sm:$0x1]
          %v2596 = vshrl.u32 %v2547, 16
          %v2598 = vrot.slane %v2596, 4
          %v2599 = vshll.u32 %v2547, 16
          %v2601 = vrot.slane %v2599, 5
          %v2602 = vor.u32 %v2598, %v2601
          %v2603 = vrot.slane %v2602, 4
          %v2605 = vshll.u32 %v2548, 16
          %v2607 = vrot.slane %v2605, 5
          %v2608 = vsel %vm1500, %v2603, %v2607
          %v2609 = vshrl.u32 %v2548, 16
          %v2611 = vrot.slane %v2609, 4
          %v2612 = vor.u32 %v2611, %v2607
          %v2613 = vrot.slane %v2612, 4
          %v2615 = vshll.u32 %v2549, 16
          %v2617 = vrot.slane %v2615, 5
          %v2618 = vsel %vm1500, %v2613, %v2617
          %v2620 = vshrl.u32 %v2550, 16
          %v2622 = vrot.slane %v2620, 4
          %v2623 = vshll.u32 %v2550, 16
          %v2625 = vrot.slane %v2623, 5
          %v2626 = vor.u32 %v2622, %v2625
          %v2627 = vrot.slane %v2626, 4
          %v2629 = vshll.u32 %v2551, 16
          %v2631 = vrot.slane %v2629, 5
          %v2632 = vsel %vm1500, %v2627, %v2631
          %v2633 = vshrl.u32 %v2551, 16
          %v2635 = vrot.slane %v2633, 4
          %v2636 = vor.u32 %v2635, %v2631
          %v2637 = vrot.slane %v2636, 4
          %v2639 = vshll.u32 %v2552, 16
          %v2641 = vrot.slane %v2639, 5
          %v2642 = vsel %vm1500, %v2637, %v2641
          %v2644 = vshrl.u32 %v2553, 16
          %v2646 = vrot.slane %v2644, 4
          %v2647 = vshll.u32 %v2553, 16
          %v2649 = vrot.slane %v2647, 5
          %v2650 = vor.u32 %v2646, %v2649
          %v2651 = vrot.slane %v2650, 4
          %v2653 = vshll.u32 %v2554, 16
          %v2655 = vrot.slane %v2653, 5
          %v2656 = vsel %vm1500, %v2651, %v2655
          %v2657 = vshrl.u32 %v2554, 16
          %v2659 = vrot.slane %v2657, 4
          %v2660 = vor.u32 %v2659, %v2655
          %v2661 = vrot.slane %v2660, 4
          %v2663 = vshll.u32 %v2555, 16
          %v2665 = vrot.slane %v2663, 5
          %v2666 = vsel %vm1500, %v2661, %v2665
          %v2668 = vshrl.u32 %v2556, 16
          %v2670 = vrot.slane %v2668, 4
          %v2671 = vshll.u32 %v2556, 16
          %v2673 = vrot.slane %v2671, 5
          %v2674 = vor.u32 %v2670, %v2673
          %v2675 = vrot.slane %v2674, 4
          %v2677 = vshll.u32 %v2557, 16
          %v2679 = vrot.slane %v2677, 5
          %v2680 = vsel %vm1500, %v2675, %v2679
          %v2681 = vshrl.u32 %v2557, 16
          %v2683 = vrot.slane %v2681, 4
          %v2684 = vor.u32 %v2683, %v2679
          %v2685 = vrot.slane %v2684, 4
          %v2687 = vshll.u32 %v2558, 16
          %v2689 = vrot.slane %v2687, 5
          %v2690 = vsel %vm1500, %v2685, %v2689
          %v2692 = vshrl.u32 %v2559, 16
          %v2694 = vrot.slane %v2692, 4
          %v2695 = vshll.u32 %v2559, 16
          %v2697 = vrot.slane %v2695, 5
          %v2698 = vor.u32 %v2694, %v2697
          %v2699 = vrot.slane %v2698, 4
          %v2701 = vshll.u32 %v2560, 16
          %v2703 = vrot.slane %v2701, 5
          %v2704 = vsel %vm1500, %v2699, %v2703
          %v2705 = vshrl.u32 %v2560, 16
          %v2707 = vrot.slane %v2705, 4
          %v2708 = vor.u32 %v2707, %v2703
          %v2709 = vrot.slane %v2708, 4
          %v2711 = vshll.u32 %v2561, 16
          %v2713 = vrot.slane %v2711, 5
          %v2714 = vsel %vm1500, %v2709, %v2713
          %v2716 = vshrl.u32 %v2562, 16
          %v2718 = vrot.slane %v2716, 4
          %v2719 = vshll.u32 %v2562, 16
          %v2721 = vrot.slane %v2719, 5
          %v2722 = vor.u32 %v2718, %v2721
          %v2723 = vrot.slane %v2722, 4
          %v2725 = vshll.u32 %v2563, 16
          %v2727 = vrot.slane %v2725, 5
          %v2728 = vsel %vm1500, %v2723, %v2727
          %v2729 = vshrl.u32 %v2563, 16
          %v2731 = vrot.slane %v2729, 4
          %v2732 = vor.u32 %v2731, %v2727
          %v2733 = vrot.slane %v2732, 4
          %v2735 = vshll.u32 %v2564, 16
          %v2737 = vrot.slane %v2735, 5
          %v2738 = vsel %vm1500, %v2733, %v2737
          %v2740 = vshrl.u32 %v2565, 16
          %v2742 = vrot.slane %v2740, 4
          %v2743 = vshll.u32 %v2565, 16
          %v2745 = vrot.slane %v2743, 5
          %v2746 = vor.u32 %v2742, %v2745
          %v2747 = vrot.slane %v2746, 4
          %v2749 = vshll.u32 %v2566, 16
          %v2751 = vrot.slane %v2749, 5
          %v2752 = vsel %vm1500, %v2747, %v2751
          %v2753 = vshrl.u32 %v2566, 16
          %v2755 = vrot.slane %v2753, 4
          %v2756 = vor.u32 %v2755, %v2751
          %v2757 = vrot.slane %v2756, 4
          %v2759 = vshll.u32 %v2567, 16
          %v2761 = vrot.slane %v2759, 5
          %v2762 = vsel %vm1500, %v2757, %v2761
          %v2764 = vshrl.u32 %v2568, 16
          %v2766 = vrot.slane %v2764, 4
          %v2767 = vshll.u32 %v2568, 16
          %v2769 = vrot.slane %v2767, 5
          %v2770 = vor.u32 %v2766, %v2769
          %v2771 = vrot.slane %v2770, 4
          %v2773 = vshll.u32 %v2569, 16
          %v2775 = vrot.slane %v2773, 5
          %v2776 = vsel %vm1500, %v2771, %v2775
          %v2777 = vshrl.u32 %v2569, 16
          %v2779 = vrot.slane %v2777, 4
          %v2780 = vor.u32 %v2779, %v2775
          %v2781 = vrot.slane %v2780, 4
          %v2783 = vshll.u32 %v2570, 16
          %v2785 = vrot.slane %v2783, 5
          %v2786 = vsel %vm1500, %v2781, %v2785
          %v2788 = vshrl.u32 %v2571, 16
          %v2790 = vrot.slane %v2788, 4
          %v2791 = vshll.u32 %v2571, 16
          %v2793 = vrot.slane %v2791, 5
          %v2794 = vor.u32 %v2790, %v2793
          %v2795 = vrot.slane %v2794, 4
          %v2797 = vshll.u32 %v2572, 16
          %v2799 = vrot.slane %v2797, 5
          %v2800 = vsel %vm1500, %v2795, %v2799
          %v2801 = vshrl.u32 %v2572, 16
          %v2803 = vrot.slane %v2801, 4
          %v2804 = vor.u32 %v2803, %v2799
          %v2805 = vrot.slane %v2804, 4
          %v2807 = vshll.u32 %v2573, 16
          %v2809 = vrot.slane %v2807, 5
          %v2810 = vsel %vm1500, %v2805, %v2809
          %v2812 = vshrl.u32 %v2574, 16
          %v2814 = vrot.slane %v2812, 4
          %v2815 = vshll.u32 %v2574, 16
          %v2817 = vrot.slane %v2815, 5
          %v2818 = vor.u32 %v2814, %v2817
          %v2819 = vrot.slane %v2818, 4
          %v2821 = vshll.u32 %v2575, 16
          %v2823 = vrot.slane %v2821, 5
          %v2824 = vsel %vm1500, %v2819, %v2823
          %v2825 = vshrl.u32 %v2575, 16
          %v2827 = vrot.slane %v2825, 4
          %v2828 = vor.u32 %v2827, %v2823
          %v2829 = vrot.slane %v2828, 4
          %v2831 = vshll.u32 %v2576, 16
          %v2833 = vrot.slane %v2831, 5
          %v2834 = vsel %vm1500, %v2829, %v2833
          %v2836 = vshrl.u32 %v2577, 16
          %v2838 = vrot.slane %v2836, 4
          %v2839 = vshll.u32 %v2577, 16
          %v2841 = vrot.slane %v2839, 5
          %v2842 = vor.u32 %v2838, %v2841
          %v2843 = vrot.slane %v2842, 4
          %v2845 = vshll.u32 %v2578, 16
          %v2847 = vrot.slane %v2845, 5
          %v2848 = vsel %vm1500, %v2843, %v2847
          %v2849 = vshrl.u32 %v2578, 16
          %v2851 = vrot.slane %v2849, 4
          %v2852 = vor.u32 %v2851, %v2847
          %v2853 = vrot.slane %v2852, 4
          %v2855 = vshll.u32 %v2579, 16
          %v2857 = vrot.slane %v2855, 5
          %v2858 = vsel %vm1500, %v2853, %v2857
          %v2860 = vshrl.u32 %v2580, 16
          %v2862 = vrot.slane %v2860, 4
          %v2863 = vshll.u32 %v2580, 16
          %v2865 = vrot.slane %v2863, 5
          %v2866 = vor.u32 %v2862, %v2865
          %v2867 = vrot.slane %v2866, 4
          %v2869 = vshll.u32 %v2581, 16
          %v2871 = vrot.slane %v2869, 5
          %v2872 = vsel %vm1500, %v2867, %v2871
          %v2873 = vshrl.u32 %v2581, 16
          %v2875 = vrot.slane %v2873, 4
          %v2876 = vor.u32 %v2875, %v2871
          %v2877 = vrot.slane %v2876, 4
          %v2879 = vshll.u32 %v2582, 16
          %v2881 = vrot.slane %v2879, 5
          %v2882 = vsel %vm1500, %v2877, %v2881
          %v2884 = vshrl.u32 %v2583, 16
          %v2886 = vrot.slane %v2884, 4
          %v2887 = vshll.u32 %v2583, 16
          %v2889 = vrot.slane %v2887, 5
          %v2890 = vor.u32 %v2886, %v2889
          %v2891 = vrot.slane %v2890, 4
          %v2893 = vshll.u32 %v2584, 16
          %v2895 = vrot.slane %v2893, 5
          %v2896 = vsel %vm1500, %v2891, %v2895
          %v2897 = vshrl.u32 %v2584, 16
          %v2899 = vrot.slane %v2897, 4
          %v2900 = vor.u32 %v2899, %v2895
          %v2901 = vrot.slane %v2900, 4
          %v2903 = vshll.u32 %v2585, 16
          %v2905 = vrot.slane %v2903, 5
          %v2906 = vsel %vm1500, %v2901, %v2905
          %v2908 = vshrl.u32 %v2586, 16
          %v2910 = vrot.slane %v2908, 4
          %v2911 = vshll.u32 %v2586, 16
          %v2913 = vrot.slane %v2911, 5
          %v2914 = vor.u32 %v2910, %v2913
          %v2915 = vrot.slane %v2914, 4
          %v2917 = vshll.u32 %v2587, 16
          %v2919 = vrot.slane %v2917, 5
          %v2920 = vsel %vm1500, %v2915, %v2919
          %v2921 = vshrl.u32 %v2587, 16
          %v2923 = vrot.slane %v2921, 4
          %v2924 = vor.u32 %v2923, %v2919
          %v2925 = vrot.slane %v2924, 4
          %v2927 = vshll.u32 %v2588, 16
          %v2929 = vrot.slane %v2927, 5
          %v2930 = vsel %vm1500, %v2925, %v2929
          %v2932 = vshrl.u32 %v2589, 16
          %v2934 = vrot.slane %v2932, 4
          %v2935 = vshll.u32 %v2589, 16
          %v2937 = vrot.slane %v2935, 5
          %v2938 = vor.u32 %v2934, %v2937
          %v2939 = vrot.slane %v2938, 4
          %v2941 = vshll.u32 %v2590, 16
          %v2943 = vrot.slane %v2941, 5
          %v2944 = vsel %vm1500, %v2939, %v2943
          %v2945 = vshrl.u32 %v2590, 16
          %v2947 = vrot.slane %v2945, 4
          %v2948 = vor.u32 %v2947, %v2943
          %v2949 = vrot.slane %v2948, 4
          %v2951 = vshll.u32 %v2591, 16
          %v2953 = vrot.slane %v2951, 5
          %v2954 = vsel %vm1500, %v2949, %v2953
          %v2956 = vshrl.u32 %v2592, 16
          %v2958 = vrot.slane %v2956, 4
          %v2959 = vshll.u32 %v2592, 16
          %v2961 = vrot.slane %v2959, 5
          %v2962 = vor.u32 %v2958, %v2961
          %v2963 = vrot.slane %v2962, 4
          %v2965 = vshll.u32 %v2593, 16
          %v2967 = vrot.slane %v2965, 5
          %v2968 = vsel %vm1500, %v2963, %v2967
          %v2969 = vshrl.u32 %v2593, 16
          %v2971 = vrot.slane %v2969, 4
          %v2972 = vor.u32 %v2971, %v2967
          %v2973 = vrot.slane %v2972, 4
          %v2975 = vshll.u32 %v2594, 16
          %v2977 = vrot.slane %v2975, 5
          %v2978 = vsel %vm1500, %v2973, %v2977
          %2979 = vrot.lane.b32.xlu0 %v2608, 32
          %v2980 = vpop.permute.xlu0 %2979
          %2981 = vrot.lane.b32.xlu0 %v2618, 32
          %v2982 = vpop.permute.xlu0 %2981
          %2983 = vrot.lane.b32.xlu0 %v2632, 32
          %v2984 = vpop.permute.xlu0 %2983
          %2985 = vrot.lane.b32.xlu0 %v2642, 32
          %v2986 = vpop.permute.xlu0 %2985
          %2987 = vrot.lane.b32.xlu0 %v2656, 32
          %v2988 = vpop.permute.xlu0 %2987
          %2989 = vrot.lane.b32.xlu0 %v2666, 32
          %v2990 = vpop.permute.xlu0 %2989
          %2991 = vrot.lane.b32.xlu0 %v2680, 32
          %v2992 = vpop.permute.xlu0 %2991
          %2993 = vrot.lane.b32.xlu0 %v2690, 32
          %v2994 = vpop.permute.xlu0 %2993
          %2995 = vrot.lane.b32.xlu0 %v2704, 32
          %v2996 = vpop.permute.xlu0 %2995
          %2997 = vrot.lane.b32.xlu0 %v2714, 32
          %v2998 = vpop.permute.xlu0 %2997
          %2999 = vrot.lane.b32.xlu0 %v2728, 32
          %v3000 = vpop.permute.xlu0 %2999
          %3001 = vrot.lane.b32.xlu0 %v2738, 32
          %v3002 = vpop.permute.xlu0 %3001
          %3003 = vrot.lane.b32.xlu0 %v2752, 32
          %v3004 = vpop.permute.xlu0 %3003
          %3005 = vrot.lane.b32.xlu0 %v2762, 32
          %v3006 = vpop.permute.xlu0 %3005
          %3007 = vrot.lane.b32.xlu0 %v2776, 32
          %v3008 = vpop.permute.xlu0 %3007
          %3009 = vrot.lane.b32.xlu0 %v2786, 32
          %v3010 = vpop.permute.xlu0 %3009
          %3011 = vrot.lane.b32.xlu0 %v2800, 32
          %v3012 = vpop.permute.xlu0 %3011
          %3013 = vrot.lane.b32.xlu0 %v2810, 32
          %v3014 = vpop.permute.xlu0 %3013
          %3015 = vrot.lane.b32.xlu0 %v2824, 32
          %v3016 = vpop.permute.xlu0 %3015
          %3017 = vrot.lane.b32.xlu0 %v2834, 32
          %v3018 = vpop.permute.xlu0 %3017
          %3019 = vrot.lane.b32.xlu0 %v2848, 32
          %v3020 = vpop.permute.xlu0 %3019
          %3021 = vrot.lane.b32.xlu0 %v2858, 32
          %v3022 = vpop.permute.xlu0 %3021
          %3023 = vrot.lane.b32.xlu0 %v2872, 32
          %v3024 = vpop.permute.xlu0 %3023
          %3025 = vrot.lane.b32.xlu0 %v2882, 32
          %v3026 = vpop.permute.xlu0 %3025
          %3027 = vrot.lane.b32.xlu0 %v2896, 32
          %v3028 = vpop.permute.xlu0 %3027
          %3029 = vrot.lane.b32.xlu0 %v2906, 32
          %v3030 = vpop.permute.xlu0 %3029
          %3031 = vrot.lane.b32.xlu0 %v2920, 32
          %v3032 = vpop.permute.xlu0 %3031
          %3033 = vrot.lane.b32.xlu0 %v2930, 32
          %v3034 = vpop.permute.xlu0 %3033
          %3035 = vrot.lane.b32.xlu0 %v2944, 32
          %v3036 = vpop.permute.xlu0 %3035
          %3037 = vrot.lane.b32.xlu0 %v2954, 32
          %v3038 = vpop.permute.xlu0 %3037
          %3039 = vrot.lane.b32.xlu0 %v2968, 32
          %v3040 = vpop.permute.xlu0 %3039
          %3041 = vrot.lane.b32.xlu0 %v2978, 32
          %v3042 = vpop.permute.xlu0 %3041
          %vm3075 = vcmask 322816
          %3076 = vst.msk [vmem:[#allocation3] sm:$0xf] %vm3075, %v2980
          %3077 = vst.msk [vmem:[#allocation3 + $0x4] sm:$0xf] %vm3075, %v2982
          %3078 = vst.msk [vmem:[#allocation3 + $0x8] sm:$0xf] %vm3075, %v2984
          %3079 = vst.msk [vmem:[#allocation3 + $0xc] sm:$0xf] %vm3075, %v2986
          %3080 = vst.msk [vmem:[#allocation3 + $0x10] sm:$0xf] %vm3075, %v2988
          %3081 = vst.msk [vmem:[#allocation3 + $0x14] sm:$0xf] %vm3075, %v2990
          %3082 = vst.msk [vmem:[#allocation3 + $0x18] sm:$0xf] %vm3075, %v2992
          %3083 = vst.msk [vmem:[#allocation3 + $0x1c] sm:$0xf] %vm3075, %v2994
          %3084 = vst.msk [vmem:[#allocation3 + $0x20] sm:$0xf] %vm3075, %v2996
          %3085 = vst.msk [vmem:[#allocation3 + $0x24] sm:$0xf] %vm3075, %v2998
          %3086 = vst.msk [vmem:[#allocation3 + $0x28] sm:$0xf] %vm3075, %v3000
          %3087 = vst.msk [vmem:[#allocation3 + $0x2c] sm:$0xf] %vm3075, %v3002
          %3088 = vst.msk [vmem:[#allocation3 + $0x30] sm:$0xf] %vm3075, %v3004
          %3089 = vst.msk [vmem:[#allocation3 + $0x34] sm:$0xf] %vm3075, %v3006
          %3090 = vst.msk [vmem:[#allocation3 + $0x38] sm:$0xf] %vm3075, %v3008
          %3091 = vst.msk [vmem:[#allocation3 + $0x3c] sm:$0xf] %vm3075, %v3010
          %3092 = vst.msk [vmem:[#allocation3 + $0x40] sm:$0xf] %vm3075, %v3012
          %3093 = vst.msk [vmem:[#allocation3 + $0x44] sm:$0xf] %vm3075, %v3014
          %3094 = vst.msk [vmem:[#allocation3 + $0x48] sm:$0xf] %vm3075, %v3016
          %3095 = vst.msk [vmem:[#allocation3 + $0x4c] sm:$0xf] %vm3075, %v3018
          %3096 = vst.msk [vmem:[#allocation3 + $0x50] sm:$0xf] %vm3075, %v3020
          %3097 = vst.msk [vmem:[#allocation3 + $0x54] sm:$0xf] %vm3075, %v3022
          %3098 = vst.msk [vmem:[#allocation3 + $0x58] sm:$0xf] %vm3075, %v3024
          %3099 = vst.msk [vmem:[#allocation3 + $0x5c] sm:$0xf] %vm3075, %v3026
          %3100 = vst.msk [vmem:[#allocation3 + $0x60] sm:$0xf] %vm3075, %v3028
          %3101 = vst.msk [vmem:[#allocation3 + $0x64] sm:$0xf] %vm3075, %v3030
          %3102 = vst.msk [vmem:[#allocation3 + $0x68] sm:$0xf] %vm3075, %v3032
          %3103 = vst.msk [vmem:[#allocation3 + $0x6c] sm:$0xf] %vm3075, %v3034
          %3104 = vst.msk [vmem:[#allocation3 + $0x70] sm:$0xf] %vm3075, %v3036
          %3105 = vst.msk [vmem:[#allocation3 + $0x74] sm:$0xf] %vm3075, %v3038
          %3106 = vst.msk [vmem:[#allocation3 + $0x78] sm:$0xf] %vm3075, %v3040
          %3107 = vst.msk [vmem:[#allocation3 + $0x7c] sm:$0xf] %vm3075, %v3042
          %v3108 = vld [vmem:[%s816] sm:$0xe]
          %v3109 = vld [vmem:[%s816 + $0x4] sm:$0xf]
          %v3110 = vld [vmem:[%s816 + $0x8] sm:$0x1]
          %v3111 = vld [vmem:[%s816 + $0xc] sm:$0xe]
          %v3112 = vld [vmem:[%s816 + $0x10] sm:$0xf]
          %v3113 = vld [vmem:[%s816 + $0x14] sm:$0x1]
          %v3114 = vld [vmem:[%s816 + $0x18] sm:$0xe]
          %v3115 = vld [vmem:[%s816 + $0x1c] sm:$0xf]
          %v3116 = vld [vmem:[%s816 + $0x20] sm:$0x1]
          %v3117 = vld [vmem:[%s816 + $0x24] sm:$0xe]
          %v3118 = vld [vmem:[%s816 + $0x28] sm:$0xf]
          %v3119 = vld [vmem:[%s816 + $0x2c] sm:$0x1]
          %v3120 = vld [vmem:[%s816 + $0x30] sm:$0xe]
          %v3121 = vld [vmem:[%s816 + $0x34] sm:$0xf]
          %v3122 = vld [vmem:[%s816 + $0x38] sm:$0x1]
          %v3123 = vld [vmem:[%s816 + $0x3c] sm:$0xe]
          %v3124 = vld [vmem:[%s816 + $0x40] sm:$0xf]
          %v3125 = vld [vmem:[%s816 + $0x44] sm:$0x1]
          %v3126 = vld [vmem:[%s816 + $0x48] sm:$0xe]
          %v3127 = vld [vmem:[%s816 + $0x4c] sm:$0xf]
          %v3128 = vld [vmem:[%s816 + $0x50] sm:$0x1]
          %v3129 = vld [vmem:[%s816 + $0x54] sm:$0xe]
          %v3130 = vld [vmem:[%s816 + $0x58] sm:$0xf]
          %v3131 = vld [vmem:[%s816 + $0x5c] sm:$0x1]
          %v3132 = vld [vmem:[%s816 + $0x60] sm:$0xe]
          %v3133 = vld [vmem:[%s816 + $0x64] sm:$0xf]
          %v3134 = vld [vmem:[%s816 + $0x68] sm:$0x1]
          %v3135 = vld [vmem:[%s816 + $0x6c] sm:$0xe]
          %v3136 = vld [vmem:[%s816 + $0x70] sm:$0xf]
          %v3137 = vld [vmem:[%s816 + $0x74] sm:$0x1]
          %v3138 = vld [vmem:[%s816 + $0x78] sm:$0xe]
          %v3139 = vld [vmem:[%s816 + $0x7c] sm:$0xf]
          %v3140 = vld [vmem:[%s816 + $0x80] sm:$0x1]
          %v3141 = vld [vmem:[%s816 + $0x84] sm:$0xe]
          %v3142 = vld [vmem:[%s816 + $0x88] sm:$0xf]
          %v3143 = vld [vmem:[%s816 + $0x8c] sm:$0x1]
          %v3144 = vld [vmem:[%s816 + $0x90] sm:$0xe]
          %v3145 = vld [vmem:[%s816 + $0x94] sm:$0xf]
          %v3146 = vld [vmem:[%s816 + $0x98] sm:$0x1]
          %v3147 = vld [vmem:[%s816 + $0x9c] sm:$0xe]
          %v3148 = vld [vmem:[%s816 + $0xa0] sm:$0xf]
          %v3149 = vld [vmem:[%s816 + $0xa4] sm:$0x1]
          %v3150 = vld [vmem:[%s816 + $0xa8] sm:$0xe]
          %v3151 = vld [vmem:[%s816 + $0xac] sm:$0xf]
          %v3152 = vld [vmem:[%s816 + $0xb0] sm:$0x1]
          %v3153 = vld [vmem:[%s816 + $0xb4] sm:$0xe]
          %v3154 = vld [vmem:[%s816 + $0xb8] sm:$0xf]
          %v3155 = vld [vmem:[%s816 + $0xbc] sm:$0x1]
          %v3204 = vrot.slane %v3108, 5
          %v3205 = vrot.slane %v3204, 4
          %v3206 = vrot.slane %v3109, 5
          %v3207 = vsel %vm2112, %v3205, %v3206
          %v3208 = vrot.slane %v3206, 4
          %v3209 = vrot.slane %v3110, 5
          %v3210 = vsel %vm2112, %v3208, %v3209
          %v3211 = vrot.slane %v3111, 5
          %v3212 = vrot.slane %v3211, 4
          %v3213 = vrot.slane %v3112, 5
          %v3214 = vsel %vm2112, %v3212, %v3213
          %v3215 = vrot.slane %v3213, 4
          %v3216 = vrot.slane %v3113, 5
          %v3217 = vsel %vm2112, %v3215, %v3216
          %v3218 = vrot.slane %v3114, 5
          %v3219 = vrot.slane %v3218, 4
          %v3220 = vrot.slane %v3115, 5
          %v3221 = vsel %vm2112, %v3219, %v3220
          %v3222 = vrot.slane %v3220, 4
          %v3223 = vrot.slane %v3116, 5
          %v3224 = vsel %vm2112, %v3222, %v3223
          %v3225 = vrot.slane %v3117, 5
          %v3226 = vrot.slane %v3225, 4
          %v3227 = vrot.slane %v3118, 5
          %v3228 = vsel %vm2112, %v3226, %v3227
          %v3229 = vrot.slane %v3227, 4
          %v3230 = vrot.slane %v3119, 5
          %v3231 = vsel %vm2112, %v3229, %v3230
          %v3232 = vrot.slane %v3120, 5
          %v3233 = vrot.slane %v3232, 4
          %v3234 = vrot.slane %v3121, 5
          %v3235 = vsel %vm2112, %v3233, %v3234
          %v3236 = vrot.slane %v3234, 4
          %v3237 = vrot.slane %v3122, 5
          %v3238 = vsel %vm2112, %v3236, %v3237
          %v3239 = vrot.slane %v3123, 5
          %v3240 = vrot.slane %v3239, 4
          %v3241 = vrot.slane %v3124, 5
          %v3242 = vsel %vm2112, %v3240, %v3241
          %v3243 = vrot.slane %v3241, 4
          %v3244 = vrot.slane %v3125, 5
          %v3245 = vsel %vm2112, %v3243, %v3244
          %v3246 = vrot.slane %v3126, 5
          %v3247 = vrot.slane %v3246, 4
          %v3248 = vrot.slane %v3127, 5
          %v3249 = vsel %vm2112, %v3247, %v3248
          %v3250 = vrot.slane %v3248, 4
          %v3251 = vrot.slane %v3128, 5
          %v3252 = vsel %vm2112, %v3250, %v3251
          %v3253 = vrot.slane %v3129, 5
          %v3254 = vrot.slane %v3253, 4
          %v3255 = vrot.slane %v3130, 5
          %v3256 = vsel %vm2112, %v3254, %v3255
          %v3257 = vrot.slane %v3255, 4
          %v3258 = vrot.slane %v3131, 5
          %v3259 = vsel %vm2112, %v3257, %v3258
          %v3260 = vrot.slane %v3132, 5
          %v3261 = vrot.slane %v3260, 4
          %v3262 = vrot.slane %v3133, 5
          %v3263 = vsel %vm2112, %v3261, %v3262
          %v3264 = vrot.slane %v3262, 4
          %v3265 = vrot.slane %v3134, 5
          %v3266 = vsel %vm2112, %v3264, %v3265
          %v3267 = vrot.slane %v3135, 5
          %v3268 = vrot.slane %v3267, 4
          %v3269 = vrot.slane %v3136, 5
          %v3270 = vsel %vm2112, %v3268, %v3269
          %v3271 = vrot.slane %v3269, 4
          %v3272 = vrot.slane %v3137, 5
          %v3273 = vsel %vm2112, %v3271, %v3272
          %v3274 = vrot.slane %v3138, 5
          %v3275 = vrot.slane %v3274, 4
          %v3276 = vrot.slane %v3139, 5
          %v3277 = vsel %vm2112, %v3275, %v3276
          %v3278 = vrot.slane %v3276, 4
          %v3279 = vrot.slane %v3140, 5
          %v3280 = vsel %vm2112, %v3278, %v3279
          %v3281 = vrot.slane %v3141, 5
          %v3282 = vrot.slane %v3281, 4
          %v3283 = vrot.slane %v3142, 5
          %v3284 = vsel %vm2112, %v3282, %v3283
          %v3285 = vrot.slane %v3283, 4
          %v3286 = vrot.slane %v3143, 5
          %v3287 = vsel %vm2112, %v3285, %v3286
          %v3288 = vrot.slane %v3144, 5
          %v3289 = vrot.slane %v3288, 4
          %v3290 = vrot.slane %v3145, 5
          %v3291 = vsel %vm2112, %v3289, %v3290
          %v3292 = vrot.slane %v3290, 4
          %v3293 = vrot.slane %v3146, 5
          %v3294 = vsel %vm2112, %v3292, %v3293
          %v3295 = vrot.slane %v3147, 5
          %v3296 = vrot.slane %v3295, 4
          %v3297 = vrot.slane %v3148, 5
          %v3298 = vsel %vm2112, %v3296, %v3297
          %v3299 = vrot.slane %v3297, 4
          %v3300 = vrot.slane %v3149, 5
          %v3301 = vsel %vm2112, %v3299, %v3300
          %v3302 = vrot.slane %v3150, 5
          %v3303 = vrot.slane %v3302, 4
          %v3304 = vrot.slane %v3151, 5
          %v3305 = vsel %vm2112, %v3303, %v3304
          %v3306 = vrot.slane %v3304, 4
          %v3307 = vrot.slane %v3152, 5
          %v3308 = vsel %vm2112, %v3306, %v3307
          %v3309 = vrot.slane %v3153, 5
          %v3310 = vrot.slane %v3309, 4
          %v3311 = vrot.slane %v3154, 5
          %v3312 = vsel %vm2112, %v3310, %v3311
          %v3313 = vrot.slane %v3311, 4
          %v3314 = vrot.slane %v3155, 5
          %v3315 = vsel %vm2112, %v3313, %v3314
          %3316 = vrot.lane.b32.xlu0 %v3207, 40
          %v3317 = vpop.permute.xlu0 %3316
          %3318 = vrot.lane.b32.xlu0 %v3210, 40
          %v3319 = vpop.permute.xlu0 %3318
          %3320 = vrot.lane.b32.xlu0 %v3214, 40
          %v3321 = vpop.permute.xlu0 %3320
          %3322 = vrot.lane.b32.xlu0 %v3217, 40
          %v3323 = vpop.permute.xlu0 %3322
          %3324 = vrot.lane.b32.xlu0 %v3221, 40
          %v3325 = vpop.permute.xlu0 %3324
          %3326 = vrot.lane.b32.xlu0 %v3224, 40
          %v3327 = vpop.permute.xlu0 %3326
          %3328 = vrot.lane.b32.xlu0 %v3228, 40
          %v3329 = vpop.permute.xlu0 %3328
          %3330 = vrot.lane.b32.xlu0 %v3231, 40
          %v3331 = vpop.permute.xlu0 %3330
          %3332 = vrot.lane.b32.xlu0 %v3235, 40
          %v3333 = vpop.permute.xlu0 %3332
          %3334 = vrot.lane.b32.xlu0 %v3238, 40
          %v3335 = vpop.permute.xlu0 %3334
          %3336 = vrot.lane.b32.xlu0 %v3242, 40
          %v3337 = vpop.permute.xlu0 %3336
          %3338 = vrot.lane.b32.xlu0 %v3245, 40
          %v3339 = vpop.permute.xlu0 %3338
          %3340 = vrot.lane.b32.xlu0 %v3249, 40
          %v3341 = vpop.permute.xlu0 %3340
          %3342 = vrot.lane.b32.xlu0 %v3252, 40
          %v3343 = vpop.permute.xlu0 %3342
          %3344 = vrot.lane.b32.xlu0 %v3256, 40
          %v3345 = vpop.permute.xlu0 %3344
          %3346 = vrot.lane.b32.xlu0 %v3259, 40
          %v3347 = vpop.permute.xlu0 %3346
          %3348 = vrot.lane.b32.xlu0 %v3263, 40
          %v3349 = vpop.permute.xlu0 %3348
          %3350 = vrot.lane.b32.xlu0 %v3266, 40
          %v3351 = vpop.permute.xlu0 %3350
          %3352 = vrot.lane.b32.xlu0 %v3270, 40
          %v3353 = vpop.permute.xlu0 %3352
          %3354 = vrot.lane.b32.xlu0 %v3273, 40
          %v3355 = vpop.permute.xlu0 %3354
          %3356 = vrot.lane.b32.xlu0 %v3277, 40
          %v3357 = vpop.permute.xlu0 %3356
          %3358 = vrot.lane.b32.xlu0 %v3280, 40
          %v3359 = vpop.permute.xlu0 %3358
          %3360 = vrot.lane.b32.xlu0 %v3284, 40
          %v3361 = vpop.permute.xlu0 %3360
          %3362 = vrot.lane.b32.xlu0 %v3287, 40
          %v3363 = vpop.permute.xlu0 %3362
          %3364 = vrot.lane.b32.xlu0 %v3291, 40
          %v3365 = vpop.permute.xlu0 %3364
          %3366 = vrot.lane.b32.xlu0 %v3294, 40
          %v3367 = vpop.permute.xlu0 %3366
          %3368 = vrot.lane.b32.xlu0 %v3298, 40
          %v3369 = vpop.permute.xlu0 %3368
          %3370 = vrot.lane.b32.xlu0 %v3301, 40
          %v3371 = vpop.permute.xlu0 %3370
          %3372 = vrot.lane.b32.xlu0 %v3305, 40
          %v3373 = vpop.permute.xlu0 %3372
          %3374 = vrot.lane.b32.xlu0 %v3308, 40
          %v3375 = vpop.permute.xlu0 %3374
          %3376 = vrot.lane.b32.xlu0 %v3312, 40
          %v3377 = vpop.permute.xlu0 %3376
          %3378 = vrot.lane.b32.xlu0 %v3315, 40
          %v3379 = vpop.permute.xlu0 %3378
          %vm3412 = vcmask 388416
          %3413 = vst.msk [vmem:[#allocation3] sm:$0xf] %vm3412, %v3317
          %3414 = vst.msk [vmem:[#allocation3 + $0x4] sm:$0xf] %vm3412, %v3319
          %3415 = vst.msk [vmem:[#allocation3 + $0x8] sm:$0xf] %vm3412, %v3321
          %3416 = vst.msk [vmem:[#allocation3 + $0xc] sm:$0xf] %vm3412, %v3323
          %3417 = vst.msk [vmem:[#allocation3 + $0x10] sm:$0xf] %vm3412, %v3325
          %3418 = vst.msk [vmem:[#allocation3 + $0x14] sm:$0xf] %vm3412, %v3327
          %3419 = vst.msk [vmem:[#allocation3 + $0x18] sm:$0xf] %vm3412, %v3329
          %3420 = vst.msk [vmem:[#allocation3 + $0x1c] sm:$0xf] %vm3412, %v3331
          %3421 = vst.msk [vmem:[#allocation3 + $0x20] sm:$0xf] %vm3412, %v3333
          %3422 = vst.msk [vmem:[#allocation3 + $0x24] sm:$0xf] %vm3412, %v3335
          %3423 = vst.msk [vmem:[#allocation3 + $0x28] sm:$0xf] %vm3412, %v3337
          %3424 = vst.msk [vmem:[#allocation3 + $0x2c] sm:$0xf] %vm3412, %v3339
          %3425 = vst.msk [vmem:[#allocation3 + $0x30] sm:$0xf] %vm3412, %v3341
          %3426 = vst.msk [vmem:[#allocation3 + $0x34] sm:$0xf] %vm3412, %v3343
          %3427 = vst.msk [vmem:[#allocation3 + $0x38] sm:$0xf] %vm3412, %v3345
          %3428 = vst.msk [vmem:[#allocation3 + $0x3c] sm:$0xf] %vm3412, %v3347
          %3429 = vst.msk [vmem:[#allocation3 + $0x40] sm:$0xf] %vm3412, %v3349
          %3430 = vst.msk [vmem:[#allocation3 + $0x44] sm:$0xf] %vm3412, %v3351
          %3431 = vst.msk [vmem:[#allocation3 + $0x48] sm:$0xf] %vm3412, %v3353
          %3432 = vst.msk [vmem:[#allocation3 + $0x4c] sm:$0xf] %vm3412, %v3355
          %3433 = vst.msk [vmem:[#allocation3 + $0x50] sm:$0xf] %vm3412, %v3357
          %3434 = vst.msk [vmem:[#allocation3 + $0x54] sm:$0xf] %vm3412, %v3359
          %3435 = vst.msk [vmem:[#allocation3 + $0x58] sm:$0xf] %vm3412, %v3361
          %3436 = vst.msk [vmem:[#allocation3 + $0x5c] sm:$0xf] %vm3412, %v3363
          %3437 = vst.msk [vmem:[#allocation3 + $0x60] sm:$0xf] %vm3412, %v3365
          %3438 = vst.msk [vmem:[#allocation3 + $0x64] sm:$0xf] %vm3412, %v3367
          %3439 = vst.msk [vmem:[#allocation3 + $0x68] sm:$0xf] %vm3412, %v3369
          %3440 = vst.msk [vmem:[#allocation3 + $0x6c] sm:$0xf] %vm3412, %v3371
          %3441 = vst.msk [vmem:[#allocation3 + $0x70] sm:$0xf] %vm3412, %v3373
          %3442 = vst.msk [vmem:[#allocation3 + $0x74] sm:$0xf] %vm3412, %v3375
          %3443 = vst.msk [vmem:[#allocation3 + $0x78] sm:$0xf] %vm3412, %v3377
          %3444 = vst.msk [vmem:[#allocation3 + $0x7c] sm:$0xf] %vm3412, %v3379
          %s3445 = scalar_lea.vmem [#allocation2], 24
          %v3446 = vld [vmem:[%s3445] sm:$0xf]
          %v3447 = vld [vmem:[%s3445 + $0x4] sm:$0xf]
          %v3448 = vld [vmem:[%s3445 + $0xc] sm:$0xf]
          %v3449 = vld [vmem:[%s3445 + $0x10] sm:$0xf]
          %v3450 = vld [vmem:[%s3445 + $0x18] sm:$0xf]
          %v3451 = vld [vmem:[%s3445 + $0x1c] sm:$0xf]
          %v3452 = vld [vmem:[%s3445 + $0x24] sm:$0xf]
          %v3453 = vld [vmem:[%s3445 + $0x28] sm:$0xf]
          %v3454 = vld [vmem:[%s3445 + $0x30] sm:$0xf]
          %v3455 = vld [vmem:[%s3445 + $0x34] sm:$0xf]
          %v3456 = vld [vmem:[%s3445 + $0x3c] sm:$0xf]
          %v3457 = vld [vmem:[%s3445 + $0x40] sm:$0xf]
          %v3458 = vld [vmem:[%s3445 + $0x48] sm:$0xf]
          %v3459 = vld [vmem:[%s3445 + $0x4c] sm:$0xf]
          %v3460 = vld [vmem:[%s3445 + $0x54] sm:$0xf]
          %v3461 = vld [vmem:[%s3445 + $0x58] sm:$0xf]
          %v3462 = vld [vmem:[%s3445 + $0x60] sm:$0xf]
          %v3463 = vld [vmem:[%s3445 + $0x64] sm:$0xf]
          %v3464 = vld [vmem:[%s3445 + $0x6c] sm:$0xf]
          %v3465 = vld [vmem:[%s3445 + $0x70] sm:$0xf]
          %v3466 = vld [vmem:[%s3445 + $0x78] sm:$0xf]
          %v3467 = vld [vmem:[%s3445 + $0x7c] sm:$0xf]
          %v3468 = vld [vmem:[%s3445 + $0x84] sm:$0xf]
          %v3469 = vld [vmem:[%s3445 + $0x88] sm:$0xf]
          %v3470 = vld [vmem:[%s3445 + $0x90] sm:$0xf]
          %v3471 = vld [vmem:[%s3445 + $0x94] sm:$0xf]
          %v3472 = vld [vmem:[%s3445 + $0x9c] sm:$0xf]
          %v3473 = vld [vmem:[%s3445 + $0xa0] sm:$0xf]
          %v3474 = vld [vmem:[%s3445 + $0xa8] sm:$0xf]
          %v3475 = vld [vmem:[%s3445 + $0xac] sm:$0xf]
          %v3476 = vld [vmem:[%s3445 + $0xb4] sm:$0xf]
          %v3477 = vld [vmem:[%s3445 + $0xb8] sm:$0xf]
          %3510 = vrot.lane.b32.xlu0 %v3446, 48
          %v3511 = vpop.permute.xlu0 %3510
          %3512 = vrot.lane.b32.xlu0 %v3447, 48
          %v3513 = vpop.permute.xlu0 %3512
          %3514 = vrot.lane.b32.xlu0 %v3448, 48
          %v3515 = vpop.permute.xlu0 %3514
          %3516 = vrot.lane.b32.xlu0 %v3449, 48
          %v3517 = vpop.permute.xlu0 %3516
          %3518 = vrot.lane.b32.xlu0 %v3450, 48
          %v3519 = vpop.permute.xlu0 %3518
          %3520 = vrot.lane.b32.xlu0 %v3451, 48
          %v3521 = vpop.permute.xlu0 %3520
          %3522 = vrot.lane.b32.xlu0 %v3452, 48
          %v3523 = vpop.permute.xlu0 %3522
          %3524 = vrot.lane.b32.xlu0 %v3453, 48
          %v3525 = vpop.permute.xlu0 %3524
          %3526 = vrot.lane.b32.xlu0 %v3454, 48
          %v3527 = vpop.permute.xlu0 %3526
          %3528 = vrot.lane.b32.xlu0 %v3455, 48
          %v3529 = vpop.permute.xlu0 %3528
          %3530 = vrot.lane.b32.xlu0 %v3456, 48
          %v3531 = vpop.permute.xlu0 %3530
          %3532 = vrot.lane.b32.xlu0 %v3457, 48
          %v3533 = vpop.permute.xlu0 %3532
          %3534 = vrot.lane.b32.xlu0 %v3458, 48
          %v3535 = vpop.permute.xlu0 %3534
          %3536 = vrot.lane.b32.xlu0 %v3459, 48
          %v3537 = vpop.permute.xlu0 %3536
          %3538 = vrot.lane.b32.xlu0 %v3460, 48
          %v3539 = vpop.permute.xlu0 %3538
          %3540 = vrot.lane.b32.xlu0 %v3461, 48
          %v3541 = vpop.permute.xlu0 %3540
          %3542 = vrot.lane.b32.xlu0 %v3462, 48
          %v3543 = vpop.permute.xlu0 %3542
          %3544 = vrot.lane.b32.xlu0 %v3463, 48
          %v3545 = vpop.permute.xlu0 %3544
          %3546 = vrot.lane.b32.xlu0 %v3464, 48
          %v3547 = vpop.permute.xlu0 %3546
          %3548 = vrot.lane.b32.xlu0 %v3465, 48
          %v3549 = vpop.permute.xlu0 %3548
          %3550 = vrot.lane.b32.xlu0 %v3466, 48
          %v3551 = vpop.permute.xlu0 %3550
          %3552 = vrot.lane.b32.xlu0 %v3467, 48
          %v3553 = vpop.permute.xlu0 %3552
          %3554 = vrot.lane.b32.xlu0 %v3468, 48
          %v3555 = vpop.permute.xlu0 %3554
          %3556 = vrot.lane.b32.xlu0 %v3469, 48
          %v3557 = vpop.permute.xlu0 %3556
          %3558 = vrot.lane.b32.xlu0 %v3470, 48
          %v3559 = vpop.permute.xlu0 %3558
          %3560 = vrot.lane.b32.xlu0 %v3471, 48
          %v3561 = vpop.permute.xlu0 %3560
          %3562 = vrot.lane.b32.xlu0 %v3472, 48
          %v3563 = vpop.permute.xlu0 %3562
          %3564 = vrot.lane.b32.xlu0 %v3473, 48
          %v3565 = vpop.permute.xlu0 %3564
          %3566 = vrot.lane.b32.xlu0 %v3474, 48
          %v3567 = vpop.permute.xlu0 %3566
          %3568 = vrot.lane.b32.xlu0 %v3475, 48
          %v3569 = vpop.permute.xlu0 %3568
          %3570 = vrot.lane.b32.xlu0 %v3476, 48
          %v3571 = vpop.permute.xlu0 %3570
          %3572 = vrot.lane.b32.xlu0 %v3477, 48
          %v3573 = vpop.permute.xlu0 %3572
          %vm3606 = vcmask 454016
          %3607 = vst.msk [vmem:[#allocation3] sm:$0xf] %vm3606, %v3511
          %3608 = vst.msk [vmem:[#allocation3 + $0x4] sm:$0xf] %vm3606, %v3513
          %3609 = vst.msk [vmem:[#allocation3 + $0x8] sm:$0xf] %vm3606, %v3515
          %3610 = vst.msk [vmem:[#allocation3 + $0xc] sm:$0xf] %vm3606, %v3517
          %3611 = vst.msk [vmem:[#allocation3 + $0x10] sm:$0xf] %vm3606, %v3519
          %3612 = vst.msk [vmem:[#allocation3 + $0x14] sm:$0xf] %vm3606, %v3521
          %3613 = vst.msk [vmem:[#allocation3 + $0x18] sm:$0xf] %vm3606, %v3523
          %3614 = vst.msk [vmem:[#allocation3 + $0x1c] sm:$0xf] %vm3606, %v3525
          %3615 = vst.msk [vmem:[#allocation3 + $0x20] sm:$0xf] %vm3606, %v3527
          %3616 = vst.msk [vmem:[#allocation3 + $0x24] sm:$0xf] %vm3606, %v3529
          %3617 = vst.msk [vmem:[#allocation3 + $0x28] sm:$0xf] %vm3606, %v3531
          %3618 = vst.msk [vmem:[#allocation3 + $0x2c] sm:$0xf] %vm3606, %v3533
          %3619 = vst.msk [vmem:[#allocation3 + $0x30] sm:$0xf] %vm3606, %v3535
          %3620 = vst.msk [vmem:[#allocation3 + $0x34] sm:$0xf] %vm3606, %v3537
          %3621 = vst.msk [vmem:[#allocation3 + $0x38] sm:$0xf] %vm3606, %v3539
          %3622 = vst.msk [vmem:[#allocation3 + $0x3c] sm:$0xf] %vm3606, %v3541
          %3623 = vst.msk [vmem:[#allocation3 + $0x40] sm:$0xf] %vm3606, %v3543
          %3624 = vst.msk [vmem:[#allocation3 + $0x44] sm:$0xf] %vm3606, %v3545
          %3625 = vst.msk [vmem:[#allocation3 + $0x48] sm:$0xf] %vm3606, %v3547
          %3626 = vst.msk [vmem:[#allocation3 + $0x4c] sm:$0xf] %vm3606, %v3549
          %3627 = vst.msk [vmem:[#allocation3 + $0x50] sm:$0xf] %vm3606, %v3551
          %3628 = vst.msk [vmem:[#allocation3 + $0x54] sm:$0xf] %vm3606, %v3553
          %3629 = vst.msk [vmem:[#allocation3 + $0x58] sm:$0xf] %vm3606, %v3555
          %3630 = vst.msk [vmem:[#allocation3 + $0x5c] sm:$0xf] %vm3606, %v3557
          %3631 = vst.msk [vmem:[#allocation3 + $0x60] sm:$0xf] %vm3606, %v3559
          %3632 = vst.msk [vmem:[#allocation3 + $0x64] sm:$0xf] %vm3606, %v3561
          %3633 = vst.msk [vmem:[#allocation3 + $0x68] sm:$0xf] %vm3606, %v3563
          %3634 = vst.msk [vmem:[#allocation3 + $0x6c] sm:$0xf] %vm3606, %v3565
          %3635 = vst.msk [vmem:[#allocation3 + $0x70] sm:$0xf] %vm3606, %v3567
          %3636 = vst.msk [vmem:[#allocation3 + $0x74] sm:$0xf] %vm3606, %v3569
          %3637 = vst.msk [vmem:[#allocation3 + $0x78] sm:$0xf] %vm3606, %v3571
          %3638 = vst.msk [vmem:[#allocation3 + $0x7c] sm:$0xf] %vm3606, %v3573
          %v3639 = vld [vmem:[%s3445] sm:$0xf]
          %v3640 = vld [vmem:[%s3445 + $0x4] sm:$0xf]
          %v3641 = vld [vmem:[%s3445 + $0x8] sm:$0x1]
          %v3642 = vld [vmem:[%s3445 + $0xc] sm:$0xf]
          %v3643 = vld [vmem:[%s3445 + $0x10] sm:$0xf]
          %v3644 = vld [vmem:[%s3445 + $0x14] sm:$0x1]
          %v3645 = vld [vmem:[%s3445 + $0x18] sm:$0xf]
          %v3646 = vld [vmem:[%s3445 + $0x1c] sm:$0xf]
          %v3647 = vld [vmem:[%s3445 + $0x20] sm:$0x1]
          %v3648 = vld [vmem:[%s3445 + $0x24] sm:$0xf]
          %v3649 = vld [vmem:[%s3445 + $0x28] sm:$0xf]
          %v3650 = vld [vmem:[%s3445 + $0x2c] sm:$0x1]
          %v3651 = vld [vmem:[%s3445 + $0x30] sm:$0xf]
          %v3652 = vld [vmem:[%s3445 + $0x34] sm:$0xf]
          %v3653 = vld [vmem:[%s3445 + $0x38] sm:$0x1]
          %v3654 = vld [vmem:[%s3445 + $0x3c] sm:$0xf]
          %v3655 = vld [vmem:[%s3445 + $0x40] sm:$0xf]
          %v3656 = vld [vmem:[%s3445 + $0x44] sm:$0x1]
          %v3657 = vld [vmem:[%s3445 + $0x48] sm:$0xf]
          %v3658 = vld [vmem:[%s3445 + $0x4c] sm:$0xf]
          %v3659 = vld [vmem:[%s3445 + $0x50] sm:$0x1]
          %v3660 = vld [vmem:[%s3445 + $0x54] sm:$0xf]
          %v3661 = vld [vmem:[%s3445 + $0x58] sm:$0xf]
          %v3662 = vld [vmem:[%s3445 + $0x5c] sm:$0x1]
          %v3663 = vld [vmem:[%s3445 + $0x60] sm:$0xf]
          %v3664 = vld [vmem:[%s3445 + $0x64] sm:$0xf]
          %v3665 = vld [vmem:[%s3445 + $0x68] sm:$0x1]
          %v3666 = vld [vmem:[%s3445 + $0x6c] sm:$0xf]
          %v3667 = vld [vmem:[%s3445 + $0x70] sm:$0xf]
          %v3668 = vld [vmem:[%s3445 + $0x74] sm:$0x1]
          %v3669 = vld [vmem:[%s3445 + $0x78] sm:$0xf]
          %v3670 = vld [vmem:[%s3445 + $0x7c] sm:$0xf]
          %v3671 = vld [vmem:[%s3445 + $0x80] sm:$0x1]
          %v3672 = vld [vmem:[%s3445 + $0x84] sm:$0xf]
          %v3673 = vld [vmem:[%s3445 + $0x88] sm:$0xf]
          %v3674 = vld [vmem:[%s3445 + $0x8c] sm:$0x1]
          %v3675 = vld [vmem:[%s3445 + $0x90] sm:$0xf]
          %v3676 = vld [vmem:[%s3445 + $0x94] sm:$0xf]
          %v3677 = vld [vmem:[%s3445 + $0x98] sm:$0x1]
          %v3678 = vld [vmem:[%s3445 + $0x9c] sm:$0xf]
          %v3679 = vld [vmem:[%s3445 + $0xa0] sm:$0xf]
          %v3680 = vld [vmem:[%s3445 + $0xa4] sm:$0x1]
          %v3681 = vld [vmem:[%s3445 + $0xa8] sm:$0xf]
          %v3682 = vld [vmem:[%s3445 + $0xac] sm:$0xf]
          %v3683 = vld [vmem:[%s3445 + $0xb0] sm:$0x1]
          %v3684 = vld [vmem:[%s3445 + $0xb4] sm:$0xf]
          %v3685 = vld [vmem:[%s3445 + $0xb8] sm:$0xf]
          %v3686 = vld [vmem:[%s3445 + $0xbc] sm:$0x1]
          %v3688 = vshrl.u32 %v3639, 16
          %v3690 = vrot.slane %v3688, 4
          %v3691 = vshll.u32 %v3639, 16
          %v3693 = vrot.slane %v3691, 5
          %v3694 = vor.u32 %v3690, %v3693
          %v3695 = vrot.slane %v3694, 4
          %v3697 = vshll.u32 %v3640, 16
          %v3699 = vrot.slane %v3697, 5
          %v3700 = vsel %vm1500, %v3695, %v3699
          %v3701 = vshrl.u32 %v3640, 16
          %v3703 = vrot.slane %v3701, 4
          %v3704 = vor.u32 %v3703, %v3699
          %v3705 = vrot.slane %v3704, 4
          %v3707 = vshll.u32 %v3641, 16
          %v3709 = vrot.slane %v3707, 5
          %v3710 = vsel %vm1500, %v3705, %v3709
          %v3712 = vshrl.u32 %v3642, 16
          %v3714 = vrot.slane %v3712, 4
          %v3715 = vshll.u32 %v3642, 16
          %v3717 = vrot.slane %v3715, 5
          %v3718 = vor.u32 %v3714, %v3717
          %v3719 = vrot.slane %v3718, 4
          %v3721 = vshll.u32 %v3643, 16
          %v3723 = vrot.slane %v3721, 5
          %v3724 = vsel %vm1500, %v3719, %v3723
          %v3725 = vshrl.u32 %v3643, 16
          %v3727 = vrot.slane %v3725, 4
          %v3728 = vor.u32 %v3727, %v3723
          %v3729 = vrot.slane %v3728, 4
          %v3731 = vshll.u32 %v3644, 16
          %v3733 = vrot.slane %v3731, 5
          %v3734 = vsel %vm1500, %v3729, %v3733
          %v3736 = vshrl.u32 %v3645, 16
          %v3738 = vrot.slane %v3736, 4
          %v3739 = vshll.u32 %v3645, 16
          %v3741 = vrot.slane %v3739, 5
          %v3742 = vor.u32 %v3738, %v3741
          %v3743 = vrot.slane %v3742, 4
          %v3745 = vshll.u32 %v3646, 16
          %v3747 = vrot.slane %v3745, 5
          %v3748 = vsel %vm1500, %v3743, %v3747
          %v3749 = vshrl.u32 %v3646, 16
          %v3751 = vrot.slane %v3749, 4
          %v3752 = vor.u32 %v3751, %v3747
          %v3753 = vrot.slane %v3752, 4
          %v3755 = vshll.u32 %v3647, 16
          %v3757 = vrot.slane %v3755, 5
          %v3758 = vsel %vm1500, %v3753, %v3757
          %v3760 = vshrl.u32 %v3648, 16
          %v3762 = vrot.slane %v3760, 4
          %v3763 = vshll.u32 %v3648, 16
          %v3765 = vrot.slane %v3763, 5
          %v3766 = vor.u32 %v3762, %v3765
          %v3767 = vrot.slane %v3766, 4
          %v3769 = vshll.u32 %v3649, 16
          %v3771 = vrot.slane %v3769, 5
          %v3772 = vsel %vm1500, %v3767, %v3771
          %v3773 = vshrl.u32 %v3649, 16
          %v3775 = vrot.slane %v3773, 4
          %v3776 = vor.u32 %v3775, %v3771
          %v3777 = vrot.slane %v3776, 4
          %v3779 = vshll.u32 %v3650, 16
          %v3781 = vrot.slane %v3779, 5
          %v3782 = vsel %vm1500, %v3777, %v3781
          %v3784 = vshrl.u32 %v3651, 16
          %v3786 = vrot.slane %v3784, 4
          %v3787 = vshll.u32 %v3651, 16
          %v3789 = vrot.slane %v3787, 5
          %v3790 = vor.u32 %v3786, %v3789
          %v3791 = vrot.slane %v3790, 4
          %v3793 = vshll.u32 %v3652, 16
          %v3795 = vrot.slane %v3793, 5
          %v3796 = vsel %vm1500, %v3791, %v3795
          %v3797 = vshrl.u32 %v3652, 16
          %v3799 = vrot.slane %v3797, 4
          %v3800 = vor.u32 %v3799, %v3795
          %v3801 = vrot.slane %v3800, 4
          %v3803 = vshll.u32 %v3653, 16
          %v3805 = vrot.slane %v3803, 5
          %v3806 = vsel %vm1500, %v3801, %v3805
          %v3808 = vshrl.u32 %v3654, 16
          %v3810 = vrot.slane %v3808, 4
          %v3811 = vshll.u32 %v3654, 16
          %v3813 = vrot.slane %v3811, 5
          %v3814 = vor.u32 %v3810, %v3813
          %v3815 = vrot.slane %v3814, 4
          %v3817 = vshll.u32 %v3655, 16
          %v3819 = vrot.slane %v3817, 5
          %v3820 = vsel %vm1500, %v3815, %v3819
          %v3821 = vshrl.u32 %v3655, 16
          %v3823 = vrot.slane %v3821, 4
          %v3824 = vor.u32 %v3823, %v3819
          %v3825 = vrot.slane %v3824, 4
          %v3827 = vshll.u32 %v3656, 16
          %v3829 = vrot.slane %v3827, 5
          %v3830 = vsel %vm1500, %v3825, %v3829
          %v3832 = vshrl.u32 %v3657, 16
          %v3834 = vrot.slane %v3832, 4
          %v3835 = vshll.u32 %v3657, 16
          %v3837 = vrot.slane %v3835, 5
          %v3838 = vor.u32 %v3834, %v3837
          %v3839 = vrot.slane %v3838, 4
          %v3841 = vshll.u32 %v3658, 16
          %v3843 = vrot.slane %v3841, 5
          %v3844 = vsel %vm1500, %v3839, %v3843
          %v3845 = vshrl.u32 %v3658, 16
          %v3847 = vrot.slane %v3845, 4
          %v3848 = vor.u32 %v3847, %v3843
          %v3849 = vrot.slane %v3848, 4
          %v3851 = vshll.u32 %v3659, 16
          %v3853 = vrot.slane %v3851, 5
          %v3854 = vsel %vm1500, %v3849, %v3853
          %v3856 = vshrl.u32 %v3660, 16
          %v3858 = vrot.slane %v3856, 4
          %v3859 = vshll.u32 %v3660, 16
          %v3861 = vrot.slane %v3859, 5
          %v3862 = vor.u32 %v3858, %v3861
          %v3863 = vrot.slane %v3862, 4
          %v3865 = vshll.u32 %v3661, 16
          %v3867 = vrot.slane %v3865, 5
          %v3868 = vsel %vm1500, %v3863, %v3867
          %v3869 = vshrl.u32 %v3661, 16
          %v3871 = vrot.slane %v3869, 4
          %v3872 = vor.u32 %v3871, %v3867
          %v3873 = vrot.slane %v3872, 4
          %v3875 = vshll.u32 %v3662, 16
          %v3877 = vrot.slane %v3875, 5
          %v3878 = vsel %vm1500, %v3873, %v3877
          %v3880 = vshrl.u32 %v3663, 16
          %v3882 = vrot.slane %v3880, 4
          %v3883 = vshll.u32 %v3663, 16
          %v3885 = vrot.slane %v3883, 5
          %v3886 = vor.u32 %v3882, %v3885
          %v3887 = vrot.slane %v3886, 4
          %v3889 = vshll.u32 %v3664, 16
          %v3891 = vrot.slane %v3889, 5
          %v3892 = vsel %vm1500, %v3887, %v3891
          %v3893 = vshrl.u32 %v3664, 16
          %v3895 = vrot.slane %v3893, 4
          %v3896 = vor.u32 %v3895, %v3891
          %v3897 = vrot.slane %v3896, 4
          %v3899 = vshll.u32 %v3665, 16
          %v3901 = vrot.slane %v3899, 5
          %v3902 = vsel %vm1500, %v3897, %v3901
          %v3904 = vshrl.u32 %v3666, 16
          %v3906 = vrot.slane %v3904, 4
          %v3907 = vshll.u32 %v3666, 16
          %v3909 = vrot.slane %v3907, 5
          %v3910 = vor.u32 %v3906, %v3909
          %v3911 = vrot.slane %v3910, 4
          %v3913 = vshll.u32 %v3667, 16
          %v3915 = vrot.slane %v3913, 5
          %v3916 = vsel %vm1500, %v3911, %v3915
          %v3917 = vshrl.u32 %v3667, 16
          %v3919 = vrot.slane %v3917, 4
          %v3920 = vor.u32 %v3919, %v3915
          %v3921 = vrot.slane %v3920, 4
          %v3923 = vshll.u32 %v3668, 16
          %v3925 = vrot.slane %v3923, 5
          %v3926 = vsel %vm1500, %v3921, %v3925
          %v3928 = vshrl.u32 %v3669, 16
          %v3930 = vrot.slane %v3928, 4
          %v3931 = vshll.u32 %v3669, 16
          %v3933 = vrot.slane %v3931, 5
          %v3934 = vor.u32 %v3930, %v3933
          %v3935 = vrot.slane %v3934, 4
          %v3937 = vshll.u32 %v3670, 16
          %v3939 = vrot.slane %v3937, 5
          %v3940 = vsel %vm1500, %v3935, %v3939
          %v3941 = vshrl.u32 %v3670, 16
          %v3943 = vrot.slane %v3941, 4
          %v3944 = vor.u32 %v3943, %v3939
          %v3945 = vrot.slane %v3944, 4
          %v3947 = vshll.u32 %v3671, 16
          %v3949 = vrot.slane %v3947, 5
          %v3950 = vsel %vm1500, %v3945, %v3949
          %v3952 = vshrl.u32 %v3672, 16
          %v3954 = vrot.slane %v3952, 4
          %v3955 = vshll.u32 %v3672, 16
          %v3957 = vrot.slane %v3955, 5
          %v3958 = vor.u32 %v3954, %v3957
          %v3959 = vrot.slane %v3958, 4
          %v3961 = vshll.u32 %v3673, 16
          %v3963 = vrot.slane %v3961, 5
          %v3964 = vsel %vm1500, %v3959, %v3963
          %v3965 = vshrl.u32 %v3673, 16
          %v3967 = vrot.slane %v3965, 4
          %v3968 = vor.u32 %v3967, %v3963
          %v3969 = vrot.slane %v3968, 4
          %v3971 = vshll.u32 %v3674, 16
          %v3973 = vrot.slane %v3971, 5
          %v3974 = vsel %vm1500, %v3969, %v3973
          %v3976 = vshrl.u32 %v3675, 16
          %v3978 = vrot.slane %v3976, 4
          %v3979 = vshll.u32 %v3675, 16
          %v3981 = vrot.slane %v3979, 5
          %v3982 = vor.u32 %v3978, %v3981
          %v3983 = vrot.slane %v3982, 4
          %v3985 = vshll.u32 %v3676, 16
          %v3987 = vrot.slane %v3985, 5
          %v3988 = vsel %vm1500, %v3983, %v3987
          %v3989 = vshrl.u32 %v3676, 16
          %v3991 = vrot.slane %v3989, 4
          %v3992 = vor.u32 %v3991, %v3987
          %v3993 = vrot.slane %v3992, 4
          %v3995 = vshll.u32 %v3677, 16
          %v3997 = vrot.slane %v3995, 5
          %v3998 = vsel %vm1500, %v3993, %v3997
          %v4000 = vshrl.u32 %v3678, 16
          %v4002 = vrot.slane %v4000, 4
          %v4003 = vshll.u32 %v3678, 16
          %v4005 = vrot.slane %v4003, 5
          %v4006 = vor.u32 %v4002, %v4005
          %v4007 = vrot.slane %v4006, 4
          %v4009 = vshll.u32 %v3679, 16
          %v4011 = vrot.slane %v4009, 5
          %v4012 = vsel %vm1500, %v4007, %v4011
          %v4013 = vshrl.u32 %v3679, 16
          %v4015 = vrot.slane %v4013, 4
          %v4016 = vor.u32 %v4015, %v4011
          %v4017 = vrot.slane %v4016, 4
          %v4019 = vshll.u32 %v3680, 16
          %v4021 = vrot.slane %v4019, 5
          %v4022 = vsel %vm1500, %v4017, %v4021
          %v4024 = vshrl.u32 %v3681, 16
          %v4026 = vrot.slane %v4024, 4
          %v4027 = vshll.u32 %v3681, 16
          %v4029 = vrot.slane %v4027, 5
          %v4030 = vor.u32 %v4026, %v4029
          %v4031 = vrot.slane %v4030, 4
          %v4033 = vshll.u32 %v3682, 16
          %v4035 = vrot.slane %v4033, 5
          %v4036 = vsel %vm1500, %v4031, %v4035
          %v4037 = vshrl.u32 %v3682, 16
          %v4039 = vrot.slane %v4037, 4
          %v4040 = vor.u32 %v4039, %v4035
          %v4041 = vrot.slane %v4040, 4
          %v4043 = vshll.u32 %v3683, 16
          %v4045 = vrot.slane %v4043, 5
          %v4046 = vsel %vm1500, %v4041, %v4045
          %v4048 = vshrl.u32 %v3684, 16
          %v4050 = vrot.slane %v4048, 4
          %v4051 = vshll.u32 %v3684, 16
          %v4053 = vrot.slane %v4051, 5
          %v4054 = vor.u32 %v4050, %v4053
          %v4055 = vrot.slane %v4054, 4
          %v4057 = vshll.u32 %v3685, 16
          %v4059 = vrot.slane %v4057, 5
          %v4060 = vsel %vm1500, %v4055, %v4059
          %v4061 = vshrl.u32 %v3685, 16
          %v4063 = vrot.slane %v4061, 4
          %v4064 = vor.u32 %v4063, %v4059
          %v4065 = vrot.slane %v4064, 4
          %v4067 = vshll.u32 %v3686, 16
          %v4069 = vrot.slane %v4067, 5
          %v4070 = vsel %vm1500, %v4065, %v4069
          %4071 = vrot.lane.b32.xlu0 %v3700, 56
          %v4072 = vpop.permute.xlu0 %4071
          %4073 = vrot.lane.b32.xlu0 %v3710, 56
          %v4074 = vpop.permute.xlu0 %4073
          %4075 = vrot.lane.b32.xlu0 %v3724, 56
          %v4076 = vpop.permute.xlu0 %4075
          %4077 = vrot.lane.b32.xlu0 %v3734, 56
          %v4078 = vpop.permute.xlu0 %4077
          %4079 = vrot.lane.b32.xlu0 %v3748, 56
          %v4080 = vpop.permute.xlu0 %4079
          %4081 = vrot.lane.b32.xlu0 %v3758, 56
          %v4082 = vpop.permute.xlu0 %4081
          %4083 = vrot.lane.b32.xlu0 %v3772, 56
          %v4084 = vpop.permute.xlu0 %4083
          %4085 = vrot.lane.b32.xlu0 %v3782, 56
          %v4086 = vpop.permute.xlu0 %4085
          %4087 = vrot.lane.b32.xlu0 %v3796, 56
          %v4088 = vpop.permute.xlu0 %4087
          %4089 = vrot.lane.b32.xlu0 %v3806, 56
          %v4090 = vpop.permute.xlu0 %4089
          %4091 = vrot.lane.b32.xlu0 %v3820, 56
          %v4092 = vpop.permute.xlu0 %4091
          %4093 = vrot.lane.b32.xlu0 %v3830, 56
          %v4094 = vpop.permute.xlu0 %4093
          %4095 = vrot.lane.b32.xlu0 %v3844, 56
          %v4096 = vpop.permute.xlu0 %4095
          %4097 = vrot.lane.b32.xlu0 %v3854, 56
          %v4098 = vpop.permute.xlu0 %4097
          %4099 = vrot.lane.b32.xlu0 %v3868, 56
          %v4100 = vpop.permute.xlu0 %4099
          %4101 = vrot.lane.b32.xlu0 %v3878, 56
          %v4102 = vpop.permute.xlu0 %4101
          %4103 = vrot.lane.b32.xlu0 %v3892, 56
          %v4104 = vpop.permute.xlu0 %4103
          %4105 = vrot.lane.b32.xlu0 %v3902, 56
          %v4106 = vpop.permute.xlu0 %4105
          %4107 = vrot.lane.b32.xlu0 %v3916, 56
          %v4108 = vpop.permute.xlu0 %4107
          %4109 = vrot.lane.b32.xlu0 %v3926, 56
          %v4110 = vpop.permute.xlu0 %4109
          %4111 = vrot.lane.b32.xlu0 %v3940, 56
          %v4112 = vpop.permute.xlu0 %4111
          %4113 = vrot.lane.b32.xlu0 %v3950, 56
          %v4114 = vpop.permute.xlu0 %4113
          %4115 = vrot.lane.b32.xlu0 %v3964, 56
          %v4116 = vpop.permute.xlu0 %4115
          %4117 = vrot.lane.b32.xlu0 %v3974, 56
          %v4118 = vpop.permute.xlu0 %4117
          %4119 = vrot.lane.b32.xlu0 %v3988, 56
          %v4120 = vpop.permute.xlu0 %4119
          %4121 = vrot.lane.b32.xlu0 %v3998, 56
          %v4122 = vpop.permute.xlu0 %4121
          %4123 = vrot.lane.b32.xlu0 %v4012, 56
          %v4124 = vpop.permute.xlu0 %4123
          %4125 = vrot.lane.b32.xlu0 %v4022, 56
          %v4126 = vpop.permute.xlu0 %4125
          %4127 = vrot.lane.b32.xlu0 %v4036, 56
          %v4128 = vpop.permute.xlu0 %4127
          %4129 = vrot.lane.b32.xlu0 %v4046, 56
          %v4130 = vpop.permute.xlu0 %4129
          %4131 = vrot.lane.b32.xlu0 %v4060, 56
          %v4132 = vpop.permute.xlu0 %4131
          %4133 = vrot.lane.b32.xlu0 %v4070, 56
          %v4134 = vpop.permute.xlu0 %4133
          %vm4167 = vcmask 519616
          %4168 = vst.msk [vmem:[#allocation3] sm:$0xf] %vm4167, %v4072
          %4169 = vst.msk [vmem:[#allocation3 + $0x4] sm:$0xf] %vm4167, %v4074
          %4170 = vst.msk [vmem:[#allocation3 + $0x8] sm:$0xf] %vm4167, %v4076
          %4171 = vst.msk [vmem:[#allocation3 + $0xc] sm:$0xf] %vm4167, %v4078
          %4172 = vst.msk [vmem:[#allocation3 + $0x10] sm:$0xf] %vm4167, %v4080
          %4173 = vst.msk [vmem:[#allocation3 + $0x14] sm:$0xf] %vm4167, %v4082
          %4174 = vst.msk [vmem:[#allocation3 + $0x18] sm:$0xf] %vm4167, %v4084
          %4175 = vst.msk [vmem:[#allocation3 + $0x1c] sm:$0xf] %vm4167, %v4086
          %4176 = vst.msk [vmem:[#allocation3 + $0x20] sm:$0xf] %vm4167, %v4088
          %4177 = vst.msk [vmem:[#allocation3 + $0x24] sm:$0xf] %vm4167, %v4090
          %4178 = vst.msk [vmem:[#allocation3 + $0x28] sm:$0xf] %vm4167, %v4092
          %4179 = vst.msk [vmem:[#allocation3 + $0x2c] sm:$0xf] %vm4167, %v4094
          %4180 = vst.msk [vmem:[#allocation3 + $0x30] sm:$0xf] %vm4167, %v4096
          %4181 = vst.msk [vmem:[#allocation3 + $0x34] sm:$0xf] %vm4167, %v4098
          %4182 = vst.msk [vmem:[#allocation3 + $0x38] sm:$0xf] %vm4167, %v4100
          %4183 = vst.msk [vmem:[#allocation3 + $0x3c] sm:$0xf] %vm4167, %v4102
          %4184 = vst.msk [vmem:[#allocation3 + $0x40] sm:$0xf] %vm4167, %v4104
          %4185 = vst.msk [vmem:[#allocation3 + $0x44] sm:$0xf] %vm4167, %v4106
          %4186 = vst.msk [vmem:[#allocation3 + $0x48] sm:$0xf] %vm4167, %v4108
          %4187 = vst.msk [vmem:[#allocation3 + $0x4c] sm:$0xf] %vm4167, %v4110
          %4188 = vst.msk [vmem:[#allocation3 + $0x50] sm:$0xf] %vm4167, %v4112
          %4189 = vst.msk [vmem:[#allocation3 + $0x54] sm:$0xf] %vm4167, %v4114
          %4190 = vst.msk [vmem:[#allocation3 + $0x58] sm:$0xf] %vm4167, %v4116
          %4191 = vst.msk [vmem:[#allocation3 + $0x5c] sm:$0xf] %vm4167, %v4118
          %4192 = vst.msk [vmem:[#allocation3 + $0x60] sm:$0xf] %vm4167, %v4120
          %4193 = vst.msk [vmem:[#allocation3 + $0x64] sm:$0xf] %vm4167, %v4122
          %4194 = vst.msk [vmem:[#allocation3 + $0x68] sm:$0xf] %vm4167, %v4124
          %4195 = vst.msk [vmem:[#allocation3 + $0x6c] sm:$0xf] %vm4167, %v4126
          %4196 = vst.msk [vmem:[#allocation3 + $0x70] sm:$0xf] %vm4167, %v4128
          %4197 = vst.msk [vmem:[#allocation3 + $0x74] sm:$0xf] %vm4167, %v4130
          %4198 = vst.msk [vmem:[#allocation3 + $0x78] sm:$0xf] %vm4167, %v4132
          %4199 = vst.msk [vmem:[#allocation3 + $0x7c] sm:$0xf] %vm4167, %v4134
          %v4200 = vld [vmem:[%s3445] sm:$0xe]
          %v4201 = vld [vmem:[%s3445 + $0x4] sm:$0xf]
          %v4202 = vld [vmem:[%s3445 + $0x8] sm:$0x1]
          %v4203 = vld [vmem:[%s3445 + $0xc] sm:$0xe]
          %v4204 = vld [vmem:[%s3445 + $0x10] sm:$0xf]
          %v4205 = vld [vmem:[%s3445 + $0x14] sm:$0x1]
          %v4206 = vld [vmem:[%s3445 + $0x18] sm:$0xe]
          %v4207 = vld [vmem:[%s3445 + $0x1c] sm:$0xf]
          %v4208 = vld [vmem:[%s3445 + $0x20] sm:$0x1]
          %v4209 = vld [vmem:[%s3445 + $0x24] sm:$0xe]
          %v4210 = vld [vmem:[%s3445 + $0x28] sm:$0xf]
          %v4211 = vld [vmem:[%s3445 + $0x2c] sm:$0x1]
          %v4212 = vld [vmem:[%s3445 + $0x30] sm:$0xe]
          %v4213 = vld [vmem:[%s3445 + $0x34] sm:$0xf]
          %v4214 = vld [vmem:[%s3445 + $0x38] sm:$0x1]
          %v4215 = vld [vmem:[%s3445 + $0x3c] sm:$0xe]
          %v4216 = vld [vmem:[%s3445 + $0x40] sm:$0xf]
          %v4217 = vld [vmem:[%s3445 + $0x44] sm:$0x1]
          %v4218 = vld [vmem:[%s3445 + $0x48] sm:$0xe]
          %v4219 = vld [vmem:[%s3445 + $0x4c] sm:$0xf]
          %v4220 = vld [vmem:[%s3445 + $0x50] sm:$0x1]
          %v4221 = vld [vmem:[%s3445 + $0x54] sm:$0xe]
          %v4222 = vld [vmem:[%s3445 + $0x58] sm:$0xf]
          %v4223 = vld [vmem:[%s3445 + $0x5c] sm:$0x1]
          %v4224 = vld [vmem:[%s3445 + $0x60] sm:$0xe]
          %v4225 = vld [vmem:[%s3445 + $0x64] sm:$0xf]
          %v4226 = vld [vmem:[%s3445 + $0x68] sm:$0x1]
          %v4227 = vld [vmem:[%s3445 + $0x6c] sm:$0xe]
          %v4228 = vld [vmem:[%s3445 + $0x70] sm:$0xf]
          %v4229 = vld [vmem:[%s3445 + $0x74] sm:$0x1]
          %v4230 = vld [vmem:[%s3445 + $0x78] sm:$0xe]
          %v4231 = vld [vmem:[%s3445 + $0x7c] sm:$0xf]
          %v4232 = vld [vmem:[%s3445 + $0x80] sm:$0x1]
          %v4233 = vld [vmem:[%s3445 + $0x84] sm:$0xe]
          %v4234 = vld [vmem:[%s3445 + $0x88] sm:$0xf]
          %v4235 = vld [vmem:[%s3445 + $0x8c] sm:$0x1]
          %v4236 = vld [vmem:[%s3445 + $0x90] sm:$0xe]
          %v4237 = vld [vmem:[%s3445 + $0x94] sm:$0xf]
          %v4238 = vld [vmem:[%s3445 + $0x98] sm:$0x1]
          %v4239 = vld [vmem:[%s3445 + $0x9c] sm:$0xe]
          %v4240 = vld [vmem:[%s3445 + $0xa0] sm:$0xf]
          %v4241 = vld [vmem:[%s3445 + $0xa4] sm:$0x1]
          %v4242 = vld [vmem:[%s3445 + $0xa8] sm:$0xe]
          %v4243 = vld [vmem:[%s3445 + $0xac] sm:$0xf]
          %v4244 = vld [vmem:[%s3445 + $0xb0] sm:$0x1]
          %v4245 = vld [vmem:[%s3445 + $0xb4] sm:$0xe]
          %v4246 = vld [vmem:[%s3445 + $0xb8] sm:$0xf]
          %v4247 = vld [vmem:[%s3445 + $0xbc] sm:$0x1]
          %v4296 = vrot.slane %v4200, 5
          %v4297 = vrot.slane %v4296, 4
          %v4298 = vrot.slane %v4201, 5
          %v4299 = vsel %vm2112, %v4297, %v4298
          %v4300 = vrot.slane %v4298, 4
          %v4301 = vrot.slane %v4202, 5
          %v4302 = vsel %vm2112, %v4300, %v4301
          %v4303 = vrot.slane %v4203, 5
          %v4304 = vrot.slane %v4303, 4
          %v4305 = vrot.slane %v4204, 5
          %v4306 = vsel %vm2112, %v4304, %v4305
          %v4307 = vrot.slane %v4305, 4
          %v4308 = vrot.slane %v4205, 5
          %v4309 = vsel %vm2112, %v4307, %v4308
          %v4310 = vrot.slane %v4206, 5
          %v4311 = vrot.slane %v4310, 4
          %v4312 = vrot.slane %v4207, 5
          %v4313 = vsel %vm2112, %v4311, %v4312
          %v4314 = vrot.slane %v4312, 4
          %v4315 = vrot.slane %v4208, 5
          %v4316 = vsel %vm2112, %v4314, %v4315
          %v4317 = vrot.slane %v4209, 5
          %v4318 = vrot.slane %v4317, 4
          %v4319 = vrot.slane %v4210, 5
          %v4320 = vsel %vm2112, %v4318, %v4319
          %v4321 = vrot.slane %v4319, 4
          %v4322 = vrot.slane %v4211, 5
          %v4323 = vsel %vm2112, %v4321, %v4322
          %v4324 = vrot.slane %v4212, 5
          %v4325 = vrot.slane %v4324, 4
          %v4326 = vrot.slane %v4213, 5
          %v4327 = vsel %vm2112, %v4325, %v4326
          %v4328 = vrot.slane %v4326, 4
          %v4329 = vrot.slane %v4214, 5
          %v4330 = vsel %vm2112, %v4328, %v4329
          %v4331 = vrot.slane %v4215, 5
          %v4332 = vrot.slane %v4331, 4
          %v4333 = vrot.slane %v4216, 5
          %v4334 = vsel %vm2112, %v4332, %v4333
          %v4335 = vrot.slane %v4333, 4
          %v4336 = vrot.slane %v4217, 5
          %v4337 = vsel %vm2112, %v4335, %v4336
          %v4338 = vrot.slane %v4218, 5
          %v4339 = vrot.slane %v4338, 4
          %v4340 = vrot.slane %v4219, 5
          %v4341 = vsel %vm2112, %v4339, %v4340
          %v4342 = vrot.slane %v4340, 4
          %v4343 = vrot.slane %v4220, 5
          %v4344 = vsel %vm2112, %v4342, %v4343
          %v4345 = vrot.slane %v4221, 5
          %v4346 = vrot.slane %v4345, 4
          %v4347 = vrot.slane %v4222, 5
          %v4348 = vsel %vm2112, %v4346, %v4347
          %v4349 = vrot.slane %v4347, 4
          %v4350 = vrot.slane %v4223, 5
          %v4351 = vsel %vm2112, %v4349, %v4350
          %v4352 = vrot.slane %v4224, 5
          %v4353 = vrot.slane %v4352, 4
          %v4354 = vrot.slane %v4225, 5
          %v4355 = vsel %vm2112, %v4353, %v4354
          %v4356 = vrot.slane %v4354, 4
          %v4357 = vrot.slane %v4226, 5
          %v4358 = vsel %vm2112, %v4356, %v4357
          %v4359 = vrot.slane %v4227, 5
          %v4360 = vrot.slane %v4359, 4
          %v4361 = vrot.slane %v4228, 5
          %v4362 = vsel %vm2112, %v4360, %v4361
          %v4363 = vrot.slane %v4361, 4
          %v4364 = vrot.slane %v4229, 5
          %v4365 = vsel %vm2112, %v4363, %v4364
          %v4366 = vrot.slane %v4230, 5
          %v4367 = vrot.slane %v4366, 4
          %v4368 = vrot.slane %v4231, 5
          %v4369 = vsel %vm2112, %v4367, %v4368
          %v4370 = vrot.slane %v4368, 4
          %v4371 = vrot.slane %v4232, 5
          %v4372 = vsel %vm2112, %v4370, %v4371
          %v4373 = vrot.slane %v4233, 5
          %v4374 = vrot.slane %v4373, 4
          %v4375 = vrot.slane %v4234, 5
          %v4376 = vsel %vm2112, %v4374, %v4375
          %v4377 = vrot.slane %v4375, 4
          %v4378 = vrot.slane %v4235, 5
          %v4379 = vsel %vm2112, %v4377, %v4378
          %v4380 = vrot.slane %v4236, 5
          %v4381 = vrot.slane %v4380, 4
          %v4382 = vrot.slane %v4237, 5
          %v4383 = vsel %vm2112, %v4381, %v4382
          %v4384 = vrot.slane %v4382, 4
          %v4385 = vrot.slane %v4238, 5
          %v4386 = vsel %vm2112, %v4384, %v4385
          %v4387 = vrot.slane %v4239, 5
          %v4388 = vrot.slane %v4387, 4
          %v4389 = vrot.slane %v4240, 5
          %v4390 = vsel %vm2112, %v4388, %v4389
          %v4391 = vrot.slane %v4389, 4
          %v4392 = vrot.slane %v4241, 5
          %v4393 = vsel %vm2112, %v4391, %v4392
          %v4394 = vrot.slane %v4242, 5
          %v4395 = vrot.slane %v4394, 4
          %v4396 = vrot.slane %v4243, 5
          %v4397 = vsel %vm2112, %v4395, %v4396
          %v4398 = vrot.slane %v4396, 4
          %v4399 = vrot.slane %v4244, 5
          %v4400 = vsel %vm2112, %v4398, %v4399
          %v4401 = vrot.slane %v4245, 5
          %v4402 = vrot.slane %v4401, 4
          %v4403 = vrot.slane %v4246, 5
          %v4404 = vsel %vm2112, %v4402, %v4403
          %v4405 = vrot.slane %v4403, 4
          %v4406 = vrot.slane %v4247, 5
          %v4407 = vsel %vm2112, %v4405, %v4406
          %4408 = vrot.lane.b32.xlu0 %v4299, 64
          %v4409 = vpop.permute.xlu0 %4408
          %4410 = vrot.lane.b32.xlu0 %v4302, 64
          %v4411 = vpop.permute.xlu0 %4410
          %4412 = vrot.lane.b32.xlu0 %v4306, 64
          %v4413 = vpop.permute.xlu0 %4412
          %4414 = vrot.lane.b32.xlu0 %v4309, 64
          %v4415 = vpop.permute.xlu0 %4414
          %4416 = vrot.lane.b32.xlu0 %v4313, 64
          %v4417 = vpop.permute.xlu0 %4416
          %4418 = vrot.lane.b32.xlu0 %v4316, 64
          %v4419 = vpop.permute.xlu0 %4418
          %4420 = vrot.lane.b32.xlu0 %v4320, 64
          %v4421 = vpop.permute.xlu0 %4420
          %4422 = vrot.lane.b32.xlu0 %v4323, 64
          %v4423 = vpop.permute.xlu0 %4422
          %4424 = vrot.lane.b32.xlu0 %v4327, 64
          %v4425 = vpop.permute.xlu0 %4424
          %4426 = vrot.lane.b32.xlu0 %v4330, 64
          %v4427 = vpop.permute.xlu0 %4426
          %4428 = vrot.lane.b32.xlu0 %v4334, 64
          %v4429 = vpop.permute.xlu0 %4428
          %4430 = vrot.lane.b32.xlu0 %v4337, 64
          %v4431 = vpop.permute.xlu0 %4430
          %4432 = vrot.lane.b32.xlu0 %v4341, 64
          %v4433 = vpop.permute.xlu0 %4432
          %4434 = vrot.lane.b32.xlu0 %v4344, 64
          %v4435 = vpop.permute.xlu0 %4434
          %4436 = vrot.lane.b32.xlu0 %v4348, 64
          %v4437 = vpop.permute.xlu0 %4436
          %4438 = vrot.lane.b32.xlu0 %v4351, 64
          %v4439 = vpop.permute.xlu0 %4438
          %4440 = vrot.lane.b32.xlu0 %v4355, 64
          %v4441 = vpop.permute.xlu0 %4440
          %4442 = vrot.lane.b32.xlu0 %v4358, 64
          %v4443 = vpop.permute.xlu0 %4442
          %4444 = vrot.lane.b32.xlu0 %v4362, 64
          %v4445 = vpop.permute.xlu0 %4444
          %4446 = vrot.lane.b32.xlu0 %v4365, 64
          %v4447 = vpop.permute.xlu0 %4446
          %4448 = vrot.lane.b32.xlu0 %v4369, 64
          %v4449 = vpop.permute.xlu0 %4448
          %4450 = vrot.lane.b32.xlu0 %v4372, 64
          %v4451 = vpop.permute.xlu0 %4450
          %4452 = vrot.lane.b32.xlu0 %v4376, 64
          %v4453 = vpop.permute.xlu0 %4452
          %4454 = vrot.lane.b32.xlu0 %v4379, 64
          %v4455 = vpop.permute.xlu0 %4454
          %4456 = vrot.lane.b32.xlu0 %v4383, 64
          %v4457 = vpop.permute.xlu0 %4456
          %4458 = vrot.lane.b32.xlu0 %v4386, 64
          %v4459 = vpop.permute.xlu0 %4458
          %4460 = vrot.lane.b32.xlu0 %v4390, 64
          %v4461 = vpop.permute.xlu0 %4460
          %4462 = vrot.lane.b32.xlu0 %v4393, 64
          %v4463 = vpop.permute.xlu0 %4462
          %4464 = vrot.lane.b32.xlu0 %v4397, 64
          %v4465 = vpop.permute.xlu0 %4464
          %4466 = vrot.lane.b32.xlu0 %v4400, 64
          %v4467 = vpop.permute.xlu0 %4466
          %4468 = vrot.lane.b32.xlu0 %v4404, 64
          %v4469 = vpop.permute.xlu0 %4468
          %4470 = vrot.lane.b32.xlu0 %v4407, 64
          %v4471 = vpop.permute.xlu0 %4470
          %vm4504 = vcmask 585216
          %4505 = vst.msk [vmem:[#allocation3] sm:$0xf] %vm4504, %v4409
          %4506 = vst.msk [vmem:[#allocation3 + $0x4] sm:$0xf] %vm4504, %v4411
          %4507 = vst.msk [vmem:[#allocation3 + $0x8] sm:$0xf] %vm4504, %v4413
          %4508 = vst.msk [vmem:[#allocation3 + $0xc] sm:$0xf] %vm4504, %v4415
          %4509 = vst.msk [vmem:[#allocation3 + $0x10] sm:$0xf] %vm4504, %v4417
          %4510 = vst.msk [vmem:[#allocation3 + $0x14] sm:$0xf] %vm4504, %v4419
          %4511 = vst.msk [vmem:[#allocation3 + $0x18] sm:$0xf] %vm4504, %v4421
          %4512 = vst.msk [vmem:[#allocation3 + $0x1c] sm:$0xf] %vm4504, %v4423
          %4513 = vst.msk [vmem:[#allocation3 + $0x20] sm:$0xf] %vm4504, %v4425
          %4514 = vst.msk [vmem:[#allocation3 + $0x24] sm:$0xf] %vm4504, %v4427
          %4515 = vst.msk [vmem:[#allocation3 + $0x28] sm:$0xf] %vm4504, %v4429
          %4516 = vst.msk [vmem:[#allocation3 + $0x2c] sm:$0xf] %vm4504, %v4431
          %4517 = vst.msk [vmem:[#allocation3 + $0x30] sm:$0xf] %vm4504, %v4433
          %4518 = vst.msk [vmem:[#allocation3 + $0x34] sm:$0xf] %vm4504, %v4435
          %4519 = vst.msk [vmem:[#allocation3 + $0x38] sm:$0xf] %vm4504, %v4437
          %4520 = vst.msk [vmem:[#allocation3 + $0x3c] sm:$0xf] %vm4504, %v4439
          %4521 = vst.msk [vmem:[#allocation3 + $0x40] sm:$0xf] %vm4504, %v4441
          %4522 = vst.msk [vmem:[#allocation3 + $0x44] sm:$0xf] %vm4504, %v4443
          %4523 = vst.msk [vmem:[#allocation3 + $0x48] sm:$0xf] %vm4504, %v4445
          %4524 = vst.msk [vmem:[#allocation3 + $0x4c] sm:$0xf] %vm4504, %v4447
          %4525 = vst.msk [vmem:[#allocation3 + $0x50] sm:$0xf] %vm4504, %v4449
          %4526 = vst.msk [vmem:[#allocation3 + $0x54] sm:$0xf] %vm4504, %v4451
          %4527 = vst.msk [vmem:[#allocation3 + $0x58] sm:$0xf] %vm4504, %v4453
          %4528 = vst.msk [vmem:[#allocation3 + $0x5c] sm:$0xf] %vm4504, %v4455
          %4529 = vst.msk [vmem:[#allocation3 + $0x60] sm:$0xf] %vm4504, %v4457
          %4530 = vst.msk [vmem:[#allocation3 + $0x64] sm:$0xf] %vm4504, %v4459
          %4531 = vst.msk [vmem:[#allocation3 + $0x68] sm:$0xf] %vm4504, %v4461
          %4532 = vst.msk [vmem:[#allocation3 + $0x6c] sm:$0xf] %vm4504, %v4463
          %4533 = vst.msk [vmem:[#allocation3 + $0x70] sm:$0xf] %vm4504, %v4465
          %4534 = vst.msk [vmem:[#allocation3 + $0x74] sm:$0xf] %vm4504, %v4467
          %4535 = vst.msk [vmem:[#allocation3 + $0x78] sm:$0xf] %vm4504, %v4469
          %4536 = vst.msk [vmem:[#allocation3 + $0x7c] sm:$0xf] %vm4504, %v4471
          %v4537 = vld [vmem:[%s314] sm:$0xff]
          %v4538 = vld [vmem:[%s314 + $0x8] sm:$0xff]
          %v4539 = vld [vmem:[%s314 + $0x10] sm:$0xff]
          %v4540 = vld [vmem:[%s314 + $0x18] sm:$0xff]
          %v4541 = vld [vmem:[%s314 + $0x20] sm:$0xff]
          %v4542 = vld [vmem:[%s314 + $0x28] sm:$0xff]
          %v4543 = vld [vmem:[%s314 + $0x30] sm:$0xff]
          %v4544 = vld [vmem:[%s314 + $0x38] sm:$0xff]
          %v4545 = vld [vmem:[%s314 + $0x40] sm:$0xff]
          %v4546 = vld [vmem:[%s314 + $0x48] sm:$0xff]
          %v4547 = vld [vmem:[%s314 + $0x50] sm:$0xff]
          %v4548 = vld [vmem:[%s314 + $0x58] sm:$0xff]
          %v4549 = vld [vmem:[%s314 + $0x60] sm:$0xff]
          %v4550 = vld [vmem:[%s314 + $0x68] sm:$0xff]
          %v4551 = vld [vmem:[%s314 + $0x70] sm:$0xff]
          %v4552 = vld [vmem:[%s314 + $0x78] sm:$0xff]
          %v4553 = vld [vmem:[%s314 + $0x80] sm:$0xff]
          %v4554 = vld [vmem:[%s314 + $0x88] sm:$0xff]
          %v4555 = vld [vmem:[%s314 + $0x90] sm:$0xff]
          %v4556 = vld [vmem:[%s314 + $0x98] sm:$0xff]
          %v4557 = vld [vmem:[%s314 + $0xa0] sm:$0xff]
          %v4558 = vld [vmem:[%s314 + $0xa8] sm:$0xff]
          %v4559 = vld [vmem:[%s314 + $0xb0] sm:$0xff]
          %v4560 = vld [vmem:[%s314 + $0xb8] sm:$0xff]
          %v4561 = vld [vmem:[%s314 + $0xc0] sm:$0xff]
          %v4562 = vld [vmem:[%s314 + $0xc8] sm:$0xff]
          %v4563 = vld [vmem:[%s314 + $0xd0] sm:$0xff]
          %v4564 = vld [vmem:[%s314 + $0xd8] sm:$0xff]
          %v4565 = vld [vmem:[%s314 + $0xe0] sm:$0xff]
          %v4566 = vld [vmem:[%s314 + $0xe8] sm:$0xff]
          %v4567 = vld [vmem:[%s314 + $0xf0] sm:$0xff]
          %v4568 = vld [vmem:[%s314 + $0xf8] sm:$0xff]
          %v4569 = vpack.c.bf16 %v4537, %v4537
          %v4570 = vpack.c.bf16 %v4538, %v4538
          %v4571 = vpack.c.bf16 %v4539, %v4539
          %v4572 = vpack.c.bf16 %v4540, %v4540
          %v4573 = vpack.c.bf16 %v4541, %v4541
          %v4574 = vpack.c.bf16 %v4542, %v4542
          %v4575 = vpack.c.bf16 %v4543, %v4543
          %v4576 = vpack.c.bf16 %v4544, %v4544
          %v4577 = vpack.c.bf16 %v4545, %v4545
          %v4578 = vpack.c.bf16 %v4546, %v4546
          %v4579 = vpack.c.bf16 %v4547, %v4547
          %v4580 = vpack.c.bf16 %v4548, %v4548
          %v4581 = vpack.c.bf16 %v4549, %v4549
          %v4582 = vpack.c.bf16 %v4550, %v4550
          %v4583 = vpack.c.bf16 %v4551, %v4551
          %v4584 = vpack.c.bf16 %v4552, %v4552
          %v4585 = vpack.c.bf16 %v4553, %v4553
          %v4586 = vpack.c.bf16 %v4554, %v4554
          %v4587 = vpack.c.bf16 %v4555, %v4555
          %v4588 = vpack.c.bf16 %v4556, %v4556
          %v4589 = vpack.c.bf16 %v4557, %v4557
          %v4590 = vpack.c.bf16 %v4558, %v4558
          %v4591 = vpack.c.bf16 %v4559, %v4559
          %v4592 = vpack.c.bf16 %v4560, %v4560
          %v4593 = vpack.c.bf16 %v4561, %v4561
          %v4594 = vpack.c.bf16 %v4562, %v4562
          %v4595 = vpack.c.bf16 %v4563, %v4563
          %v4596 = vpack.c.bf16 %v4564, %v4564
          %v4597 = vpack.c.bf16 %v4565, %v4565
          %v4598 = vpack.c.bf16 %v4566, %v4566
          %v4599 = vpack.c.bf16 %v4567, %v4567
          %v4600 = vpack.c.bf16 %v4568, %v4568
          %4633 = vrot.lane.b32.xlu0 %v4569, 72
          %v4634 = vpop.permute.xlu0 %4633
          %4635 = vrot.lane.b32.xlu0 %v4570, 72
          %v4636 = vpop.permute.xlu0 %4635
          %4637 = vrot.lane.b32.xlu0 %v4571, 72
          %v4638 = vpop.permute.xlu0 %4637
          %4639 = vrot.lane.b32.xlu0 %v4572, 72
          %v4640 = vpop.permute.xlu0 %4639
          %4641 = vrot.lane.b32.xlu0 %v4573, 72
          %v4642 = vpop.permute.xlu0 %4641
          %4643 = vrot.lane.b32.xlu0 %v4574, 72
          %v4644 = vpop.permute.xlu0 %4643
          %4645 = vrot.lane.b32.xlu0 %v4575, 72
          %v4646 = vpop.permute.xlu0 %4645
          %4647 = vrot.lane.b32.xlu0 %v4576, 72
          %v4648 = vpop.permute.xlu0 %4647
          %4649 = vrot.lane.b32.xlu0 %v4577, 72
          %v4650 = vpop.permute.xlu0 %4649
          %4651 = vrot.lane.b32.xlu0 %v4578, 72
          %v4652 = vpop.permute.xlu0 %4651
          %4653 = vrot.lane.b32.xlu0 %v4579, 72
          %v4654 = vpop.permute.xlu0 %4653
          %4655 = vrot.lane.b32.xlu0 %v4580, 72
          %v4656 = vpop.permute.xlu0 %4655
          %4657 = vrot.lane.b32.xlu0 %v4581, 72
          %v4658 = vpop.permute.xlu0 %4657
          %4659 = vrot.lane.b32.xlu0 %v4582, 72
          %v4660 = vpop.permute.xlu0 %4659
          %4661 = vrot.lane.b32.xlu0 %v4583, 72
          %v4662 = vpop.permute.xlu0 %4661
          %4663 = vrot.lane.b32.xlu0 %v4584, 72
          %v4664 = vpop.permute.xlu0 %4663
          %4665 = vrot.lane.b32.xlu0 %v4585, 72
          %v4666 = vpop.permute.xlu0 %4665
          %4667 = vrot.lane.b32.xlu0 %v4586, 72
          %v4668 = vpop.permute.xlu0 %4667
          %4669 = vrot.lane.b32.xlu0 %v4587, 72
          %v4670 = vpop.permute.xlu0 %4669
          %4671 = vrot.lane.b32.xlu0 %v4588, 72
          %v4672 = vpop.permute.xlu0 %4671
          %4673 = vrot.lane.b32.xlu0 %v4589, 72
          %v4674 = vpop.permute.xlu0 %4673
          %4675 = vrot.lane.b32.xlu0 %v4590, 72
          %v4676 = vpop.permute.xlu0 %4675
          %4677 = vrot.lane.b32.xlu0 %v4591, 72
          %v4678 = vpop.permute.xlu0 %4677
          %4679 = vrot.lane.b32.xlu0 %v4592, 72
          %v4680 = vpop.permute.xlu0 %4679
          %4681 = vrot.lane.b32.xlu0 %v4593, 72
          %v4682 = vpop.permute.xlu0 %4681
          %4683 = vrot.lane.b32.xlu0 %v4594, 72
          %v4684 = vpop.permute.xlu0 %4683
          %4685 = vrot.lane.b32.xlu0 %v4595, 72
          %v4686 = vpop.permute.xlu0 %4685
          %4687 = vrot.lane.b32.xlu0 %v4596, 72
          %v4688 = vpop.permute.xlu0 %4687
          %4689 = vrot.lane.b32.xlu0 %v4597, 72
          %v4690 = vpop.permute.xlu0 %4689
          %4691 = vrot.lane.b32.xlu0 %v4598, 72
          %v4692 = vpop.permute.xlu0 %4691
          %4693 = vrot.lane.b32.xlu0 %v4599, 72
          %v4694 = vpop.permute.xlu0 %4693
          %4695 = vrot.lane.b32.xlu0 %v4600, 72
          %v4696 = vpop.permute.xlu0 %4695
          %vm4729 = vcmask 650816
          %4730 = vst.msk [vmem:[#allocation3] sm:$0xf] %vm4729, %v4634
          %4731 = vst.msk [vmem:[#allocation3 + $0x4] sm:$0xf] %vm4729, %v4636
          %4732 = vst.msk [vmem:[#allocation3 + $0x8] sm:$0xf] %vm4729, %v4638
          %4733 = vst.msk [vmem:[#allocation3 + $0xc] sm:$0xf] %vm4729, %v4640
          %4734 = vst.msk [vmem:[#allocation3 + $0x10] sm:$0xf] %vm4729, %v4642
          %4735 = vst.msk [vmem:[#allocation3 + $0x14] sm:$0xf] %vm4729, %v4644
          %4736 = vst.msk [vmem:[#allocation3 + $0x18] sm:$0xf] %vm4729, %v4646
          %4737 = vst.msk [vmem:[#allocation3 + $0x1c] sm:$0xf] %vm4729, %v4648
          %4738 = vst.msk [vmem:[#allocation3 + $0x20] sm:$0xf] %vm4729, %v4650
          %4739 = vst.msk [vmem:[#allocation3 + $0x24] sm:$0xf] %vm4729, %v4652
          %4740 = vst.msk [vmem:[#allocation3 + $0x28] sm:$0xf] %vm4729, %v4654
          %4741 = vst.msk [vmem:[#allocation3 + $0x2c] sm:$0xf] %vm4729, %v4656
          %4742 = vst.msk [vmem:[#allocation3 + $0x30] sm:$0xf] %vm4729, %v4658
          %4743 = vst.msk [vmem:[#allocation3 + $0x34] sm:$0xf] %vm4729, %v4660
          %4744 = vst.msk [vmem:[#allocation3 + $0x38] sm:$0xf] %vm4729, %v4662
          %4745 = vst.msk [vmem:[#allocation3 + $0x3c] sm:$0xf] %vm4729, %v4664
          %4746 = vst.msk [vmem:[#allocation3 + $0x40] sm:$0xf] %vm4729, %v4666
          %4747 = vst.msk [vmem:[#allocation3 + $0x44] sm:$0xf] %vm4729, %v4668
          %4748 = vst.msk [vmem:[#allocation3 + $0x48] sm:$0xf] %vm4729, %v4670
          %4749 = vst.msk [vmem:[#allocation3 + $0x4c] sm:$0xf] %vm4729, %v4672
          %4750 = vst.msk [vmem:[#allocation3 + $0x50] sm:$0xf] %vm4729, %v4674
          %4751 = vst.msk [vmem:[#allocation3 + $0x54] sm:$0xf] %vm4729, %v4676
          %4752 = vst.msk [vmem:[#allocation3 + $0x58] sm:$0xf] %vm4729, %v4678
          %4753 = vst.msk [vmem:[#allocation3 + $0x5c] sm:$0xf] %vm4729, %v4680
          %4754 = vst.msk [vmem:[#allocation3 + $0x60] sm:$0xf] %vm4729, %v4682
          %4755 = vst.msk [vmem:[#allocation3 + $0x64] sm:$0xf] %vm4729, %v4684
          %4756 = vst.msk [vmem:[#allocation3 + $0x68] sm:$0xf] %vm4729, %v4686
          %4757 = vst.msk [vmem:[#allocation3 + $0x6c] sm:$0xf] %vm4729, %v4688
          %4758 = vst.msk [vmem:[#allocation3 + $0x70] sm:$0xf] %vm4729, %v4690
          %4759 = vst.msk [vmem:[#allocation3 + $0x74] sm:$0xf] %vm4729, %v4692
          %4760 = vst.msk [vmem:[#allocation3 + $0x78] sm:$0xf] %vm4729, %v4694
          %4761 = vst.msk [vmem:[#allocation3 + $0x7c] sm:$0xf] %vm4729, %v4696
        $region52: #{tpu_custom_call.1} parent=47 // pred_fallthru
          _
        %v4762 = vld [vmem:[#allocation3] sm:$0xf]
        %v4763 = vld [vmem:[#allocation3 + $0x4] sm:$0xf]
        %v4764 = vld [vmem:[#allocation3 + $0x8] sm:$0xf]
        %v4765 = vld [vmem:[#allocation3 + $0xc] sm:$0xf]
        %v4766 = vld [vmem:[#allocation3 + $0x10] sm:$0xf]
        %v4767 = vld [vmem:[#allocation3 + $0x14] sm:$0xf]
        %v4768 = vld [vmem:[#allocation3 + $0x18] sm:$0xf]
        %v4769 = vld [vmem:[#allocation3 + $0x1c] sm:$0xf]
        %v4770 = vld [vmem:[#allocation3 + $0x20] sm:$0xf]
        %v4771 = vld [vmem:[#allocation3 + $0x24] sm:$0xf]
        %v4772 = vld [vmem:[#allocation3 + $0x28] sm:$0xf]
        %v4773 = vld [vmem:[#allocation3 + $0x2c] sm:$0xf]
        %v4774 = vld [vmem:[#allocation3 + $0x30] sm:$0xf]
        %v4775 = vld [vmem:[#allocation3 + $0x34] sm:$0xf]
        %v4776 = vld [vmem:[#allocation3 + $0x38] sm:$0xf]
        %v4777 = vld [vmem:[#allocation3 + $0x3c] sm:$0xf]
        %v4778 = vld [vmem:[#allocation3 + $0x40] sm:$0xf]
        %v4779 = vld [vmem:[#allocation3 + $0x44] sm:$0xf]
        %v4780 = vld [vmem:[#allocation3 + $0x48] sm:$0xf]
        %v4781 = vld [vmem:[#allocation3 + $0x4c] sm:$0xf]
        %v4782 = vld [vmem:[#allocation3 + $0x50] sm:$0xf]
        %v4783 = vld [vmem:[#allocation3 + $0x54] sm:$0xf]
        %v4784 = vld [vmem:[#allocation3 + $0x58] sm:$0xf]
        %v4785 = vld [vmem:[#allocation3 + $0x5c] sm:$0xf]
        %v4786 = vld [vmem:[#allocation3 + $0x60] sm:$0xf]
        %v4787 = vld [vmem:[#allocation3 + $0x64] sm:$0xf]
        %v4788 = vld [vmem:[#allocation3 + $0x68] sm:$0xf]
        %v4789 = vld [vmem:[#allocation3 + $0x6c] sm:$0xf]
        %v4790 = vld [vmem:[#allocation3 + $0x70] sm:$0xf]
        %v4791 = vld [vmem:[#allocation3 + $0x74] sm:$0xf]
        %v4792 = vld [vmem:[#allocation3 + $0x78] sm:$0xf]
        %v4793 = vld [vmem:[#allocation3 + $0x7c] sm:$0xf]
        %v4794 = vld [vmem:[%s318] sm:$0xf]
        %v4795 = vld [vmem:[%s318 + $0x4] sm:$0xf]
        %v4796 = vld [vmem:[%s318 + $0x8] sm:$0xf]
        %v4797 = vld [vmem:[%s318 + $0xc] sm:$0xf]
        %v4798 = vld [vmem:[%s318 + $0x10] sm:$0xf]
        %v4799 = vld [vmem:[%s318 + $0x14] sm:$0xf]
        %v4800 = vld [vmem:[%s318 + $0x18] sm:$0xf]
        %v4801 = vld [vmem:[%s318 + $0x1c] sm:$0xf]
        %v4802 = vld [vmem:[%s318 + $0x20] sm:$0xf]
        %v4803 = vld [vmem:[%s318 + $0x24] sm:$0xf]
        %v4804 = vld [vmem:[%s321] sm:$0x1]
        %v4806 = vperm.slane %v4804, 0
        %v4840 = vunpack.c.l.b16 %v4762
        %v4841 = vunpack.c.l.b16 %v4763
        %v4842 = vunpack.c.l.b16 %v4764
        %v4843 = vunpack.c.l.b16 %v4765
        %v4844 = vunpack.c.l.b16 %v4766
        %v4845 = vunpack.c.l.b16 %v4767
        %v4846 = vunpack.c.l.b16 %v4768
        %v4847 = vunpack.c.l.b16 %v4769
        %v4848 = vunpack.c.l.b16 %v4770
        %v4849 = vunpack.c.l.b16 %v4771
        %v4850 = vunpack.c.l.b16 %v4772
        %v4851 = vunpack.c.l.b16 %v4773
        %v4852 = vunpack.c.l.b16 %v4774
        %v4853 = vunpack.c.l.b16 %v4775
        %v4854 = vunpack.c.l.b16 %v4776
        %v4855 = vunpack.c.l.b16 %v4777
        %v4856 = vunpack.c.l.b16 %v4778
        %v4857 = vunpack.c.l.b16 %v4779
        %v4858 = vunpack.c.l.b16 %v4780
        %v4859 = vunpack.c.l.b16 %v4781
        %v4860 = vunpack.c.l.b16 %v4782
        %v4861 = vunpack.c.l.b16 %v4783
        %v4862 = vunpack.c.l.b16 %v4784
        %v4863 = vunpack.c.l.b16 %v4785
        %v4864 = vunpack.c.l.b16 %v4786
        %v4865 = vunpack.c.l.b16 %v4787
        %v4866 = vunpack.c.l.b16 %v4788
        %v4867 = vunpack.c.l.b16 %v4789
        %v4868 = vunpack.c.l.b16 %v4790
        %v4869 = vunpack.c.l.b16 %v4791
        %v4870 = vunpack.c.l.b16 %v4792
        %v4871 = vunpack.c.l.b16 %v4793
        %v4872 = vpack.c.b16 %v4841, %v4840
        %v4873 = vpack.c.b16 %v4843, %v4842
        %v4874 = vpack.c.b16 %v4845, %v4844
        %v4875 = vpack.c.b16 %v4847, %v4846
        %v4876 = vpack.c.b16 %v4849, %v4848
        %v4877 = vpack.c.b16 %v4851, %v4850
        %v4878 = vpack.c.b16 %v4853, %v4852
        %v4879 = vpack.c.b16 %v4855, %v4854
        %v4880 = vpack.c.b16 %v4857, %v4856
        %v4881 = vpack.c.b16 %v4859, %v4858
        %v4882 = vpack.c.b16 %v4861, %v4860
        %v4883 = vpack.c.b16 %v4863, %v4862
        %v4884 = vpack.c.b16 %v4865, %v4864
        %v4885 = vpack.c.b16 %v4867, %v4866
        %v4886 = vpack.c.b16 %v4869, %v4868
        %v4887 = vpack.c.b16 %v4871, %v4870
        %v4898 = vunpack.c.l.b16 %v4794
        %v4899 = vunpack.c.l.b16 %v4795
        %v4900 = vunpack.c.l.b16 %v4796
        %v4901 = vunpack.c.l.b16 %v4797
        %v4902 = vunpack.c.l.b16 %v4798
        %v4903 = vunpack.c.l.b16 %v4799
        %v4904 = vunpack.c.l.b16 %v4800
        %v4905 = vunpack.c.l.b16 %v4801
        %v4906 = vunpack.c.l.b16 %v4802
        %v4907 = vunpack.c.l.b16 %v4803
        %v4908 = vpack.c.b16 %v4899, %v4898
        %v4909 = vpack.c.b16 %v4901, %v4900
        %v4910 = vpack.c.b16 %v4903, %v4902
        %v4911 = vpack.c.b16 %v4905, %v4904
        %v4912 = vpack.c.b16 %v4907, %v4906
        %vm4918 = vcmask 654336
        %v4920 = vsel %vm4918, %v4872, 0
        %v4923 = vsel %vm4918, %v4873, 0
        %v4926 = vsel %vm4918, %v4874, 0
        %v4929 = vsel %vm4918, %v4875, 0
        %v4932 = vsel %vm4918, %v4876, 0
        %v4935 = vsel %vm4918, %v4877, 0
        %v4938 = vsel %vm4918, %v4878, 0
        %v4941 = vsel %vm4918, %v4879, 0
        %v4944 = vsel %vm4918, %v4880, 0
        %v4947 = vsel %vm4918, %v4881, 0
        %v4950 = vsel %vm4918, %v4882, 0
        %v4953 = vsel %vm4918, %v4883, 0
        %v4956 = vsel %vm4918, %v4884, 0
        %v4959 = vsel %vm4918, %v4885, 0
        %v4962 = vsel %vm4918, %v4886, 0
        %v4965 = vsel %vm4918, %v4887, 0
        %4967 = vmatpush.bf16.msra.mxu0 0
        %4968 = vmatpush.bf16.msra.mxu0 0
        %4969 = vmatpush.bf16.msra.mxu0 0
        %4970 = vmatpush.bf16.msra.mxu0 %v4912
        %4971 = vmatpush.bf16.msra.mxu0 %v4911
        %4972 = vmatpush.bf16.msra.mxu0 %v4910
        %4973 = vmatpush.bf16.msra.mxu0 %v4909
        %4974 = vmatpush.bf16.msra.mxu0 %v4908
        %4975 = vmatmul.bf16.gmra.mxu0 %v4920
        %v4976 = vpop.f32.mrf.mxu0
        %v4977 = vadd.f32 %v4806, %v4976
        %v4978 = vpop.f32.mrf.mxu0
        %v4979 = vadd.f32 %v4806, %v4978
        %4980 = vmatmul.bf16.gmra.mxu0 %v4923
        %v4981 = vpop.f32.mrf.mxu0
        %v4982 = vadd.f32 %v4806, %v4981
        %v4983 = vpop.f32.mrf.mxu0
        %v4984 = vadd.f32 %v4806, %v4983
        %4985 = vmatmul.bf16.gmra.mxu0 %v4926
        %v4986 = vpop.f32.mrf.mxu0
        %v4987 = vadd.f32 %v4806, %v4986
        %v4988 = vpop.f32.mrf.mxu0
        %v4989 = vadd.f32 %v4806, %v4988
        %4990 = vmatmul.bf16.gmra.mxu0 %v4929
        %v4991 = vpop.f32.mrf.mxu0
        %v4992 = vadd.f32 %v4806, %v4991
        %v4993 = vpop.f32.mrf.mxu0
        %v4994 = vadd.f32 %v4806, %v4993
        %4995 = vmatmul.bf16.gmra.mxu0 %v4932
        %v4996 = vpop.f32.mrf.mxu0
        %v4997 = vadd.f32 %v4806, %v4996
        %v4998 = vpop.f32.mrf.mxu0
        %v4999 = vadd.f32 %v4806, %v4998
        %5000 = vmatmul.bf16.gmra.mxu0 %v4935
        %v5001 = vpop.f32.mrf.mxu0
        %v5002 = vadd.f32 %v4806, %v5001
        %v5003 = vpop.f32.mrf.mxu0
        %v5004 = vadd.f32 %v4806, %v5003
        %5005 = vmatmul.bf16.gmra.mxu0 %v4938
        %v5006 = vpop.f32.mrf.mxu0
        %v5007 = vadd.f32 %v4806, %v5006
        %v5008 = vpop.f32.mrf.mxu0
        %v5009 = vadd.f32 %v4806, %v5008
        %5010 = vmatmul.bf16.gmra.mxu0 %v4941
        %v5011 = vpop.f32.mrf.mxu0
        %v5012 = vadd.f32 %v4806, %v5011
        %v5013 = vpop.f32.mrf.mxu0
        %v5014 = vadd.f32 %v4806, %v5013
        %5015 = vmatmul.bf16.gmra.mxu0 %v4944
        %v5016 = vpop.f32.mrf.mxu0
        %v5017 = vadd.f32 %v4806, %v5016
        %v5018 = vpop.f32.mrf.mxu0
        %v5019 = vadd.f32 %v4806, %v5018
        %5020 = vmatmul.bf16.gmra.mxu0 %v4947
        %v5021 = vpop.f32.mrf.mxu0
        %v5022 = vadd.f32 %v4806, %v5021
        %v5023 = vpop.f32.mrf.mxu0
        %v5024 = vadd.f32 %v4806, %v5023
        %5025 = vmatmul.bf16.gmra.mxu0 %v4950
        %v5026 = vpop.f32.mrf.mxu0
        %v5027 = vadd.f32 %v4806, %v5026
        %v5028 = vpop.f32.mrf.mxu0
        %v5029 = vadd.f32 %v4806, %v5028
        %5030 = vmatmul.bf16.gmra.mxu0 %v4953
        %v5031 = vpop.f32.mrf.mxu0
        %v5032 = vadd.f32 %v4806, %v5031
        %v5033 = vpop.f32.mrf.mxu0
        %v5034 = vadd.f32 %v4806, %v5033
        %5035 = vmatmul.bf16.gmra.mxu0 %v4956
        %v5036 = vpop.f32.mrf.mxu0
        %v5037 = vadd.f32 %v4806, %v5036
        %v5038 = vpop.f32.mrf.mxu0
        %v5039 = vadd.f32 %v4806, %v5038
        %5040 = vmatmul.bf16.gmra.mxu0 %v4959
        %v5041 = vpop.f32.mrf.mxu0
        %v5042 = vadd.f32 %v4806, %v5041
        %v5043 = vpop.f32.mrf.mxu0
        %v5044 = vadd.f32 %v4806, %v5043
        %5045 = vmatmul.bf16.gmra.mxu0 %v4962
        %v5046 = vpop.f32.mrf.mxu0
        %v5047 = vadd.f32 %v4806, %v5046
        %v5048 = vpop.f32.mrf.mxu0
        %v5049 = vadd.f32 %v4806, %v5048
        %5050 = vmatmul.bf16.gmra.mxu0 %v4965
        %v5051 = vpop.f32.mrf.mxu0
        %v5052 = vadd.f32 %v4806, %v5051
        %v5053 = vpop.f32.mrf.mxu0
        %v5054 = vadd.f32 %v4806, %v5053
        %5055 = vdwg.mxu0
        %5056 = vst [vmem:[%s309] sm:$0xff] %v4977
        %5057 = vst [vmem:[%s309 + $0x8] sm:$0xff] %v4979
        %5058 = vst [vmem:[%s309 + $0x10] sm:$0xff] %v4982
        %5059 = vst [vmem:[%s309 + $0x18] sm:$0xff] %v4984
        %5060 = vst [vmem:[%s309 + $0x20] sm:$0xff] %v4987
        %5061 = vst [vmem:[%s309 + $0x28] sm:$0xff] %v4989
        %5062 = vst [vmem:[%s309 + $0x30] sm:$0xff] %v4992
        %5063 = vst [vmem:[%s309 + $0x38] sm:$0xff] %v4994
        %5064 = vst [vmem:[%s309 + $0x40] sm:$0xff] %v4997
        %5065 = vst [vmem:[%s309 + $0x48] sm:$0xff] %v4999
        %5066 = vst [vmem:[%s309 + $0x50] sm:$0xff] %v5002
        %5067 = vst [vmem:[%s309 + $0x58] sm:$0xff] %v5004
        %5068 = vst [vmem:[%s309 + $0x60] sm:$0xff] %v5007
        %5069 = vst [vmem:[%s309 + $0x68] sm:$0xff] %v5009
        %5070 = vst [vmem:[%s309 + $0x70] sm:$0xff] %v5012
        %5071 = vst [vmem:[%s309 + $0x78] sm:$0xff] %v5014
        %5072 = vst [vmem:[%s309 + $0x80] sm:$0xff] %v5017
        %5073 = vst [vmem:[%s309 + $0x88] sm:$0xff] %v5019
        %5074 = vst [vmem:[%s309 + $0x90] sm:$0xff] %v5022
        %5075 = vst [vmem:[%s309 + $0x98] sm:$0xff] %v5024
        %5076 = vst [vmem:[%s309 + $0xa0] sm:$0xff] %v5027
        %5077 = vst [vmem:[%s309 + $0xa8] sm:$0xff] %v5029
        %5078 = vst [vmem:[%s309 + $0xb0] sm:$0xff] %v5032
        %5079 = vst [vmem:[%s309 + $0xb8] sm:$0xff] %v5034
        %5080 = vst [vmem:[%s309 + $0xc0] sm:$0xff] %v5037
        %5081 = vst [vmem:[%s309 + $0xc8] sm:$0xff] %v5039
        %5082 = vst [vmem:[%s309 + $0xd0] sm:$0xff] %v5042
        %5083 = vst [vmem:[%s309 + $0xd8] sm:$0xff] %v5044
        %5084 = vst [vmem:[%s309 + $0xe0] sm:$0xff] %v5047
        %5085 = vst [vmem:[%s309 + $0xe8] sm:$0xff] %v5049
        %5086 = vst [vmem:[%s309 + $0xf0] sm:$0xff] %v5052
        %5087 = vst [vmem:[%s309 + $0xf8] sm:$0xff] %v5054
        %s5088 = sand.u32 %s205, 1
        %s5089 = scalar_lea.sflag [#allocation5], %s5088
        %s5090 = sand.u32 %s205, 1
        %s5091 = smul.addr %s5090, 256
        %s5092 = scalar_lea.vmem [#allocation4], %s5091
        // Predicated region
        $region53: #{tpu_custom_call.1} parent=47 // pred_check
          %p5093 = pneg %p215
        $region54: #{tpu_custom_call.1} parent=47 // pred_check_branch
          %5095 = sbr.rel (%p5093) target = $region56
        $region55: #{tpu_custom_call.1} parent=47 // pred_region
          %5097 = vsyncadd %s5089, 0
          %s5098 = smul.addr %s25, 32
          %s5099 = sadd.s32 %s26, %s5098
          %s5100 = smul.addr %s5099, 8
          %s5101 = scalar_lea.hbm %s7, %s5100
          %s5102 = sshll.u32 %s5092, 4
          %s5103 = int_to_ptr.vmem [resolvable:$true] %s5102
          %s5104 = sshll.u32 %s5101, 4
          %s5105 = int_to_ptr.hbm [resolvable:$true] %s5104
          %5110 = dma.vmem_to_hbm [thread:$0]  %s5103, 4096, %s5105, %s5089, 128, 128, 8
        $region56: #{tpu_custom_call.1} parent=47 // pred_fallthru
          _
      $region48: #{tpu_custom_call.1} parent=5 // pred_fallthru
        _
      %p5111 = scmp.le.s32.totalorder 2, %s16
      // Predicated region
      $region57: #{tpu_custom_call.1} parent=5 // pred_check
        %p5112 = pneg %p5111
      $region58: #{tpu_custom_call.1} parent=5 // pred_check_branch
        %5114 = sbr.rel (%p5112) target = $region60
      $region59: #{tpu_custom_call.1} parent=5 // pred_region
        %s5115 = ssub.s32 %s16, 2
        // Predicated region
        $region61: #{tpu_custom_call.1} parent=59 // pred_check
          %p5116 = pneg %p221
        $region62: #{tpu_custom_call.1} parent=59 // pred_check_branch
          %5118 = sbr.rel (%p5116) target = $region64
        $region63: #{tpu_custom_call.1} parent=59 // pred_region
          %s5119 = sand.u32 %s206, 1
          %s5120 = scalar_lea.sflag [#allocation5], %s5119
          %s5121 = sand.u32 %s206, 1
          %s5122 = smul.addr %s5121, 256
          %s5123 = scalar_lea.vmem [#allocation4], %s5122
          %5125 = dma.done %s5120, 4096
        $region64: #{tpu_custom_call.1} parent=59 // pred_fallthru
          _
      $region60: #{tpu_custom_call.1} parent=5 // pred_fallthru
        _
    $region6: #{tpu_custom_call.1} parent=1 // loop_footer
      %s20 = sadd.s32 1, %s16
    $region7: #{tpu_custom_call.1} parent=1 // loop_footer_branch
      %15 = sbr.rel target = $region3
    $region8: #{tpu_custom_call.1} parent=1 // loop_exit
      _
    %5126 = vsyncpa [#allocation5], 1
    %s5127 = scalar_lea.sflag [#allocation5], 1
    %5128 = vsyncpa %s5127, 1

</llo_original>
